<compile_context>
chip_gen: v5e
topology: v5e:2x2
jax: 0.10.0
libtpu: 0.0.40
codegen_flags: <defaults>
</compile_context>

<pallas_src>
import functools

import jax
import jax.numpy as jnp
from jax import lax
from jax.experimental import pallas as pl
from jax.experimental.pallas import tpu as pltpu


# Fixed DQN geometry: conv(8,s4) -> conv(4,s2) -> conv(3,s1) -> fc -> fc
S1, K1, S2, K2, K3 = 4, 8, 2, 4, 3
LANE_PAD = 128


# -----------------------------------------------------------------------------
# helpers
# -----------------------------------------------------------------------------
def _geometry(height, width):
    ho1, wo1 = (height - K1) // S1 + 1, (width - K1) // S1 + 1
    ho2, wo2 = (ho1 - K2) // S2 + 1, (wo1 - K2) // S2 + 1
    ho3, wo3 = ho2 - (K3 - 1), wo2 - (K3 - 1)
    return ho1, wo1, ho2, wo2, ho3, wo3


def _full_spec(arr):
    # whole-array block, constant index map (weights / biases stay resident)
    return pl.BlockSpec(arr.shape, lambda i, nd=arr.ndim: (0,) * nd)


def _pick_tile_b(batch, max_tile=32):
    bp8 = max(8, ((batch + 7) // 8) * 8)
    t = min(max_tile, bp8)
    # Prefer >= 2 grid steps when the batch allows, so a 'parallel' grid axis
    # can be sharded across v7x's two TensorCores (free on v5e/v6e).
    if bp8 > 8 and bp8 // t < 2:
        t = max(8, ((t // 2) // 8) * 8)
    return t


# -----------------------------------------------------------------------------
# Single fused kernel: conv1 + conv2 + conv3 + fc1 + fc2, all on-chip.
#
# p1_ref : (1, ho1*wo1*tile_b, K1*K1*C)  bf16   conv1 im2col patches, rows
#                                               ordered (oi1, oj1, b), K order
#                                               (di, dj, c)
# w1     : (K1*K1*C, 32) bf16    w2 : (K2*K2*32, 64) bf16
# w3     : (K3*K3*64, 64) bf16   fc1: (ho3*wo3*64, 512) bf16
# fc2    : (512, 128) bf16 (lane padded)    biases f32, shape (1, N)
# o_ref  : (tile_b, 128) f32   lane-dense full store; wrapper slices actions.
# -----------------------------------------------------------------------------
def _qlearner_kernel(p1_ref, w1_ref, b1_ref, w2_ref, b2_ref, w3_ref, b3_ref,
                     f1_ref, fb1_ref, f2_ref, fb2_ref, o_ref,
                     *, ho1, wo1, ho2, wo2, ho3, wo3):
    tb = o_ref.shape[0]
    kd1 = w1_ref.shape[0]

    # ---- conv1: one K=256 dot --------------------------------------------
    lhs1 = p1_ref[...].reshape(ho1 * wo1 * tb, kd1)
    y1 = jnp.dot(lhs1, w1_ref[...], preferred_element_type=jnp.float32)
    y1 = jnp.maximum(y1 + b1_ref[...], 0.0).astype(jnp.bfloat16)
    c1 = y1.shape[-1]
    # rows (oi1, oj1, b) reinterpreted as (hb, hp, wb, wp, b): free reshape
    # (lane dim unchanged, sublane splits at multiples of tb which is %8==0).
    y1 = y1.reshape(ho1 // S2, S2, wo1 // S2, S2, tb, c1)

    # ---- conv2: in-kernel im2col (leading-dim slices + lane concat), K=512 -
    slabs = []
    for di in range(K2):
        a, p = divmod(di, S2)
        for dj in range(K2):
            r, q = divmod(dj, S2)
            # slab[oi2, oj2, b, :] = relu(conv1)[2*oi2+di, 2*oj2+dj, b, :]
            slabs.append(y1[a:a + ho2, p, r:r + wo2, q, :, :])
    lhs2 = jnp.concatenate(slabs, axis=-1).reshape(ho2 * wo2 * tb, K2 * K2 * c1)
    y2 = jnp.dot(lhs2, w2_ref[...], preferred_element_type=jnp.float32)
    y2 = jnp.maximum(y2 + b2_ref[...], 0.0).astype(jnp.bfloat16)
    c2 = y2.shape[-1]
    y2 = y2.reshape(ho2, wo2, tb, c2)

    # ---- conv3 (stride 1): K=576 dot ---------------------------------------
    slabs = [y2[di:di + ho3, dj:dj + wo3, :, :]
             for di in range(K3) for dj in range(K3)]
    lhs3 = jnp.concatenate(slabs, axis=-1).reshape(ho3 * wo3 * tb, K3 * K3 * c2)
    y3 = jnp.dot(lhs3, w3_ref[...], preferred_element_type=jnp.float32)
    y3 = jnp.maximum(y3 + b3_ref[...], 0.0).astype(jnp.bfloat16)
    c3 = y3.shape[-1]
    y3 = y3.reshape(ho3 * wo3, tb, c3)

    # ---- fc1: single (tb, 576) @ (576, 512) dot ----------------------------
    lhs4 = jnp.concatenate([y3[pos] for pos in range(ho3 * wo3)], axis=-1)
    h = jnp.dot(lhs4, f1_ref[...], preferred_element_type=jnp.float32)
    h = jnp.maximum(h + fb1_ref[...], 0.0).astype(jnp.bfloat16)

    # ---- fc2 (lane padded to 128): lane-dense f32 store --------------------
    qv = jnp.dot(h, f2_ref[...], preferred_element_type=jnp.float32) + fb2_ref[...]
    o_ref[...] = qv.astype(o_ref.dtype)


# -----------------------------------------------------------------------------
# One-time parameter preprocessing (weight permutations, bf16 casts, lane pad)
# -----------------------------------------------------------------------------
def prepare_params(params, height, width, lane_pad=LANE_PAD):
    _, _, _, _, ho3, wo3 = _geometry(height, width)
    bf, f32 = jnp.bfloat16, jnp.float32

    w1 = params["w1"]                                     # (32, C, 8, 8)
    c_in, o1 = w1.shape[1], w1.shape[0]
    w1p = w1.transpose(2, 3, 1, 0).reshape(K1 * K1 * c_in, o1).astype(bf)

    w2 = params["w2"]                                     # (64, 32, 4, 4)
    c2_in, o2 = w2.shape[1], w2.shape[0]
    w2p = w2.transpose(2, 3, 1, 0).reshape(K2 * K2 * c2_in, o2).astype(bf)

    w3 = params["w3"]                                     # (64, 64, 3, 3)
    c3_in, o3 = w3.shape[1], w3.shape[0]
    w3p = w3.transpose(2, 3, 1, 0).reshape(K3 * K3 * c3_in, o3).astype(bf)

    f1 = params["fc1_w"]                                  # (o3*ho3*wo3, 512)
    nh = f1.shape[1]
    # PyTorch flatten order is (c, hf, wf); kernel K order is (hf, wf, c).
    f1p = (f1.reshape(o3, ho3, wo3, nh).transpose(1, 2, 0, 3)
             .reshape(ho3 * wo3 * o3, nh).astype(bf))

    f2 = params["fc2_w"]                                  # (512, A)
    na = f2.shape[1]
    assert na <= lane_pad, f"num_actions={na} exceeds lane pad {lane_pad}"
    f2p = jnp.pad(f2, ((0, 0), (0, lane_pad - na))).astype(bf)
    fb2 = jnp.pad(params["fc2_b"], (0, lane_pad - na)).reshape(1, lane_pad).astype(f32)

    return {
        "w1": w1p, "b1": params["b1"].reshape(1, -1).astype(f32),
        "w2": w2p, "b2": params["b2"].reshape(1, -1).astype(f32),
        "w3": w3p, "b3": params["b3"].reshape(1, -1).astype(f32),
        "fc1_w": f1p, "fc1_b": params["fc1_b"].reshape(1, -1).astype(f32),
        "fc2_w": f2p, "fc2_b": fb2,
    }


# -----------------------------------------------------------------------------
# Forward pass (ONE pallas_call)
# -----------------------------------------------------------------------------
def qlearner_forward(x_nchw, kp, *, num_actions, tile_b=None):
    b, c_in, height, width = x_nchw.shape
    ho1, wo1, ho2, wo2, ho3, wo3 = _geometry(height, width)
    assert height % S1 == 0 and width % S1 == 0, "H, W must be multiples of 4"
    assert ho1 % S2 == 0 and wo1 % S2 == 0, "conv1 output extent must be even"
    # TODO(synk): pad inputs to support sizes violating the asserts above.

    if tile_b is None:
        tile_b = _pick_tile_b(b)
    assert tile_b % 8 == 0, "tile_b must be a multiple of 8 (sublane alignment)"

    bp = ((b + tile_b - 1) // tile_b) * tile_b
    n_tiles = bp // tile_b
    if bp != b:
        x_nchw = jnp.pad(x_nchw, ((0, bp - b), (0, 0), (0, 0), (0, 0)))

    kd1 = K1 * K1 * c_in
    lane_pad = kp["fc2_w"].shape[-1]

    # Wrapper-side im2col for conv1 (pure XLA slicing/concats; ~4x read
    # amplification of a tiny input is negligible).  Rows per tile are ordered
    # (oi1, oj1, b_in_tile); K is ordered (di, dj, c) to match w1p.
    xh = x_nchw.transpose(0, 2, 3, 1).astype(jnp.bfloat16)            # NHWC
    xr = xh.reshape(bp, height // S1, S1, width // S1, S1, c_in)
    nb = K1 // S1
    rows = jnp.concatenate([xr[:, i:i + ho1] for i in range(nb)], axis=2)
    pat = jnp.concatenate([rows[:, :, :, j:j + wo1] for j in range(nb)], axis=4)
    # pat[b, oi, di, oj, dj, c] = x[b, c, S1*oi+di, S1*oj+dj]
    p1 = (pat.transpose(0, 1, 3, 2, 4, 5)                 # (bp, oi, oj, di, dj, c)
             .reshape(n_tiles, tile_b, ho1, wo1, K1, K1, c_in)
             .transpose(0, 2, 3, 1, 4, 5, 6)              # (nt, oi, oj, b, di, dj, c)
             .reshape(n_tiles, ho1 * wo1 * tile_b, kd1))

    kernel = functools.partial(_qlearner_kernel, ho1=ho1, wo1=wo1,
                               ho2=ho2, wo2=wo2, ho3=ho3, wo3=wo3)

    out = pl.pallas_call(
        kernel,
        out_shape=jax.ShapeDtypeStruct((bp, lane_pad), jnp.float32),
        grid=(n_tiles,),
        in_specs=[
            pl.BlockSpec((1, ho1 * wo1 * tile_b, kd1), lambda i: (i, 0, 0)),
            _full_spec(kp["w1"]), _full_spec(kp["b1"]),
            _full_spec(kp["w2"]), _full_spec(kp["b2"]),
            _full_spec(kp["w3"]), _full_spec(kp["b3"]),
            _full_spec(kp["fc1_w"]), _full_spec(kp["fc1_b"]),
            _full_spec(kp["fc2_w"]), _full_spec(kp["fc2_b"]),
        ],
        out_specs=pl.BlockSpec((tile_b, lane_pad), lambda i: (i, 0)),
        compiler_params=pltpu.CompilerParams(
            dimension_semantics=("parallel",),
            vmem_limit_bytes=32 * 1024 * 1024),
    )(p1, kp["w1"], kp["b1"], kp["w2"], kp["b2"], kp["w3"], kp["b3"],
      kp["fc1_w"], kp["fc1_b"], kp["fc2_w"], kp["fc2_b"])

    return out[:b, :num_actions]


# -----------------------------------------------------------------------------
# Pure-JAX references
# -----------------------------------------------------------------------------
def reference_forward(x_nchw, params):
    def conv(x, w, b, s):
        y = lax.conv_general_dilated(
            x, w, (s, s), "VALID",
            dimension_numbers=("NCHW", "OIHW", "NCHW"),
            precision=lax.Precision.HIGHEST)
        return jax.nn.relu(y + b[None, :, None, None])

    x = x_nchw.astype(jnp.float32)
    x = conv(x, params["w1"], params["b1"], 4)
    x = conv(x, params["w2"], params["b2"], 2)
    x = conv(x, params["w3"], params["b3"], 1)
    f = x.reshape(x.shape[0], -1)
    h = jax.nn.relu(jnp.dot(f, params["fc1_w"],
                            precision=lax.Precision.HIGHEST) + params["fc1_b"])
    return jnp.dot(h, params["fc2_w"],
                   precision=lax.Precision.HIGHEST) + params["fc2_b"]


def reference_forward_bf16(x_nchw, params):
    # Mirrors the kernel's numerics: bf16 matmul operands, f32 accumulation,
    # f32 bias/ReLU, bf16 activation hand-offs between layers.
    r = lambda t: t.astype(jnp.bfloat16).astype(jnp.float32)

    def conv(x, w, b, s):
        y = lax.conv_general_dilated(
            x, r(w), (s, s), "VALID",
            dimension_numbers=("NCHW", "OIHW", "NCHW"),
            precision=lax.Precision.HIGHEST)
        return r(jax.nn.relu(y + b[None, :, None, None]))

    x = conv(r(x_nchw.astype(jnp.float32)), params["w1"], params["b1"], 4)
    x = conv(x, params["w2"], params["b2"], 2)
    x = conv(x, params["w3"], params["b3"], 1)
    f = x.reshape(x.shape[0], -1)
    h = r(jax.nn.relu(jnp.dot(f, r(params["fc1_w"]),
                              precision=lax.Precision.HIGHEST) + params["fc1_b"]))
    return jnp.dot(h, r(params["fc2_w"]),
                   precision=lax.Precision.HIGHEST) + params["fc2_b"]


# -----------------------------------------------------------------------------
def init_params(key, in_channels, feature_size, num_actions):
    ks = jax.random.split(key, 10)
    s = 0.05
    return {
        "w1": s * jax.random.normal(ks[0], (32, in_channels, 8, 8), jnp.float32),
        "b1": s * jax.random.normal(ks[1], (32,), jnp.float32),
        "w2": s * jax.random.normal(ks[2], (64, 32, 4, 4), jnp.float32),
        "b2": s * jax.random.normal(ks[3], (64,), jnp.float32),
        "w3": s * jax.random.normal(ks[4], (64, 64, 3, 3), jnp.float32),
        "b3": s * jax.random.normal(ks[5], (64,), jnp.float32),
        # Linear stored as (in, out), rows in PyTorch NCHW-flatten order.
        "fc1_w": s * jax.random.normal(ks[6], (feature_size, 512), jnp.float32),
        "fc1_b": s * jax.random.normal(ks[7], (512,), jnp.float32),
        "fc2_w": s * jax.random.normal(ks[8], (512, num_actions), jnp.float32),
        "fc2_b": s * jax.random.normal(ks[9], (num_actions,), jnp.float32),
    }


if __name__ == "__main__":
    # Small env: observation_space.shape = (4, 52, 52), action_space.n = 6
    # Conv sizes: 52 -> 12 (k8 s4) -> 5 (k4 s2) -> 3 (k3 s1); feature = 64*3*3
    B, C, H, W = 2, 4, 52, 52
    num_actions = 6
    _, _, _, _, ho3, wo3 = _geometry(H, W)
    feature_size = 64 * ho3 * wo3

    key = jax.random.PRNGKey(0)
    k_x, k_p = jax.random.split(key)
    x = jax.random.normal(k_x, (B, C, H, W), jnp.float32)
    params = init_params(k_p, C, feature_size, num_actions)
    kparams = prepare_params(params, H, W)

    fwd = jax.jit(lambda xx: qlearner_forward(xx, kparams, num_actions=num_actions))
    q = jax.block_until_ready(fwd(x))
    assert q.shape == (B, num_actions), q.shape

    # Tight check against a reference that uses the same bf16/f32 numerics.
    ref_b = jax.block_until_ready(reference_forward_bf16(x, params))
    assert jnp.allclose(q, ref_b, atol=1e-3, rtol=1e-3), (
        "mismatch vs bf16-faithful reference", float(jnp.max(jnp.abs(q - ref_b))))

    # Loose sanity check against the pure float32 PyTorch-equivalent reference.
    ref_f = jax.block_until_ready(reference_forward(x, params))
    assert jnp.allclose(q, ref_f, atol=5e-2, rtol=5e-2), (
        "mismatch vs f32 reference", float(jnp.max(jnp.abs(q - ref_f))))

    print("KERNEL_OK")
</pallas_src>

<mosaic_0001>
module attributes {stable_mosaic.version = 11 : i64} {
  func.func @_qlearner_kernel(%arg0: i32, %arg1: memref<1x1152x256xbf16, #tpu.memory_space<vmem>>, %arg2: memref<256x32xbf16, #tpu.memory_space<vmem>>, %arg3: memref<1x32xf32, #tpu.memory_space<vmem>>, %arg4: memref<512x64xbf16, #tpu.memory_space<vmem>>, %arg5: memref<1x64xf32, #tpu.memory_space<vmem>>, %arg6: memref<576x64xbf16, #tpu.memory_space<vmem>>, %arg7: memref<1x64xf32, #tpu.memory_space<vmem>>, %arg8: memref<576x512xbf16, #tpu.memory_space<vmem>>, %arg9: memref<1x512xf32, #tpu.memory_space<vmem>>, %arg10: memref<512x128xbf16, #tpu.memory_space<vmem>>, %arg11: memref<1x128xf32, #tpu.memory_space<vmem>>, %arg12: memref<8x128xf32, #tpu.memory_space<vmem>>) attributes {dimension_semantics = [#tpu.dimension_semantics<parallel>], iteration_bounds = array<i64: 1>, scalar_prefetch = 0 : i64, scratch_operands = 0 : i64, tpu.core_type = #tpu.core_type<tc>, window_params = [{transform_indices = @transform_0, window_bounds = array<i64: 1, 1152, 256>}, {pipeline_mode = #tpu.pipeline_mode<synchronous>, transform_indices = @transform_1, window_bounds = array<i64: 256, 32>}, {pipeline_mode = #tpu.pipeline_mode<synchronous>, transform_indices = @transform_2, window_bounds = array<i64: 1, 32>}, {pipeline_mode = #tpu.pipeline_mode<synchronous>, transform_indices = @transform_3, window_bounds = array<i64: 512, 64>}, {pipeline_mode = #tpu.pipeline_mode<synchronous>, transform_indices = @transform_4, window_bounds = array<i64: 1, 64>}, {pipeline_mode = #tpu.pipeline_mode<synchronous>, transform_indices = @transform_5, window_bounds = array<i64: 576, 64>}, {pipeline_mode = #tpu.pipeline_mode<synchronous>, transform_indices = @transform_6, window_bounds = array<i64: 1, 64>}, {pipeline_mode = #tpu.pipeline_mode<synchronous>, transform_indices = @transform_7, window_bounds = array<i64: 576, 512>}, {pipeline_mode = #tpu.pipeline_mode<synchronous>, transform_indices = @transform_8, window_bounds = array<i64: 1, 512>}, {pipeline_mode = #tpu.pipeline_mode<synchronous>, transform_indices = @transform_9, window_bounds = array<i64: 512, 128>}, {pipeline_mode = #tpu.pipeline_mode<synchronous>, transform_indices = @transform_10, window_bounds = array<i64: 1, 128>}, {transform_indices = @transform_11, window_bounds = array<i64: 8, 128>}]} {
    %c0 = arith.constant 0 : index
    %c0_0 = arith.constant 0 : index
    %c0_1 = arith.constant 0 : index
    %0 = vector.load %arg1[%c0, %c0_0, %c0_1] : memref<1x1152x256xbf16, #tpu.memory_space<vmem>>, vector<1x1152x256xbf16>
    %1 = vector.shape_cast %0 : vector<1x1152x256xbf16> to vector<1152x256xbf16>
    %c0_2 = arith.constant 0 : index
    %c0_3 = arith.constant 0 : index
    %2 = vector.load %arg2[%c0_2, %c0_3] : memref<256x32xbf16, #tpu.memory_space<vmem>>, vector<256x32xbf16>
    %cst = arith.constant dense<0.000000e+00> : vector<1152x32xf32>
    %3 = tpu.matmul %1, %2, %cst {dimension_numbers = #tpu.dot_dimension_numbers<[1], [0], [0], [1], [0, 0, 1, 1], [], []>} : vector<1152x256xbf16>, vector<256x32xbf16>, vector<1152x32xf32> -> vector<1152x32xf32>
    %c0_4 = arith.constant 0 : index
    %c0_5 = arith.constant 0 : index
    %4 = vector.load %arg3[%c0_4, %c0_5] : memref<1x32xf32, #tpu.memory_space<vmem>>, vector<1x32xf32>
    %5 = vector.broadcast %4 : vector<1x32xf32> to vector<1152x32xf32>
    %6 = arith.addf %3, %5 : vector<1152x32xf32>
    %cst_6 = arith.constant 0.000000e+00 : f32
    %7 = vector.broadcast %cst_6 : f32 to vector<1152x32xf32>
    %8 = arith.maximumf %6, %7 : vector<1152x32xf32>
    %9 = arith.truncf %8 : vector<1152x32xf32> to vector<1152x32xbf16>
    %10 = vector.shape_cast %9 : vector<1152x32xbf16> to vector<6x2x6x2x8x32xbf16>
    %11 = vector.extract_strided_slice %10 {offsets = [0, 0, 0, 0, 0, 0], sizes = [5, 1, 5, 1, 8, 32], strides = [1, 1, 1, 1, 1, 1]} : vector<6x2x6x2x8x32xbf16> to vector<5x1x5x1x8x32xbf16>
    %12 = vector.shape_cast %11 : vector<5x1x5x1x8x32xbf16> to vector<5x5x8x32xbf16>
    %13 = vector.extract_strided_slice %10 {offsets = [0, 0, 0, 1, 0, 0], sizes = [5, 1, 5, 1, 8, 32], strides = [1, 1, 1, 1, 1, 1]} : vector<6x2x6x2x8x32xbf16> to vector<5x1x5x1x8x32xbf16>
    %14 = vector.shape_cast %13 : vector<5x1x5x1x8x32xbf16> to vector<5x5x8x32xbf16>
    %15 = vector.extract_strided_slice %10 {offsets = [0, 0, 1, 0, 0, 0], sizes = [5, 1, 5, 1, 8, 32], strides = [1, 1, 1, 1, 1, 1]} : vector<6x2x6x2x8x32xbf16> to vector<5x1x5x1x8x32xbf16>
    %16 = vector.shape_cast %15 : vector<5x1x5x1x8x32xbf16> to vector<5x5x8x32xbf16>
    %17 = vector.extract_strided_slice %10 {offsets = [0, 0, 1, 1, 0, 0], sizes = [5, 1, 5, 1, 8, 32], strides = [1, 1, 1, 1, 1, 1]} : vector<6x2x6x2x8x32xbf16> to vector<5x1x5x1x8x32xbf16>
    %18 = vector.shape_cast %17 : vector<5x1x5x1x8x32xbf16> to vector<5x5x8x32xbf16>
    %19 = vector.extract_strided_slice %10 {offsets = [0, 1, 0, 0, 0, 0], sizes = [5, 1, 5, 1, 8, 32], strides = [1, 1, 1, 1, 1, 1]} : vector<6x2x6x2x8x32xbf16> to vector<5x1x5x1x8x32xbf16>
    %20 = vector.shape_cast %19 : vector<5x1x5x1x8x32xbf16> to vector<5x5x8x32xbf16>
    %21 = vector.extract_strided_slice %10 {offsets = [0, 1, 0, 1, 0, 0], sizes = [5, 1, 5, 1, 8, 32], strides = [1, 1, 1, 1, 1, 1]} : vector<6x2x6x2x8x32xbf16> to vector<5x1x5x1x8x32xbf16>
    %22 = vector.shape_cast %21 : vector<5x1x5x1x8x32xbf16> to vector<5x5x8x32xbf16>
    %23 = vector.extract_strided_slice %10 {offsets = [0, 1, 1, 0, 0, 0], sizes = [5, 1, 5, 1, 8, 32], strides = [1, 1, 1, 1, 1, 1]} : vector<6x2x6x2x8x32xbf16> to vector<5x1x5x1x8x32xbf16>
    %24 = vector.shape_cast %23 : vector<5x1x5x1x8x32xbf16> to vector<5x5x8x32xbf16>
    %25 = vector.extract_strided_slice %10 {offsets = [0, 1, 1, 1, 0, 0], sizes = [5, 1, 5, 1, 8, 32], strides = [1, 1, 1, 1, 1, 1]} : vector<6x2x6x2x8x32xbf16> to vector<5x1x5x1x8x32xbf16>
    %26 = vector.shape_cast %25 : vector<5x1x5x1x8x32xbf16> to vector<5x5x8x32xbf16>
    %27 = vector.extract_strided_slice %10 {offsets = [1, 0, 0, 0, 0, 0], sizes = [5, 1, 5, 1, 8, 32], strides = [1, 1, 1, 1, 1, 1]} : vector<6x2x6x2x8x32xbf16> to vector<5x1x5x1x8x32xbf16>
    %28 = vector.shape_cast %27 : vector<5x1x5x1x8x32xbf16> to vector<5x5x8x32xbf16>
    %29 = vector.extract_strided_slice %10 {offsets = [1, 0, 0, 1, 0, 0], sizes = [5, 1, 5, 1, 8, 32], strides = [1, 1, 1, 1, 1, 1]} : vector<6x2x6x2x8x32xbf16> to vector<5x1x5x1x8x32xbf16>
    %30 = vector.shape_cast %29 : vector<5x1x5x1x8x32xbf16> to vector<5x5x8x32xbf16>
    %31 = vector.extract_strided_slice %10 {offsets = [1, 0, 1, 0, 0, 0], sizes = [5, 1, 5, 1, 8, 32], strides = [1, 1, 1, 1, 1, 1]} : vector<6x2x6x2x8x32xbf16> to vector<5x1x5x1x8x32xbf16>
    %32 = vector.shape_cast %31 : vector<5x1x5x1x8x32xbf16> to vector<5x5x8x32xbf16>
    %33 = vector.extract_strided_slice %10 {offsets = [1, 0, 1, 1, 0, 0], sizes = [5, 1, 5, 1, 8, 32], strides = [1, 1, 1, 1, 1, 1]} : vector<6x2x6x2x8x32xbf16> to vector<5x1x5x1x8x32xbf16>
    %34 = vector.shape_cast %33 : vector<5x1x5x1x8x32xbf16> to vector<5x5x8x32xbf16>
    %35 = vector.extract_strided_slice %10 {offsets = [1, 1, 0, 0, 0, 0], sizes = [5, 1, 5, 1, 8, 32], strides = [1, 1, 1, 1, 1, 1]} : vector<6x2x6x2x8x32xbf16> to vector<5x1x5x1x8x32xbf16>
    %36 = vector.shape_cast %35 : vector<5x1x5x1x8x32xbf16> to vector<5x5x8x32xbf16>
    %37 = vector.extract_strided_slice %10 {offsets = [1, 1, 0, 1, 0, 0], sizes = [5, 1, 5, 1, 8, 32], strides = [1, 1, 1, 1, 1, 1]} : vector<6x2x6x2x8x32xbf16> to vector<5x1x5x1x8x32xbf16>
    %38 = vector.shape_cast %37 : vector<5x1x5x1x8x32xbf16> to vector<5x5x8x32xbf16>
    %39 = vector.extract_strided_slice %10 {offsets = [1, 1, 1, 0, 0, 0], sizes = [5, 1, 5, 1, 8, 32], strides = [1, 1, 1, 1, 1, 1]} : vector<6x2x6x2x8x32xbf16> to vector<5x1x5x1x8x32xbf16>
    %40 = vector.shape_cast %39 : vector<5x1x5x1x8x32xbf16> to vector<5x5x8x32xbf16>
    %41 = vector.extract_strided_slice %10 {offsets = [1, 1, 1, 1, 0, 0], sizes = [5, 1, 5, 1, 8, 32], strides = [1, 1, 1, 1, 1, 1]} : vector<6x2x6x2x8x32xbf16> to vector<5x1x5x1x8x32xbf16>
    %42 = vector.shape_cast %41 : vector<5x1x5x1x8x32xbf16> to vector<5x5x8x32xbf16>
    %43 = tpu.concatenate %12, %14, %16, %18, %20, %22, %24, %26, %28, %30, %32, %34, %36, %38, %40, %42 in 3 : vector<5x5x8x32xbf16>, vector<5x5x8x32xbf16>, vector<5x5x8x32xbf16>, vector<5x5x8x32xbf16>, vector<5x5x8x32xbf16>, vector<5x5x8x32xbf16>, vector<5x5x8x32xbf16>, vector<5x5x8x32xbf16>, vector<5x5x8x32xbf16>, vector<5x5x8x32xbf16>, vector<5x5x8x32xbf16>, vector<5x5x8x32xbf16>, vector<5x5x8x32xbf16>, vector<5x5x8x32xbf16>, vector<5x5x8x32xbf16>, vector<5x5x8x32xbf16> -> vector<5x5x8x512xbf16>
    %44 = vector.shape_cast %43 : vector<5x5x8x512xbf16> to vector<200x512xbf16>
    %c0_7 = arith.constant 0 : index
    %c0_8 = arith.constant 0 : index
    %45 = vector.load %arg4[%c0_7, %c0_8] : memref<512x64xbf16, #tpu.memory_space<vmem>>, vector<512x64xbf16>
    %cst_9 = arith.constant dense<0.000000e+00> : vector<200x64xf32>
    %46 = tpu.matmul %44, %45, %cst_9 {dimension_numbers = #tpu.dot_dimension_numbers<[1], [0], [0], [1], [0, 0, 1, 1], [], []>} : vector<200x512xbf16>, vector<512x64xbf16>, vector<200x64xf32> -> vector<200x64xf32>
    %c0_10 = arith.constant 0 : index
    %c0_11 = arith.constant 0 : index
    %47 = vector.load %arg5[%c0_10, %c0_11] : memref<1x64xf32, #tpu.memory_space<vmem>>, vector<1x64xf32>
    %48 = vector.broadcast %47 : vector<1x64xf32> to vector<200x64xf32>
    %49 = arith.addf %46, %48 : vector<200x64xf32>
    %cst_12 = arith.constant 0.000000e+00 : f32
    %50 = vector.broadcast %cst_12 : f32 to vector<200x64xf32>
    %51 = arith.maximumf %49, %50 : vector<200x64xf32>
    %52 = arith.truncf %51 : vector<200x64xf32> to vector<200x64xbf16>
    %53 = vector.shape_cast %52 : vector<200x64xbf16> to vector<5x5x8x64xbf16>
    %54 = vector.extract_strided_slice %53 {offsets = [0, 0, 0, 0], sizes = [3, 3, 8, 64], strides = [1, 1, 1, 1]} : vector<5x5x8x64xbf16> to vector<3x3x8x64xbf16>
    %55 = vector.extract_strided_slice %53 {offsets = [0, 1, 0, 0], sizes = [3, 3, 8, 64], strides = [1, 1, 1, 1]} : vector<5x5x8x64xbf16> to vector<3x3x8x64xbf16>
    %56 = vector.extract_strided_slice %53 {offsets = [0, 2, 0, 0], sizes = [3, 3, 8, 64], strides = [1, 1, 1, 1]} : vector<5x5x8x64xbf16> to vector<3x3x8x64xbf16>
    %57 = vector.extract_strided_slice %53 {offsets = [1, 0, 0, 0], sizes = [3, 3, 8, 64], strides = [1, 1, 1, 1]} : vector<5x5x8x64xbf16> to vector<3x3x8x64xbf16>
    %58 = vector.extract_strided_slice %53 {offsets = [1, 1, 0, 0], sizes = [3, 3, 8, 64], strides = [1, 1, 1, 1]} : vector<5x5x8x64xbf16> to vector<3x3x8x64xbf16>
    %59 = vector.extract_strided_slice %53 {offsets = [1, 2, 0, 0], sizes = [3, 3, 8, 64], strides = [1, 1, 1, 1]} : vector<5x5x8x64xbf16> to vector<3x3x8x64xbf16>
    %60 = vector.extract_strided_slice %53 {offsets = [2, 0, 0, 0], sizes = [3, 3, 8, 64], strides = [1, 1, 1, 1]} : vector<5x5x8x64xbf16> to vector<3x3x8x64xbf16>
    %61 = vector.extract_strided_slice %53 {offsets = [2, 1, 0, 0], sizes = [3, 3, 8, 64], strides = [1, 1, 1, 1]} : vector<5x5x8x64xbf16> to vector<3x3x8x64xbf16>
    %62 = vector.extract_strided_slice %53 {offsets = [2, 2, 0, 0], sizes = [3, 3, 8, 64], strides = [1, 1, 1, 1]} : vector<5x5x8x64xbf16> to vector<3x3x8x64xbf16>
    %63 = tpu.concatenate %54, %55, %56, %57, %58, %59, %60, %61, %62 in 3 : vector<3x3x8x64xbf16>, vector<3x3x8x64xbf16>, vector<3x3x8x64xbf16>, vector<3x3x8x64xbf16>, vector<3x3x8x64xbf16>, vector<3x3x8x64xbf16>, vector<3x3x8x64xbf16>, vector<3x3x8x64xbf16>, vector<3x3x8x64xbf16> -> vector<3x3x8x576xbf16>
    %64 = vector.shape_cast %63 : vector<3x3x8x576xbf16> to vector<72x576xbf16>
    %c0_13 = arith.constant 0 : index
    %c0_14 = arith.constant 0 : index
    %65 = vector.load %arg6[%c0_13, %c0_14] : memref<576x64xbf16, #tpu.memory_space<vmem>>, vector<576x64xbf16>
    %cst_15 = arith.constant dense<0.000000e+00> : vector<72x64xf32>
    %66 = tpu.matmul %64, %65, %cst_15 {dimension_numbers = #tpu.dot_dimension_numbers<[1], [0], [0], [1], [0, 0, 1, 1], [], []>} : vector<72x576xbf16>, vector<576x64xbf16>, vector<72x64xf32> -> vector<72x64xf32>
    %c0_16 = arith.constant 0 : index
    %c0_17 = arith.constant 0 : index
    %67 = vector.load %arg7[%c0_16, %c0_17] : memref<1x64xf32, #tpu.memory_space<vmem>>, vector<1x64xf32>
    %68 = vector.broadcast %67 : vector<1x64xf32> to vector<72x64xf32>
    %69 = arith.addf %66, %68 : vector<72x64xf32>
    %cst_18 = arith.constant 0.000000e+00 : f32
    %70 = vector.broadcast %cst_18 : f32 to vector<72x64xf32>
    %71 = arith.maximumf %69, %70 : vector<72x64xf32>
    %72 = arith.truncf %71 : vector<72x64xf32> to vector<72x64xbf16>
    %73 = vector.shape_cast %72 : vector<72x64xbf16> to vector<9x8x64xbf16>
    %74 = vector.extract_strided_slice %73 {offsets = [0, 0, 0], sizes = [1, 8, 64], strides = [1, 1, 1]} : vector<9x8x64xbf16> to vector<1x8x64xbf16>
    %75 = vector.shape_cast %74 : vector<1x8x64xbf16> to vector<8x64xbf16>
    %76 = vector.extract_strided_slice %73 {offsets = [1, 0, 0], sizes = [1, 8, 64], strides = [1, 1, 1]} : vector<9x8x64xbf16> to vector<1x8x64xbf16>
    %77 = vector.shape_cast %76 : vector<1x8x64xbf16> to vector<8x64xbf16>
    %78 = vector.extract_strided_slice %73 {offsets = [2, 0, 0], sizes = [1, 8, 64], strides = [1, 1, 1]} : vector<9x8x64xbf16> to vector<1x8x64xbf16>
    %79 = vector.shape_cast %78 : vector<1x8x64xbf16> to vector<8x64xbf16>
    %80 = vector.extract_strided_slice %73 {offsets = [3, 0, 0], sizes = [1, 8, 64], strides = [1, 1, 1]} : vector<9x8x64xbf16> to vector<1x8x64xbf16>
    %81 = vector.shape_cast %80 : vector<1x8x64xbf16> to vector<8x64xbf16>
    %82 = vector.extract_strided_slice %73 {offsets = [4, 0, 0], sizes = [1, 8, 64], strides = [1, 1, 1]} : vector<9x8x64xbf16> to vector<1x8x64xbf16>
    %83 = vector.shape_cast %82 : vector<1x8x64xbf16> to vector<8x64xbf16>
    %84 = vector.extract_strided_slice %73 {offsets = [5, 0, 0], sizes = [1, 8, 64], strides = [1, 1, 1]} : vector<9x8x64xbf16> to vector<1x8x64xbf16>
    %85 = vector.shape_cast %84 : vector<1x8x64xbf16> to vector<8x64xbf16>
    %86 = vector.extract_strided_slice %73 {offsets = [6, 0, 0], sizes = [1, 8, 64], strides = [1, 1, 1]} : vector<9x8x64xbf16> to vector<1x8x64xbf16>
    %87 = vector.shape_cast %86 : vector<1x8x64xbf16> to vector<8x64xbf16>
    %88 = vector.extract_strided_slice %73 {offsets = [7, 0, 0], sizes = [1, 8, 64], strides = [1, 1, 1]} : vector<9x8x64xbf16> to vector<1x8x64xbf16>
    %89 = vector.shape_cast %88 : vector<1x8x64xbf16> to vector<8x64xbf16>
    %90 = vector.extract_strided_slice %73 {offsets = [8, 0, 0], sizes = [1, 8, 64], strides = [1, 1, 1]} : vector<9x8x64xbf16> to vector<1x8x64xbf16>
    %91 = vector.shape_cast %90 : vector<1x8x64xbf16> to vector<8x64xbf16>
    %92 = tpu.concatenate %75, %77, %79, %81, %83, %85, %87, %89, %91 in 1 : vector<8x64xbf16>, vector<8x64xbf16>, vector<8x64xbf16>, vector<8x64xbf16>, vector<8x64xbf16>, vector<8x64xbf16>, vector<8x64xbf16>, vector<8x64xbf16>, vector<8x64xbf16> -> vector<8x576xbf16>
    %c0_19 = arith.constant 0 : index
    %c0_20 = arith.constant 0 : index
    %93 = vector.load %arg8[%c0_19, %c0_20] : memref<576x512xbf16, #tpu.memory_space<vmem>>, vector<576x512xbf16>
    %cst_21 = arith.constant dense<0.000000e+00> : vector<8x512xf32>
    %94 = tpu.matmul %92, %93, %cst_21 {dimension_numbers = #tpu.dot_dimension_numbers<[1], [0], [0], [1], [0, 0, 1, 1], [], []>} : vector<8x576xbf16>, vector<576x512xbf16>, vector<8x512xf32> -> vector<8x512xf32>
    %c0_22 = arith.constant 0 : index
    %c0_23 = arith.constant 0 : index
    %95 = vector.load %arg9[%c0_22, %c0_23] : memref<1x512xf32, #tpu.memory_space<vmem>>, vector<1x512xf32>
    %96 = vector.broadcast %95 : vector<1x512xf32> to vector<8x512xf32>
    %97 = arith.addf %94, %96 : vector<8x512xf32>
    %cst_24 = arith.constant 0.000000e+00 : f32
    %98 = vector.broadcast %cst_24 : f32 to vector<8x512xf32>
    %99 = arith.maximumf %97, %98 : vector<8x512xf32>
    %100 = arith.truncf %99 : vector<8x512xf32> to vector<8x512xbf16>
    %c0_25 = arith.constant 0 : index
    %c0_26 = arith.constant 0 : index
    %101 = vector.load %arg10[%c0_25, %c0_26] : memref<512x128xbf16, #tpu.memory_space<vmem>>, vector<512x128xbf16>
    %cst_27 = arith.constant dense<0.000000e+00> : vector<8x128xf32>
    %102 = tpu.matmul %100, %101, %cst_27 {dimension_numbers = #tpu.dot_dimension_numbers<[1], [0], [0], [1], [0, 0, 1, 1], [], []>} : vector<8x512xbf16>, vector<512x128xbf16>, vector<8x128xf32> -> vector<8x128xf32>
    %c0_28 = arith.constant 0 : index
    %c0_29 = arith.constant 0 : index
    %103 = vector.load %arg11[%c0_28, %c0_29] : memref<1x128xf32, #tpu.memory_space<vmem>>, vector<1x128xf32>
    %104 = vector.broadcast %103 : vector<1x128xf32> to vector<8x128xf32>
    %105 = arith.addf %102, %104 : vector<8x128xf32>
    %c0_30 = arith.constant 0 : index
    %c0_31 = arith.constant 0 : index
    %106 = vector.load %arg12[%c0_30, %c0_31] : memref<8x128xf32, #tpu.memory_space<vmem>>, vector<8x128xf32>
    tpu.vector_store %arg12[%c0_30, %c0_31], %105 {strides = array<i32>} : memref<8x128xf32, #tpu.memory_space<vmem>>, vector<8x128xf32>,
    return
  }
  func.func @transform_0(%arg0: i32) -> (i32, i32, i32) {
    %c0_i32 = arith.constant 0 : i32
    %c0_i32_0 = arith.constant 0 : i32
    %c0_i32_1 = arith.constant 0 : i32
    return %arg0, %c0_i32, %c0_i32_0 : i32, i32, i32
  }
  func.func @transform_1(%arg0: i32) -> (i32, i32) {
    %c0_i32 = arith.constant 0 : i32
    %c0_i32_0 = arith.constant 0 : i32
    %c0_i32_1 = arith.constant 0 : i32
    return %c0_i32, %c0_i32_0 : i32, i32
  }
  func.func @transform_2(%arg0: i32) -> (i32, i32) {
    %c0_i32 = arith.constant 0 : i32
    %c0_i32_0 = arith.constant 0 : i32
    %c0_i32_1 = arith.constant 0 : i32
    return %c0_i32, %c0_i32_0 : i32, i32
  }
  func.func @transform_3(%arg0: i32) -> (i32, i32) {
    %c0_i32 = arith.constant 0 : i32
    %c0_i32_0 = arith.constant 0 : i32
    %c0_i32_1 = arith.constant 0 : i32
    return %c0_i32, %c0_i32_0 : i32, i32
  }
  func.func @transform_4(%arg0: i32) -> (i32, i32) {
    %c0_i32 = arith.constant 0 : i32
    %c0_i32_0 = arith.constant 0 : i32
    %c0_i32_1 = arith.constant 0 : i32
    return %c0_i32, %c0_i32_0 : i32, i32
  }
  func.func @transform_5(%arg0: i32) -> (i32, i32) {
    %c0_i32 = arith.constant 0 : i32
    %c0_i32_0 = arith.constant 0 : i32
    %c0_i32_1 = arith.constant 0 : i32
    return %c0_i32, %c0_i32_0 : i32, i32
  }
  func.func @transform_6(%arg0: i32) -> (i32, i32) {
    %c0_i32 = arith.constant 0 : i32
    %c0_i32_0 = arith.constant 0 : i32
    %c0_i32_1 = arith.constant 0 : i32
    return %c0_i32, %c0_i32_0 : i32, i32
  }
  func.func @transform_7(%arg0: i32) -> (i32, i32) {
    %c0_i32 = arith.constant 0 : i32
    %c0_i32_0 = arith.constant 0 : i32
    %c0_i32_1 = arith.constant 0 : i32
    return %c0_i32, %c0_i32_0 : i32, i32
  }
  func.func @transform_8(%arg0: i32) -> (i32, i32) {
    %c0_i32 = arith.constant 0 : i32
    %c0_i32_0 = arith.constant 0 : i32
    %c0_i32_1 = arith.constant 0 : i32
    return %c0_i32, %c0_i32_0 : i32, i32
  }
  func.func @transform_9(%arg0: i32) -> (i32, i32) {
    %c0_i32 = arith.constant 0 : i32
    %c0_i32_0 = arith.constant 0 : i32
    %c0_i32_1 = arith.constant 0 : i32
    return %c0_i32, %c0_i32_0 : i32, i32
  }
  func.func @transform_10(%arg0: i32) -> (i32, i32) {
    %c0_i32 = arith.constant 0 : i32
    %c0_i32_0 = arith.constant 0 : i32
    %c0_i32_1 = arith.constant 0 : i32
    return %c0_i32, %c0_i32_0 : i32, i32
  }
  func.func @transform_11(%arg0: i32) -> (i32, i32) {
    %c0_i32 = arith.constant 0 : i32
    %c0_i32_0 = arith.constant 0 : i32
    return %arg0, %c0_i32 : i32, i32
  }
}

</mosaic_0001>

<llo_original>
// kernel: _lambda_.1
$region0: #{_lambda_.1}
  #allocation0 [shape = 'u32[]', space=smem, size = 0x4, offset = 0x4, fixed_abs, tag = 'smem constant byte address 0x4 - core index']
  #allocation1 [shape = 'u32[72,128]{1,0:T(1,128)}', space=vmem, size = 0x9000, scoped, tag = 'internal scratch']
  %s0 = inlined_call_operand.vmem [shape: bf16[1,1152,256], index: 0, kind: input, shape index: {}]
  %s1 = inlined_call_operand.vmem [shape: bf16[256,32], index: 1, kind: input, shape index: {}]
  %s2 = inlined_call_operand.vmem [shape: f32[1,32], index: 2, kind: input, shape index: {}]
  %s3 = inlined_call_operand.vmem [shape: bf16[512,64], index: 3, kind: input, shape index: {}]
  %s4 = inlined_call_operand.vmem [shape: f32[1,64], index: 4, kind: input, shape index: {}]
  %s5 = inlined_call_operand.vmem [shape: bf16[576,64], index: 5, kind: input, shape index: {}]
  %s6 = inlined_call_operand.vmem [shape: f32[1,64], index: 6, kind: input, shape index: {}]
  %s7 = inlined_call_operand.vmem [shape: bf16[576,512], index: 7, kind: input, shape index: {}]
  %s8 = inlined_call_operand.vmem [shape: f32[1,512], index: 8, kind: input, shape index: {}]
  %s9 = inlined_call_operand.vmem [shape: bf16[512,128], index: 9, kind: input, shape index: {}]
  %s10 = inlined_call_operand.vmem [shape: f32[1,128], index: 10, kind: input, shape index: {}]
  %s11 = inlined_call_operand.vmem [shape: f32[8,128], index: 11, kind: output, shape index: {}]
  %s12 = sld [smem:[#allocation0]]
  $region54: #{_lambda_.1} parent=0
    _
  %s14 = ssub.s32 1, %s12
  %s15 = scalar_select 0, %s14, %s12
  // Predicated region
  $region2: #{_lambda_.1} parent=0 // pred_check
    _
  $region3: #{_lambda_.1} parent=0 // pred_check_branch
    %17 = sbr.rel (0) target = $region5
  $region4: #{_lambda_.1} parent=0 // pred_region
    _
  $region5: #{_lambda_.1} parent=0 // pred_fallthru
    _
  // Predicated region
  $region6: #{_lambda_.1} parent=0 // pred_check
    _
  $region7: #{_lambda_.1} parent=0 // pred_check_branch
    %19 = sbr.rel (0) target = $region9
  $region8: #{_lambda_.1} parent=0 // pred_region
    _
  $region9: #{_lambda_.1} parent=0 // pred_fallthru
    _
  // Predicated region
  $region10: #{_lambda_.1} parent=0 // pred_check
    _
  $region11: #{_lambda_.1} parent=0 // pred_check_branch
    %21 = sbr.rel (0) target = $region13
  $region12: #{_lambda_.1} parent=0 // pred_region
    _
  $region13: #{_lambda_.1} parent=0 // pred_fallthru
    _
  // Predicated region
  $region14: #{_lambda_.1} parent=0 // pred_check
    _
  $region15: #{_lambda_.1} parent=0 // pred_check_branch
    %23 = sbr.rel (0) target = $region17
  $region16: #{_lambda_.1} parent=0 // pred_region
    _
  $region17: #{_lambda_.1} parent=0 // pred_fallthru
    _
  // Predicated region
  $region18: #{_lambda_.1} parent=0 // pred_check
    _
  $region19: #{_lambda_.1} parent=0 // pred_check_branch
    %25 = sbr.rel (0) target = $region21
  $region20: #{_lambda_.1} parent=0 // pred_region
    _
  $region21: #{_lambda_.1} parent=0 // pred_fallthru
    _
  // Predicated region
  $region22: #{_lambda_.1} parent=0 // pred_check
    _
  $region23: #{_lambda_.1} parent=0 // pred_check_branch
    %27 = sbr.rel (0) target = $region25
  $region24: #{_lambda_.1} parent=0 // pred_region
    _
  $region25: #{_lambda_.1} parent=0 // pred_fallthru
    _
  // Predicated region
  $region26: #{_lambda_.1} parent=0 // pred_check
    _
  $region27: #{_lambda_.1} parent=0 // pred_check_branch
    %29 = sbr.rel (0) target = $region29
  $region28: #{_lambda_.1} parent=0 // pred_region
    _
  $region29: #{_lambda_.1} parent=0 // pred_fallthru
    _
  // Predicated region
  $region30: #{_lambda_.1} parent=0 // pred_check
    _
  $region31: #{_lambda_.1} parent=0 // pred_check_branch
    %31 = sbr.rel (0) target = $region33
  $region32: #{_lambda_.1} parent=0 // pred_region
    _
  $region33: #{_lambda_.1} parent=0 // pred_fallthru
    _
  // Predicated region
  $region34: #{_lambda_.1} parent=0 // pred_check
    _
  $region35: #{_lambda_.1} parent=0 // pred_check_branch
    %33 = sbr.rel (0) target = $region37
  $region36: #{_lambda_.1} parent=0 // pred_region
    _
  $region37: #{_lambda_.1} parent=0 // pred_fallthru
    _
  // Predicated region
  $region38: #{_lambda_.1} parent=0 // pred_check
    _
  $region39: #{_lambda_.1} parent=0 // pred_check_branch
    %35 = sbr.rel (0) target = $region41
  $region40: #{_lambda_.1} parent=0 // pred_region
    _
  $region41: #{_lambda_.1} parent=0 // pred_fallthru
    _
  // Predicated region
  $region42: #{_lambda_.1} parent=0 // pred_check
    _
  $region43: #{_lambda_.1} parent=0 // pred_check_branch
    %37 = sbr.rel (0) target = $region45
  $region44: #{_lambda_.1} parent=0 // pred_region
    _
  $region45: #{_lambda_.1} parent=0 // pred_fallthru
    _
  %v39 = vld [vmem:[%s0] sm:$0xff]
  %v40 = vld [vmem:[%s0 + $0x8] sm:$0xff]
  %v41 = vld [vmem:[%s0 + $0x10] sm:$0xff]
  %v42 = vld [vmem:[%s0 + $0x18] sm:$0xff]
  %v43 = vld [vmem:[%s0 + $0x20] sm:$0xff]
  %v44 = vld [vmem:[%s0 + $0x28] sm:$0xff]
  %v45 = vld [vmem:[%s0 + $0x30] sm:$0xff]
  %v46 = vld [vmem:[%s0 + $0x38] sm:$0xff]
  %v47 = vld [vmem:[%s0 + $0x40] sm:$0xff]
  %v48 = vld [vmem:[%s0 + $0x48] sm:$0xff]
  %v49 = vld [vmem:[%s0 + $0x50] sm:$0xff]
  %v50 = vld [vmem:[%s0 + $0x58] sm:$0xff]
  %v51 = vld [vmem:[%s0 + $0x60] sm:$0xff]
  %v52 = vld [vmem:[%s0 + $0x68] sm:$0xff]
  %v53 = vld [vmem:[%s0 + $0x70] sm:$0xff]
  %v54 = vld [vmem:[%s0 + $0x78] sm:$0xff]
  %v55 = vld [vmem:[%s0 + $0x80] sm:$0xff]
  %v56 = vld [vmem:[%s0 + $0x88] sm:$0xff]
  %v57 = vld [vmem:[%s0 + $0x90] sm:$0xff]
  %v58 = vld [vmem:[%s0 + $0x98] sm:$0xff]
  %v59 = vld [vmem:[%s0 + $0xa0] sm:$0xff]
  %v60 = vld [vmem:[%s0 + $0xa8] sm:$0xff]
  %v61 = vld [vmem:[%s0 + $0xb0] sm:$0xff]
  %v62 = vld [vmem:[%s0 + $0xb8] sm:$0xff]
  %v63 = vld [vmem:[%s0 + $0xc0] sm:$0xff]
  %v64 = vld [vmem:[%s0 + $0xc8] sm:$0xff]
  %v65 = vld [vmem:[%s0 + $0xd0] sm:$0xff]
  %v66 = vld [vmem:[%s0 + $0xd8] sm:$0xff]
  %v67 = vld [vmem:[%s0 + $0xe0] sm:$0xff]
  %v68 = vld [vmem:[%s0 + $0xe8] sm:$0xff]
  %v69 = vld [vmem:[%s0 + $0xf0] sm:$0xff]
  %v70 = vld [vmem:[%s0 + $0xf8] sm:$0xff]
  %v71 = vld [vmem:[%s0 + $0x100] sm:$0xff]
  %v72 = vld [vmem:[%s0 + $0x108] sm:$0xff]
  %v73 = vld [vmem:[%s0 + $0x110] sm:$0xff]
  %v74 = vld [vmem:[%s0 + $0x118] sm:$0xff]
  %v75 = vld [vmem:[%s0 + $0x120] sm:$0xff]
  %v76 = vld [vmem:[%s0 + $0x128] sm:$0xff]
  %v77 = vld [vmem:[%s0 + $0x130] sm:$0xff]
  %v78 = vld [vmem:[%s0 + $0x138] sm:$0xff]
  %v79 = vld [vmem:[%s0 + $0x140] sm:$0xff]
  %v80 = vld [vmem:[%s0 + $0x148] sm:$0xff]
  %v81 = vld [vmem:[%s0 + $0x150] sm:$0xff]
  %v82 = vld [vmem:[%s0 + $0x158] sm:$0xff]
  %v83 = vld [vmem:[%s0 + $0x160] sm:$0xff]
  %v84 = vld [vmem:[%s0 + $0x168] sm:$0xff]
  %v85 = vld [vmem:[%s0 + $0x170] sm:$0xff]
  %v86 = vld [vmem:[%s0 + $0x178] sm:$0xff]
  %v87 = vld [vmem:[%s0 + $0x180] sm:$0xff]
  %v88 = vld [vmem:[%s0 + $0x188] sm:$0xff]
  %v89 = vld [vmem:[%s0 + $0x190] sm:$0xff]
  %v90 = vld [vmem:[%s0 + $0x198] sm:$0xff]
  %v91 = vld [vmem:[%s0 + $0x1a0] sm:$0xff]
  %v92 = vld [vmem:[%s0 + $0x1a8] sm:$0xff]
  %v93 = vld [vmem:[%s0 + $0x1b0] sm:$0xff]
  %v94 = vld [vmem:[%s0 + $0x1b8] sm:$0xff]
  %v95 = vld [vmem:[%s0 + $0x1c0] sm:$0xff]
  %v96 = vld [vmem:[%s0 + $0x1c8] sm:$0xff]
  %v97 = vld [vmem:[%s0 + $0x1d0] sm:$0xff]
  %v98 = vld [vmem:[%s0 + $0x1d8] sm:$0xff]
  %v99 = vld [vmem:[%s0 + $0x1e0] sm:$0xff]
  %v100 = vld [vmem:[%s0 + $0x1e8] sm:$0xff]
  %v101 = vld [vmem:[%s0 + $0x1f0] sm:$0xff]
  %v102 = vld [vmem:[%s0 + $0x1f8] sm:$0xff]
  %v103 = vld [vmem:[%s0 + $0x200] sm:$0xff]
  %v104 = vld [vmem:[%s0 + $0x208] sm:$0xff]
  %v105 = vld [vmem:[%s0 + $0x210] sm:$0xff]
  %v106 = vld [vmem:[%s0 + $0x218] sm:$0xff]
  %v107 = vld [vmem:[%s0 + $0x220] sm:$0xff]
  %v108 = vld [vmem:[%s0 + $0x228] sm:$0xff]
  %v109 = vld [vmem:[%s0 + $0x230] sm:$0xff]
  %v110 = vld [vmem:[%s0 + $0x238] sm:$0xff]
  %v111 = vld [vmem:[%s0 + $0x240] sm:$0xff]
  %v112 = vld [vmem:[%s0 + $0x248] sm:$0xff]
  %v113 = vld [vmem:[%s0 + $0x250] sm:$0xff]
  %v114 = vld [vmem:[%s0 + $0x258] sm:$0xff]
  %v115 = vld [vmem:[%s0 + $0x260] sm:$0xff]
  %v116 = vld [vmem:[%s0 + $0x268] sm:$0xff]
  %v117 = vld [vmem:[%s0 + $0x270] sm:$0xff]
  %v118 = vld [vmem:[%s0 + $0x278] sm:$0xff]
  %v119 = vld [vmem:[%s0 + $0x280] sm:$0xff]
  %v120 = vld [vmem:[%s0 + $0x288] sm:$0xff]
  %v121 = vld [vmem:[%s0 + $0x290] sm:$0xff]
  %v122 = vld [vmem:[%s0 + $0x298] sm:$0xff]
  %v123 = vld [vmem:[%s0 + $0x2a0] sm:$0xff]
  %v124 = vld [vmem:[%s0 + $0x2a8] sm:$0xff]
  %v125 = vld [vmem:[%s0 + $0x2b0] sm:$0xff]
  %v126 = vld [vmem:[%s0 + $0x2b8] sm:$0xff]
  %v127 = vld [vmem:[%s0 + $0x2c0] sm:$0xff]
  %v128 = vld [vmem:[%s0 + $0x2c8] sm:$0xff]
  %v129 = vld [vmem:[%s0 + $0x2d0] sm:$0xff]
  %v130 = vld [vmem:[%s0 + $0x2d8] sm:$0xff]
  %v131 = vld [vmem:[%s0 + $0x2e0] sm:$0xff]
  %v132 = vld [vmem:[%s0 + $0x2e8] sm:$0xff]
  %v133 = vld [vmem:[%s0 + $0x2f0] sm:$0xff]
  %v134 = vld [vmem:[%s0 + $0x2f8] sm:$0xff]
  %v135 = vld [vmem:[%s0 + $0x300] sm:$0xff]
  %v136 = vld [vmem:[%s0 + $0x308] sm:$0xff]
  %v137 = vld [vmem:[%s0 + $0x310] sm:$0xff]
  %v138 = vld [vmem:[%s0 + $0x318] sm:$0xff]
  %v139 = vld [vmem:[%s0 + $0x320] sm:$0xff]
  %v140 = vld [vmem:[%s0 + $0x328] sm:$0xff]
  %v141 = vld [vmem:[%s0 + $0x330] sm:$0xff]
  %v142 = vld [vmem:[%s0 + $0x338] sm:$0xff]
  %v143 = vld [vmem:[%s0 + $0x340] sm:$0xff]
  %v144 = vld [vmem:[%s0 + $0x348] sm:$0xff]
  %v145 = vld [vmem:[%s0 + $0x350] sm:$0xff]
  %v146 = vld [vmem:[%s0 + $0x358] sm:$0xff]
  %v147 = vld [vmem:[%s0 + $0x360] sm:$0xff]
  %v148 = vld [vmem:[%s0 + $0x368] sm:$0xff]
  %v149 = vld [vmem:[%s0 + $0x370] sm:$0xff]
  %v150 = vld [vmem:[%s0 + $0x378] sm:$0xff]
  %v151 = vld [vmem:[%s0 + $0x380] sm:$0xff]
  %v152 = vld [vmem:[%s0 + $0x388] sm:$0xff]
  %v153 = vld [vmem:[%s0 + $0x390] sm:$0xff]
  %v154 = vld [vmem:[%s0 + $0x398] sm:$0xff]
  %v155 = vld [vmem:[%s0 + $0x3a0] sm:$0xff]
  %v156 = vld [vmem:[%s0 + $0x3a8] sm:$0xff]
  %v157 = vld [vmem:[%s0 + $0x3b0] sm:$0xff]
  %v158 = vld [vmem:[%s0 + $0x3b8] sm:$0xff]
  %v159 = vld [vmem:[%s0 + $0x3c0] sm:$0xff]
  %v160 = vld [vmem:[%s0 + $0x3c8] sm:$0xff]
  %v161 = vld [vmem:[%s0 + $0x3d0] sm:$0xff]
  %v162 = vld [vmem:[%s0 + $0x3d8] sm:$0xff]
  %v163 = vld [vmem:[%s0 + $0x3e0] sm:$0xff]
  %v164 = vld [vmem:[%s0 + $0x3e8] sm:$0xff]
  %v165 = vld [vmem:[%s0 + $0x3f0] sm:$0xff]
  %v166 = vld [vmem:[%s0 + $0x3f8] sm:$0xff]
  %v167 = vld [vmem:[%s0 + $0x400] sm:$0xff]
  %v168 = vld [vmem:[%s0 + $0x408] sm:$0xff]
  %v169 = vld [vmem:[%s0 + $0x410] sm:$0xff]
  %v170 = vld [vmem:[%s0 + $0x418] sm:$0xff]
  %v171 = vld [vmem:[%s0 + $0x420] sm:$0xff]
  %v172 = vld [vmem:[%s0 + $0x428] sm:$0xff]
  %v173 = vld [vmem:[%s0 + $0x430] sm:$0xff]
  %v174 = vld [vmem:[%s0 + $0x438] sm:$0xff]
  %v175 = vld [vmem:[%s0 + $0x440] sm:$0xff]
  %v176 = vld [vmem:[%s0 + $0x448] sm:$0xff]
  %v177 = vld [vmem:[%s0 + $0x450] sm:$0xff]
  %v178 = vld [vmem:[%s0 + $0x458] sm:$0xff]
  %v179 = vld [vmem:[%s0 + $0x460] sm:$0xff]
  %v180 = vld [vmem:[%s0 + $0x468] sm:$0xff]
  %v181 = vld [vmem:[%s0 + $0x470] sm:$0xff]
  %v182 = vld [vmem:[%s0 + $0x478] sm:$0xff]
  %v183 = vld [vmem:[%s1] sm:$0xf]
  %v184 = vld [vmem:[%s1 + $0x4] sm:$0xf]
  %v185 = vld [vmem:[%s1 + $0x8] sm:$0xf]
  %v186 = vld [vmem:[%s1 + $0xc] sm:$0xf]
  %v187 = vld [vmem:[%s1 + $0x10] sm:$0xf]
  %v188 = vld [vmem:[%s1 + $0x14] sm:$0xf]
  %v189 = vld [vmem:[%s1 + $0x18] sm:$0xf]
  %v190 = vld [vmem:[%s1 + $0x1c] sm:$0xf]
  %v191 = vld [vmem:[%s1 + $0x20] sm:$0xf]
  %v192 = vld [vmem:[%s1 + $0x24] sm:$0xf]
  %v193 = vld [vmem:[%s1 + $0x28] sm:$0xf]
  %v194 = vld [vmem:[%s1 + $0x2c] sm:$0xf]
  %v195 = vld [vmem:[%s1 + $0x30] sm:$0xf]
  %v196 = vld [vmem:[%s1 + $0x34] sm:$0xf]
  %v197 = vld [vmem:[%s1 + $0x38] sm:$0xf]
  %v198 = vld [vmem:[%s1 + $0x3c] sm:$0xf]
  %v199 = vld [vmem:[%s1 + $0x40] sm:$0xf]
  %v200 = vld [vmem:[%s1 + $0x44] sm:$0xf]
  %v201 = vld [vmem:[%s1 + $0x48] sm:$0xf]
  %v202 = vld [vmem:[%s1 + $0x4c] sm:$0xf]
  %v203 = vld [vmem:[%s1 + $0x50] sm:$0xf]
  %v204 = vld [vmem:[%s1 + $0x54] sm:$0xf]
  %v205 = vld [vmem:[%s1 + $0x58] sm:$0xf]
  %v206 = vld [vmem:[%s1 + $0x5c] sm:$0xf]
  %v207 = vld [vmem:[%s1 + $0x60] sm:$0xf]
  %v208 = vld [vmem:[%s1 + $0x64] sm:$0xf]
  %v209 = vld [vmem:[%s1 + $0x68] sm:$0xf]
  %v210 = vld [vmem:[%s1 + $0x6c] sm:$0xf]
  %v211 = vld [vmem:[%s1 + $0x70] sm:$0xf]
  %v212 = vld [vmem:[%s1 + $0x74] sm:$0xf]
  %v213 = vld [vmem:[%s1 + $0x78] sm:$0xf]
  %v214 = vld [vmem:[%s1 + $0x7c] sm:$0xf]
  %v215 = vld [vmem:[%s2] sm:$0x1]
  %v217 = vperm.slane %v215, 0
  %v363 = vunpack.c.l.b16 %v39
  %v364 = vunpack.c.h.b16 %v39
  %v365 = vunpack.c.l.b16 %v40
  %v366 = vunpack.c.h.b16 %v40
  %v367 = vunpack.c.l.b16 %v41
  %v368 = vunpack.c.h.b16 %v41
  %v369 = vunpack.c.l.b16 %v42
  %v370 = vunpack.c.h.b16 %v42
  %v371 = vunpack.c.l.b16 %v43
  %v372 = vunpack.c.h.b16 %v43
  %v373 = vunpack.c.l.b16 %v44
  %v374 = vunpack.c.h.b16 %v44
  %v375 = vunpack.c.l.b16 %v45
  %v376 = vunpack.c.h.b16 %v45
  %v377 = vunpack.c.l.b16 %v46
  %v378 = vunpack.c.h.b16 %v46
  %v379 = vunpack.c.l.b16 %v47
  %v380 = vunpack.c.h.b16 %v47
  %v381 = vunpack.c.l.b16 %v48
  %v382 = vunpack.c.h.b16 %v48
  %v383 = vunpack.c.l.b16 %v49
  %v384 = vunpack.c.h.b16 %v49
  %v385 = vunpack.c.l.b16 %v50
  %v386 = vunpack.c.h.b16 %v50
  %v387 = vunpack.c.l.b16 %v51
  %v388 = vunpack.c.h.b16 %v51
  %v389 = vunpack.c.l.b16 %v52
  %v390 = vunpack.c.h.b16 %v52
  %v391 = vunpack.c.l.b16 %v53
  %v392 = vunpack.c.h.b16 %v53
  %v393 = vunpack.c.l.b16 %v54
  %v394 = vunpack.c.h.b16 %v54
  %v395 = vunpack.c.l.b16 %v55
  %v396 = vunpack.c.h.b16 %v55
  %v397 = vunpack.c.l.b16 %v56
  %v398 = vunpack.c.h.b16 %v56
  %v399 = vunpack.c.l.b16 %v57
  %v400 = vunpack.c.h.b16 %v57
  %v401 = vunpack.c.l.b16 %v58
  %v402 = vunpack.c.h.b16 %v58
  %v403 = vunpack.c.l.b16 %v59
  %v404 = vunpack.c.h.b16 %v59
  %v405 = vunpack.c.l.b16 %v60
  %v406 = vunpack.c.h.b16 %v60
  %v407 = vunpack.c.l.b16 %v61
  %v408 = vunpack.c.h.b16 %v61
  %v409 = vunpack.c.l.b16 %v62
  %v410 = vunpack.c.h.b16 %v62
  %v411 = vunpack.c.l.b16 %v63
  %v412 = vunpack.c.h.b16 %v63
  %v413 = vunpack.c.l.b16 %v64
  %v414 = vunpack.c.h.b16 %v64
  %v415 = vunpack.c.l.b16 %v65
  %v416 = vunpack.c.h.b16 %v65
  %v417 = vunpack.c.l.b16 %v66
  %v418 = vunpack.c.h.b16 %v66
  %v419 = vunpack.c.l.b16 %v67
  %v420 = vunpack.c.h.b16 %v67
  %v421 = vunpack.c.l.b16 %v68
  %v422 = vunpack.c.h.b16 %v68
  %v423 = vunpack.c.l.b16 %v69
  %v424 = vunpack.c.h.b16 %v69
  %v425 = vunpack.c.l.b16 %v70
  %v426 = vunpack.c.h.b16 %v70
  %v427 = vunpack.c.l.b16 %v71
  %v428 = vunpack.c.h.b16 %v71
  %v429 = vunpack.c.l.b16 %v72
  %v430 = vunpack.c.h.b16 %v72
  %v431 = vunpack.c.l.b16 %v73
  %v432 = vunpack.c.h.b16 %v73
  %v433 = vunpack.c.l.b16 %v74
  %v434 = vunpack.c.h.b16 %v74
  %v435 = vunpack.c.l.b16 %v75
  %v436 = vunpack.c.h.b16 %v75
  %v437 = vunpack.c.l.b16 %v76
  %v438 = vunpack.c.h.b16 %v76
  %v439 = vunpack.c.l.b16 %v77
  %v440 = vunpack.c.h.b16 %v77
  %v441 = vunpack.c.l.b16 %v78
  %v442 = vunpack.c.h.b16 %v78
  %v443 = vunpack.c.l.b16 %v79
  %v444 = vunpack.c.h.b16 %v79
  %v445 = vunpack.c.l.b16 %v80
  %v446 = vunpack.c.h.b16 %v80
  %v447 = vunpack.c.l.b16 %v81
  %v448 = vunpack.c.h.b16 %v81
  %v449 = vunpack.c.l.b16 %v82
  %v450 = vunpack.c.h.b16 %v82
  %v451 = vunpack.c.l.b16 %v83
  %v452 = vunpack.c.h.b16 %v83
  %v453 = vunpack.c.l.b16 %v84
  %v454 = vunpack.c.h.b16 %v84
  %v455 = vunpack.c.l.b16 %v85
  %v456 = vunpack.c.h.b16 %v85
  %v457 = vunpack.c.l.b16 %v86
  %v458 = vunpack.c.h.b16 %v86
  %v459 = vunpack.c.l.b16 %v87
  %v460 = vunpack.c.h.b16 %v87
  %v461 = vunpack.c.l.b16 %v88
  %v462 = vunpack.c.h.b16 %v88
  %v463 = vunpack.c.l.b16 %v89
  %v464 = vunpack.c.h.b16 %v89
  %v465 = vunpack.c.l.b16 %v90
  %v466 = vunpack.c.h.b16 %v90
  %v467 = vunpack.c.l.b16 %v91
  %v468 = vunpack.c.h.b16 %v91
  %v469 = vunpack.c.l.b16 %v92
  %v470 = vunpack.c.h.b16 %v92
  %v471 = vunpack.c.l.b16 %v93
  %v472 = vunpack.c.h.b16 %v93
  %v473 = vunpack.c.l.b16 %v94
  %v474 = vunpack.c.h.b16 %v94
  %v475 = vunpack.c.l.b16 %v95
  %v476 = vunpack.c.h.b16 %v95
  %v477 = vunpack.c.l.b16 %v96
  %v478 = vunpack.c.h.b16 %v96
  %v479 = vunpack.c.l.b16 %v97
  %v480 = vunpack.c.h.b16 %v97
  %v481 = vunpack.c.l.b16 %v98
  %v482 = vunpack.c.h.b16 %v98
  %v483 = vunpack.c.l.b16 %v99
  %v484 = vunpack.c.h.b16 %v99
  %v485 = vunpack.c.l.b16 %v100
  %v486 = vunpack.c.h.b16 %v100
  %v487 = vunpack.c.l.b16 %v101
  %v488 = vunpack.c.h.b16 %v101
  %v489 = vunpack.c.l.b16 %v102
  %v490 = vunpack.c.h.b16 %v102
  %v491 = vunpack.c.l.b16 %v103
  %v492 = vunpack.c.h.b16 %v103
  %v493 = vunpack.c.l.b16 %v104
  %v494 = vunpack.c.h.b16 %v104
  %v495 = vunpack.c.l.b16 %v105
  %v496 = vunpack.c.h.b16 %v105
  %v497 = vunpack.c.l.b16 %v106
  %v498 = vunpack.c.h.b16 %v106
  %v499 = vunpack.c.l.b16 %v107
  %v500 = vunpack.c.h.b16 %v107
  %v501 = vunpack.c.l.b16 %v108
  %v502 = vunpack.c.h.b16 %v108
  %v503 = vunpack.c.l.b16 %v109
  %v504 = vunpack.c.h.b16 %v109
  %v505 = vunpack.c.l.b16 %v110
  %v506 = vunpack.c.h.b16 %v110
  %v507 = vunpack.c.l.b16 %v111
  %v508 = vunpack.c.h.b16 %v111
  %v509 = vunpack.c.l.b16 %v112
  %v510 = vunpack.c.h.b16 %v112
  %v511 = vunpack.c.l.b16 %v113
  %v512 = vunpack.c.h.b16 %v113
  %v513 = vunpack.c.l.b16 %v114
  %v514 = vunpack.c.h.b16 %v114
  %v515 = vunpack.c.l.b16 %v115
  %v516 = vunpack.c.h.b16 %v115
  %v517 = vunpack.c.l.b16 %v116
  %v518 = vunpack.c.h.b16 %v116
  %v519 = vunpack.c.l.b16 %v117
  %v520 = vunpack.c.h.b16 %v117
  %v521 = vunpack.c.l.b16 %v118
  %v522 = vunpack.c.h.b16 %v118
  %v523 = vunpack.c.l.b16 %v119
  %v524 = vunpack.c.h.b16 %v119
  %v525 = vunpack.c.l.b16 %v120
  %v526 = vunpack.c.h.b16 %v120
  %v527 = vunpack.c.l.b16 %v121
  %v528 = vunpack.c.h.b16 %v121
  %v529 = vunpack.c.l.b16 %v122
  %v530 = vunpack.c.h.b16 %v122
  %v531 = vunpack.c.l.b16 %v123
  %v532 = vunpack.c.h.b16 %v123
  %v533 = vunpack.c.l.b16 %v124
  %v534 = vunpack.c.h.b16 %v124
  %v535 = vunpack.c.l.b16 %v125
  %v536 = vunpack.c.h.b16 %v125
  %v537 = vunpack.c.l.b16 %v126
  %v538 = vunpack.c.h.b16 %v126
  %v539 = vunpack.c.l.b16 %v127
  %v540 = vunpack.c.h.b16 %v127
  %v541 = vunpack.c.l.b16 %v128
  %v542 = vunpack.c.h.b16 %v128
  %v543 = vunpack.c.l.b16 %v129
  %v544 = vunpack.c.h.b16 %v129
  %v545 = vunpack.c.l.b16 %v130
  %v546 = vunpack.c.h.b16 %v130
  %v547 = vunpack.c.l.b16 %v131
  %v548 = vunpack.c.h.b16 %v131
  %v549 = vunpack.c.l.b16 %v132
  %v550 = vunpack.c.h.b16 %v132
  %v551 = vunpack.c.l.b16 %v133
  %v552 = vunpack.c.h.b16 %v133
  %v553 = vunpack.c.l.b16 %v134
  %v554 = vunpack.c.h.b16 %v134
  %v555 = vunpack.c.l.b16 %v135
  %v556 = vunpack.c.h.b16 %v135
  %v557 = vunpack.c.l.b16 %v136
  %v558 = vunpack.c.h.b16 %v136
  %v559 = vunpack.c.l.b16 %v137
  %v560 = vunpack.c.h.b16 %v137
  %v561 = vunpack.c.l.b16 %v138
  %v562 = vunpack.c.h.b16 %v138
  %v563 = vunpack.c.l.b16 %v139
  %v564 = vunpack.c.h.b16 %v139
  %v565 = vunpack.c.l.b16 %v140
  %v566 = vunpack.c.h.b16 %v140
  %v567 = vunpack.c.l.b16 %v141
  %v568 = vunpack.c.h.b16 %v141
  %v569 = vunpack.c.l.b16 %v142
  %v570 = vunpack.c.h.b16 %v142
  %v571 = vunpack.c.l.b16 %v143
  %v572 = vunpack.c.h.b16 %v143
  %v573 = vunpack.c.l.b16 %v144
  %v574 = vunpack.c.h.b16 %v144
  %v575 = vunpack.c.l.b16 %v145
  %v576 = vunpack.c.h.b16 %v145
  %v577 = vunpack.c.l.b16 %v146
  %v578 = vunpack.c.h.b16 %v146
  %v579 = vunpack.c.l.b16 %v147
  %v580 = vunpack.c.h.b16 %v147
  %v581 = vunpack.c.l.b16 %v148
  %v582 = vunpack.c.h.b16 %v148
  %v583 = vunpack.c.l.b16 %v149
  %v584 = vunpack.c.h.b16 %v149
  %v585 = vunpack.c.l.b16 %v150
  %v586 = vunpack.c.h.b16 %v150
  %v587 = vunpack.c.l.b16 %v151
  %v588 = vunpack.c.h.b16 %v151
  %v589 = vunpack.c.l.b16 %v152
  %v590 = vunpack.c.h.b16 %v152
  %v591 = vunpack.c.l.b16 %v153
  %v592 = vunpack.c.h.b16 %v153
  %v593 = vunpack.c.l.b16 %v154
  %v594 = vunpack.c.h.b16 %v154
  %v595 = vunpack.c.l.b16 %v155
  %v596 = vunpack.c.h.b16 %v155
  %v597 = vunpack.c.l.b16 %v156
  %v598 = vunpack.c.h.b16 %v156
  %v599 = vunpack.c.l.b16 %v157
  %v600 = vunpack.c.h.b16 %v157
  %v601 = vunpack.c.l.b16 %v158
  %v602 = vunpack.c.h.b16 %v158
  %v603 = vunpack.c.l.b16 %v159
  %v604 = vunpack.c.h.b16 %v159
  %v605 = vunpack.c.l.b16 %v160
  %v606 = vunpack.c.h.b16 %v160
  %v607 = vunpack.c.l.b16 %v161
  %v608 = vunpack.c.h.b16 %v161
  %v609 = vunpack.c.l.b16 %v162
  %v610 = vunpack.c.h.b16 %v162
  %v611 = vunpack.c.l.b16 %v163
  %v612 = vunpack.c.h.b16 %v163
  %v613 = vunpack.c.l.b16 %v164
  %v614 = vunpack.c.h.b16 %v164
  %v615 = vunpack.c.l.b16 %v165
  %v616 = vunpack.c.h.b16 %v165
  %v617 = vunpack.c.l.b16 %v166
  %v618 = vunpack.c.h.b16 %v166
  %v619 = vunpack.c.l.b16 %v167
  %v620 = vunpack.c.h.b16 %v167
  %v621 = vunpack.c.l.b16 %v168
  %v622 = vunpack.c.h.b16 %v168
  %v623 = vunpack.c.l.b16 %v169
  %v624 = vunpack.c.h.b16 %v169
  %v625 = vunpack.c.l.b16 %v170
  %v626 = vunpack.c.h.b16 %v170
  %v627 = vunpack.c.l.b16 %v171
  %v628 = vunpack.c.h.b16 %v171
  %v629 = vunpack.c.l.b16 %v172
  %v630 = vunpack.c.h.b16 %v172
  %v631 = vunpack.c.l.b16 %v173
  %v632 = vunpack.c.h.b16 %v173
  %v633 = vunpack.c.l.b16 %v174
  %v634 = vunpack.c.h.b16 %v174
  %v635 = vunpack.c.l.b16 %v175
  %v636 = vunpack.c.h.b16 %v175
  %v637 = vunpack.c.l.b16 %v176
  %v638 = vunpack.c.h.b16 %v176
  %v639 = vunpack.c.l.b16 %v177
  %v640 = vunpack.c.h.b16 %v177
  %v641 = vunpack.c.l.b16 %v178
  %v642 = vunpack.c.h.b16 %v178
  %v643 = vunpack.c.l.b16 %v179
  %v644 = vunpack.c.h.b16 %v179
  %v645 = vunpack.c.l.b16 %v180
  %v646 = vunpack.c.h.b16 %v180
  %v647 = vunpack.c.l.b16 %v181
  %v648 = vunpack.c.h.b16 %v181
  %v649 = vunpack.c.l.b16 %v182
  %v650 = vunpack.c.h.b16 %v182
  %v651 = vpack.c.b16 %v365, %v363
  %v652 = vpack.c.b16 %v366, %v364
  %v653 = vpack.c.b16 %v369, %v367
  %v654 = vpack.c.b16 %v370, %v368
  %v655 = vpack.c.b16 %v373, %v371
  %v656 = vpack.c.b16 %v374, %v372
  %v657 = vpack.c.b16 %v377, %v375
  %v658 = vpack.c.b16 %v378, %v376
  %v659 = vpack.c.b16 %v381, %v379
  %v660 = vpack.c.b16 %v382, %v380
  %v661 = vpack.c.b16 %v385, %v383
  %v662 = vpack.c.b16 %v386, %v384
  %v663 = vpack.c.b16 %v389, %v387
  %v664 = vpack.c.b16 %v390, %v388
  %v665 = vpack.c.b16 %v393, %v391
  %v666 = vpack.c.b16 %v394, %v392
  %v667 = vpack.c.b16 %v397, %v395
  %v668 = vpack.c.b16 %v398, %v396
  %v669 = vpack.c.b16 %v401, %v399
  %v670 = vpack.c.b16 %v402, %v400
  %v671 = vpack.c.b16 %v405, %v403
  %v672 = vpack.c.b16 %v406, %v404
  %v673 = vpack.c.b16 %v409, %v407
  %v674 = vpack.c.b16 %v410, %v408
  %v675 = vpack.c.b16 %v413, %v411
  %v676 = vpack.c.b16 %v414, %v412
  %v677 = vpack.c.b16 %v417, %v415
  %v678 = vpack.c.b16 %v418, %v416
  %v679 = vpack.c.b16 %v421, %v419
  %v680 = vpack.c.b16 %v422, %v420
  %v681 = vpack.c.b16 %v425, %v423
  %v682 = vpack.c.b16 %v426, %v424
  %v683 = vpack.c.b16 %v429, %v427
  %v684 = vpack.c.b16 %v430, %v428
  %v685 = vpack.c.b16 %v433, %v431
  %v686 = vpack.c.b16 %v434, %v432
  %v687 = vpack.c.b16 %v437, %v435
  %v688 = vpack.c.b16 %v438, %v436
  %v689 = vpack.c.b16 %v441, %v439
  %v690 = vpack.c.b16 %v442, %v440
  %v691 = vpack.c.b16 %v445, %v443
  %v692 = vpack.c.b16 %v446, %v444
  %v693 = vpack.c.b16 %v449, %v447
  %v694 = vpack.c.b16 %v450, %v448
  %v695 = vpack.c.b16 %v453, %v451
  %v696 = vpack.c.b16 %v454, %v452
  %v697 = vpack.c.b16 %v457, %v455
  %v698 = vpack.c.b16 %v458, %v456
  %v699 = vpack.c.b16 %v461, %v459
  %v700 = vpack.c.b16 %v462, %v460
  %v701 = vpack.c.b16 %v465, %v463
  %v702 = vpack.c.b16 %v466, %v464
  %v703 = vpack.c.b16 %v469, %v467
  %v704 = vpack.c.b16 %v470, %v468
  %v705 = vpack.c.b16 %v473, %v471
  %v706 = vpack.c.b16 %v474, %v472
  %v707 = vpack.c.b16 %v477, %v475
  %v708 = vpack.c.b16 %v478, %v476
  %v709 = vpack.c.b16 %v481, %v479
  %v710 = vpack.c.b16 %v482, %v480
  %v711 = vpack.c.b16 %v485, %v483
  %v712 = vpack.c.b16 %v486, %v484
  %v713 = vpack.c.b16 %v489, %v487
  %v714 = vpack.c.b16 %v490, %v488
  %v715 = vpack.c.b16 %v493, %v491
  %v716 = vpack.c.b16 %v494, %v492
  %v717 = vpack.c.b16 %v497, %v495
  %v718 = vpack.c.b16 %v498, %v496
  %v719 = vpack.c.b16 %v501, %v499
  %v720 = vpack.c.b16 %v502, %v500
  %v721 = vpack.c.b16 %v505, %v503
  %v722 = vpack.c.b16 %v506, %v504
  %v723 = vpack.c.b16 %v509, %v507
  %v724 = vpack.c.b16 %v510, %v508
  %v725 = vpack.c.b16 %v513, %v511
  %v726 = vpack.c.b16 %v514, %v512
  %v727 = vpack.c.b16 %v517, %v515
  %v728 = vpack.c.b16 %v518, %v516
  %v729 = vpack.c.b16 %v521, %v519
  %v730 = vpack.c.b16 %v522, %v520
  %v731 = vpack.c.b16 %v525, %v523
  %v732 = vpack.c.b16 %v526, %v524
  %v733 = vpack.c.b16 %v529, %v527
  %v734 = vpack.c.b16 %v530, %v528
  %v735 = vpack.c.b16 %v533, %v531
  %v736 = vpack.c.b16 %v534, %v532
  %v737 = vpack.c.b16 %v537, %v535
  %v738 = vpack.c.b16 %v538, %v536
  %v739 = vpack.c.b16 %v541, %v539
  %v740 = vpack.c.b16 %v542, %v540
  %v741 = vpack.c.b16 %v545, %v543
  %v742 = vpack.c.b16 %v546, %v544
  %v743 = vpack.c.b16 %v549, %v547
  %v744 = vpack.c.b16 %v550, %v548
  %v745 = vpack.c.b16 %v553, %v551
  %v746 = vpack.c.b16 %v554, %v552
  %v747 = vpack.c.b16 %v557, %v555
  %v748 = vpack.c.b16 %v558, %v556
  %v749 = vpack.c.b16 %v561, %v559
  %v750 = vpack.c.b16 %v562, %v560
  %v751 = vpack.c.b16 %v565, %v563
  %v752 = vpack.c.b16 %v566, %v564
  %v753 = vpack.c.b16 %v569, %v567
  %v754 = vpack.c.b16 %v570, %v568
  %v755 = vpack.c.b16 %v573, %v571
  %v756 = vpack.c.b16 %v574, %v572
  %v757 = vpack.c.b16 %v577, %v575
  %v758 = vpack.c.b16 %v578, %v576
  %v759 = vpack.c.b16 %v581, %v579
  %v760 = vpack.c.b16 %v582, %v580
  %v761 = vpack.c.b16 %v585, %v583
  %v762 = vpack.c.b16 %v586, %v584
  %v763 = vpack.c.b16 %v589, %v587
  %v764 = vpack.c.b16 %v590, %v588
  %v765 = vpack.c.b16 %v593, %v591
  %v766 = vpack.c.b16 %v594, %v592
  %v767 = vpack.c.b16 %v597, %v595
  %v768 = vpack.c.b16 %v598, %v596
  %v769 = vpack.c.b16 %v601, %v599
  %v770 = vpack.c.b16 %v602, %v600
  %v771 = vpack.c.b16 %v605, %v603
  %v772 = vpack.c.b16 %v606, %v604
  %v773 = vpack.c.b16 %v609, %v607
  %v774 = vpack.c.b16 %v610, %v608
  %v775 = vpack.c.b16 %v613, %v611
  %v776 = vpack.c.b16 %v614, %v612
  %v777 = vpack.c.b16 %v617, %v615
  %v778 = vpack.c.b16 %v618, %v616
  %v779 = vpack.c.b16 %v621, %v619
  %v780 = vpack.c.b16 %v622, %v620
  %v781 = vpack.c.b16 %v625, %v623
  %v782 = vpack.c.b16 %v626, %v624
  %v783 = vpack.c.b16 %v629, %v627
  %v784 = vpack.c.b16 %v630, %v628
  %v785 = vpack.c.b16 %v633, %v631
  %v786 = vpack.c.b16 %v634, %v632
  %v787 = vpack.c.b16 %v637, %v635
  %v788 = vpack.c.b16 %v638, %v636
  %v789 = vpack.c.b16 %v641, %v639
  %v790 = vpack.c.b16 %v642, %v640
  %v791 = vpack.c.b16 %v645, %v643
  %v792 = vpack.c.b16 %v646, %v644
  %v793 = vpack.c.b16 %v649, %v647
  %v794 = vpack.c.b16 %v650, %v648
  %v971 = vunpack.c.l.b16 %v183
  %v972 = vunpack.c.l.b16 %v184
  %v973 = vunpack.c.l.b16 %v185
  %v974 = vunpack.c.l.b16 %v186
  %v975 = vunpack.c.l.b16 %v187
  %v976 = vunpack.c.l.b16 %v188
  %v977 = vunpack.c.l.b16 %v189
  %v978 = vunpack.c.l.b16 %v190
  %v979 = vunpack.c.l.b16 %v191
  %v980 = vunpack.c.l.b16 %v192
  %v981 = vunpack.c.l.b16 %v193
  %v982 = vunpack.c.l.b16 %v194
  %v983 = vunpack.c.l.b16 %v195
  %v984 = vunpack.c.l.b16 %v196
  %v985 = vunpack.c.l.b16 %v197
  %v986 = vunpack.c.l.b16 %v198
  %v987 = vunpack.c.l.b16 %v199
  %v988 = vunpack.c.l.b16 %v200
  %v989 = vunpack.c.l.b16 %v201
  %v990 = vunpack.c.l.b16 %v202
  %v991 = vunpack.c.l.b16 %v203
  %v992 = vunpack.c.l.b16 %v204
  %v993 = vunpack.c.l.b16 %v205
  %v994 = vunpack.c.l.b16 %v206
  %v995 = vunpack.c.l.b16 %v207
  %v996 = vunpack.c.l.b16 %v208
  %v997 = vunpack.c.l.b16 %v209
  %v998 = vunpack.c.l.b16 %v210
  %v999 = vunpack.c.l.b16 %v211
  %v1000 = vunpack.c.l.b16 %v212
  %v1001 = vunpack.c.l.b16 %v213
  %v1002 = vunpack.c.l.b16 %v214
  %v1003 = vpack.c.b16 %v972, %v971
  %v1004 = vpack.c.b16 %v974, %v973
  %v1005 = vpack.c.b16 %v976, %v975
  %v1006 = vpack.c.b16 %v978, %v977
  %v1007 = vpack.c.b16 %v980, %v979
  %v1008 = vpack.c.b16 %v982, %v981
  %v1009 = vpack.c.b16 %v984, %v983
  %v1010 = vpack.c.b16 %v986, %v985
  %v1011 = vpack.c.b16 %v988, %v987
  %v1012 = vpack.c.b16 %v990, %v989
  %v1013 = vpack.c.b16 %v992, %v991
  %v1014 = vpack.c.b16 %v994, %v993
  %v1015 = vpack.c.b16 %v996, %v995
  %v1016 = vpack.c.b16 %v998, %v997
  %v1017 = vpack.c.b16 %v1000, %v999
  %v1018 = vpack.c.b16 %v1002, %v1001
  %1035 = vmatpush.bf16.msra.mxu0 %v1010
  %1036 = vmatpush.bf16.msra.mxu0 %v1009
  %1037 = vmatpush.bf16.msra.mxu0 %v1008
  %1038 = vmatpush.bf16.msra.mxu0 %v1007
  %1039 = vmatpush.bf16.msra.mxu0 %v1006
  %1040 = vmatpush.bf16.msra.mxu0 %v1005
  %1041 = vmatpush.bf16.msra.mxu0 %v1004
  %1042 = vmatpush.bf16.msra.mxu0 %v1003
  %1043 = vmatmul.bf16.gmra.mxu0 %v651
  %v1044 = vpop.f32.mrf.mxu0
  %v1045 = vadd.f32 %v217, %v1044
  %v1046 = vpop.f32.mrf.mxu0
  %v1047 = vadd.f32 %v217, %v1046
  %1048 = vmatmul.bf16.gmra.mxu0 %v653
  %v1049 = vpop.f32.mrf.mxu0
  %v1050 = vadd.f32 %v217, %v1049
  %v1051 = vpop.f32.mrf.mxu0
  %v1052 = vadd.f32 %v217, %v1051
  %1053 = vmatmul.bf16.gmra.mxu0 %v655
  %v1054 = vpop.f32.mrf.mxu0
  %v1055 = vadd.f32 %v217, %v1054
  %v1056 = vpop.f32.mrf.mxu0
  %v1057 = vadd.f32 %v217, %v1056
  %1058 = vmatmul.bf16.gmra.mxu0 %v657
  %v1059 = vpop.f32.mrf.mxu0
  %v1060 = vadd.f32 %v217, %v1059
  %v1061 = vpop.f32.mrf.mxu0
  %v1062 = vadd.f32 %v217, %v1061
  %1063 = vmatmul.bf16.gmra.mxu0 %v659
  %v1064 = vpop.f32.mrf.mxu0
  %v1065 = vadd.f32 %v217, %v1064
  %v1066 = vpop.f32.mrf.mxu0
  %v1067 = vadd.f32 %v217, %v1066
  %1068 = vmatmul.bf16.gmra.mxu0 %v661
  %v1069 = vpop.f32.mrf.mxu0
  %v1070 = vadd.f32 %v217, %v1069
  %v1071 = vpop.f32.mrf.mxu0
  %v1072 = vadd.f32 %v217, %v1071
  %1073 = vmatmul.bf16.gmra.mxu0 %v663
  %v1074 = vpop.f32.mrf.mxu0
  %v1075 = vadd.f32 %v217, %v1074
  %v1076 = vpop.f32.mrf.mxu0
  %v1077 = vadd.f32 %v217, %v1076
  %1078 = vmatmul.bf16.gmra.mxu0 %v665
  %v1079 = vpop.f32.mrf.mxu0
  %v1080 = vadd.f32 %v217, %v1079
  %v1081 = vpop.f32.mrf.mxu0
  %v1082 = vadd.f32 %v217, %v1081
  %1083 = vmatmul.bf16.gmra.mxu0 %v667
  %v1084 = vpop.f32.mrf.mxu0
  %v1085 = vadd.f32 %v217, %v1084
  %v1086 = vpop.f32.mrf.mxu0
  %v1087 = vadd.f32 %v217, %v1086
  %1088 = vmatmul.bf16.gmra.mxu0 %v669
  %v1089 = vpop.f32.mrf.mxu0
  %v1090 = vadd.f32 %v217, %v1089
  %v1091 = vpop.f32.mrf.mxu0
  %v1092 = vadd.f32 %v217, %v1091
  %1093 = vmatmul.bf16.gmra.mxu0 %v671
  %v1094 = vpop.f32.mrf.mxu0
  %v1095 = vadd.f32 %v217, %v1094
  %v1096 = vpop.f32.mrf.mxu0
  %v1097 = vadd.f32 %v217, %v1096
  %1098 = vmatmul.bf16.gmra.mxu0 %v673
  %v1099 = vpop.f32.mrf.mxu0
  %v1100 = vadd.f32 %v217, %v1099
  %v1101 = vpop.f32.mrf.mxu0
  %v1102 = vadd.f32 %v217, %v1101
  %1103 = vmatmul.bf16.gmra.mxu0 %v675
  %v1104 = vpop.f32.mrf.mxu0
  %v1105 = vadd.f32 %v217, %v1104
  %v1106 = vpop.f32.mrf.mxu0
  %v1107 = vadd.f32 %v217, %v1106
  %1108 = vmatmul.bf16.gmra.mxu0 %v677
  %v1109 = vpop.f32.mrf.mxu0
  %v1110 = vadd.f32 %v217, %v1109
  %v1111 = vpop.f32.mrf.mxu0
  %v1112 = vadd.f32 %v217, %v1111
  %1113 = vmatmul.bf16.gmra.mxu0 %v679
  %v1114 = vpop.f32.mrf.mxu0
  %v1115 = vadd.f32 %v217, %v1114
  %v1116 = vpop.f32.mrf.mxu0
  %v1117 = vadd.f32 %v217, %v1116
  %1118 = vmatmul.bf16.gmra.mxu0 %v681
  %v1119 = vpop.f32.mrf.mxu0
  %v1120 = vadd.f32 %v217, %v1119
  %v1121 = vpop.f32.mrf.mxu0
  %v1122 = vadd.f32 %v217, %v1121
  %1123 = vmatmul.bf16.gmra.mxu0 %v683
  %v1124 = vpop.f32.mrf.mxu0
  %v1125 = vadd.f32 %v217, %v1124
  %v1126 = vpop.f32.mrf.mxu0
  %v1127 = vadd.f32 %v217, %v1126
  %1128 = vmatmul.bf16.gmra.mxu0 %v685
  %v1129 = vpop.f32.mrf.mxu0
  %v1130 = vadd.f32 %v217, %v1129
  %v1131 = vpop.f32.mrf.mxu0
  %v1132 = vadd.f32 %v217, %v1131
  %1133 = vmatmul.bf16.gmra.mxu0 %v687
  %v1134 = vpop.f32.mrf.mxu0
  %v1135 = vadd.f32 %v217, %v1134
  %v1136 = vpop.f32.mrf.mxu0
  %v1137 = vadd.f32 %v217, %v1136
  %1138 = vmatmul.bf16.gmra.mxu0 %v689
  %v1139 = vpop.f32.mrf.mxu0
  %v1140 = vadd.f32 %v217, %v1139
  %v1141 = vpop.f32.mrf.mxu0
  %v1142 = vadd.f32 %v217, %v1141
  %1143 = vmatmul.bf16.gmra.mxu0 %v691
  %v1144 = vpop.f32.mrf.mxu0
  %v1145 = vadd.f32 %v217, %v1144
  %v1146 = vpop.f32.mrf.mxu0
  %v1147 = vadd.f32 %v217, %v1146
  %1148 = vmatmul.bf16.gmra.mxu0 %v693
  %v1149 = vpop.f32.mrf.mxu0
  %v1150 = vadd.f32 %v217, %v1149
  %v1151 = vpop.f32.mrf.mxu0
  %v1152 = vadd.f32 %v217, %v1151
  %1153 = vmatmul.bf16.gmra.mxu0 %v695
  %v1154 = vpop.f32.mrf.mxu0
  %v1155 = vadd.f32 %v217, %v1154
  %v1156 = vpop.f32.mrf.mxu0
  %v1157 = vadd.f32 %v217, %v1156
  %1158 = vmatmul.bf16.gmra.mxu0 %v697
  %v1159 = vpop.f32.mrf.mxu0
  %v1160 = vadd.f32 %v217, %v1159
  %v1161 = vpop.f32.mrf.mxu0
  %v1162 = vadd.f32 %v217, %v1161
  %1163 = vmatmul.bf16.gmra.mxu0 %v699
  %v1164 = vpop.f32.mrf.mxu0
  %v1165 = vadd.f32 %v217, %v1164
  %v1166 = vpop.f32.mrf.mxu0
  %v1167 = vadd.f32 %v217, %v1166
  %1168 = vmatmul.bf16.gmra.mxu0 %v701
  %v1169 = vpop.f32.mrf.mxu0
  %v1170 = vadd.f32 %v217, %v1169
  %v1171 = vpop.f32.mrf.mxu0
  %v1172 = vadd.f32 %v217, %v1171
  %1173 = vmatmul.bf16.gmra.mxu0 %v703
  %v1174 = vpop.f32.mrf.mxu0
  %v1175 = vadd.f32 %v217, %v1174
  %v1176 = vpop.f32.mrf.mxu0
  %v1177 = vadd.f32 %v217, %v1176
  %1178 = vmatmul.bf16.gmra.mxu0 %v705
  %v1179 = vpop.f32.mrf.mxu0
  %v1180 = vadd.f32 %v217, %v1179
  %v1181 = vpop.f32.mrf.mxu0
  %v1182 = vadd.f32 %v217, %v1181
  %1183 = vmatmul.bf16.gmra.mxu0 %v707
  %v1184 = vpop.f32.mrf.mxu0
  %v1185 = vadd.f32 %v217, %v1184
  %v1186 = vpop.f32.mrf.mxu0
  %v1187 = vadd.f32 %v217, %v1186
  %1188 = vmatmul.bf16.gmra.mxu0 %v709
  %v1189 = vpop.f32.mrf.mxu0
  %v1190 = vadd.f32 %v217, %v1189
  %v1191 = vpop.f32.mrf.mxu0
  %v1192 = vadd.f32 %v217, %v1191
  %1193 = vmatmul.bf16.gmra.mxu0 %v711
  %v1194 = vpop.f32.mrf.mxu0
  %v1195 = vadd.f32 %v217, %v1194
  %v1196 = vpop.f32.mrf.mxu0
  %v1197 = vadd.f32 %v217, %v1196
  %1198 = vmatmul.bf16.gmra.mxu0 %v713
  %v1199 = vpop.f32.mrf.mxu0
  %v1200 = vadd.f32 %v217, %v1199
  %v1201 = vpop.f32.mrf.mxu0
  %v1202 = vadd.f32 %v217, %v1201
  %1203 = vmatmul.bf16.gmra.mxu0 %v715
  %v1204 = vpop.f32.mrf.mxu0
  %v1205 = vadd.f32 %v217, %v1204
  %v1206 = vpop.f32.mrf.mxu0
  %v1207 = vadd.f32 %v217, %v1206
  %1208 = vmatmul.bf16.gmra.mxu0 %v717
  %v1209 = vpop.f32.mrf.mxu0
  %v1210 = vadd.f32 %v217, %v1209
  %v1211 = vpop.f32.mrf.mxu0
  %v1212 = vadd.f32 %v217, %v1211
  %1213 = vmatmul.bf16.gmra.mxu0 %v719
  %v1214 = vpop.f32.mrf.mxu0
  %v1215 = vadd.f32 %v217, %v1214
  %v1216 = vpop.f32.mrf.mxu0
  %v1217 = vadd.f32 %v217, %v1216
  %1218 = vmatmul.bf16.gmra.mxu0 %v721
  %v1219 = vpop.f32.mrf.mxu0
  %v1220 = vadd.f32 %v217, %v1219
  %v1221 = vpop.f32.mrf.mxu0
  %v1222 = vadd.f32 %v217, %v1221
  %1223 = vmatmul.bf16.gmra.mxu0 %v723
  %v1224 = vpop.f32.mrf.mxu0
  %v1225 = vadd.f32 %v217, %v1224
  %v1226 = vpop.f32.mrf.mxu0
  %v1227 = vadd.f32 %v217, %v1226
  %1228 = vmatmul.bf16.gmra.mxu0 %v725
  %v1229 = vpop.f32.mrf.mxu0
  %v1230 = vadd.f32 %v217, %v1229
  %v1231 = vpop.f32.mrf.mxu0
  %v1232 = vadd.f32 %v217, %v1231
  %1233 = vmatmul.bf16.gmra.mxu0 %v727
  %v1234 = vpop.f32.mrf.mxu0
  %v1235 = vadd.f32 %v217, %v1234
  %v1236 = vpop.f32.mrf.mxu0
  %v1237 = vadd.f32 %v217, %v1236
  %1238 = vmatmul.bf16.gmra.mxu0 %v729
  %v1239 = vpop.f32.mrf.mxu0
  %v1240 = vadd.f32 %v217, %v1239
  %v1241 = vpop.f32.mrf.mxu0
  %v1242 = vadd.f32 %v217, %v1241
  %1243 = vmatmul.bf16.gmra.mxu0 %v731
  %v1244 = vpop.f32.mrf.mxu0
  %v1245 = vadd.f32 %v217, %v1244
  %v1246 = vpop.f32.mrf.mxu0
  %v1247 = vadd.f32 %v217, %v1246
  %1248 = vmatmul.bf16.gmra.mxu0 %v733
  %v1249 = vpop.f32.mrf.mxu0
  %v1250 = vadd.f32 %v217, %v1249
  %v1251 = vpop.f32.mrf.mxu0
  %v1252 = vadd.f32 %v217, %v1251
  %1253 = vmatmul.bf16.gmra.mxu0 %v735
  %v1254 = vpop.f32.mrf.mxu0
  %v1255 = vadd.f32 %v217, %v1254
  %v1256 = vpop.f32.mrf.mxu0
  %v1257 = vadd.f32 %v217, %v1256
  %1258 = vmatmul.bf16.gmra.mxu0 %v737
  %v1259 = vpop.f32.mrf.mxu0
  %v1260 = vadd.f32 %v217, %v1259
  %v1261 = vpop.f32.mrf.mxu0
  %v1262 = vadd.f32 %v217, %v1261
  %1263 = vmatmul.bf16.gmra.mxu0 %v739
  %v1264 = vpop.f32.mrf.mxu0
  %v1265 = vadd.f32 %v217, %v1264
  %v1266 = vpop.f32.mrf.mxu0
  %v1267 = vadd.f32 %v217, %v1266
  %1268 = vmatmul.bf16.gmra.mxu0 %v741
  %v1269 = vpop.f32.mrf.mxu0
  %v1270 = vadd.f32 %v217, %v1269
  %v1271 = vpop.f32.mrf.mxu0
  %v1272 = vadd.f32 %v217, %v1271
  %1273 = vmatmul.bf16.gmra.mxu0 %v743
  %v1274 = vpop.f32.mrf.mxu0
  %v1275 = vadd.f32 %v217, %v1274
  %v1276 = vpop.f32.mrf.mxu0
  %v1277 = vadd.f32 %v217, %v1276
  %1278 = vmatmul.bf16.gmra.mxu0 %v745
  %v1279 = vpop.f32.mrf.mxu0
  %v1280 = vadd.f32 %v217, %v1279
  %v1281 = vpop.f32.mrf.mxu0
  %v1282 = vadd.f32 %v217, %v1281
  %1283 = vmatmul.bf16.gmra.mxu0 %v747
  %v1284 = vpop.f32.mrf.mxu0
  %v1285 = vadd.f32 %v217, %v1284
  %v1286 = vpop.f32.mrf.mxu0
  %v1287 = vadd.f32 %v217, %v1286
  %1288 = vmatmul.bf16.gmra.mxu0 %v749
  %v1289 = vpop.f32.mrf.mxu0
  %v1290 = vadd.f32 %v217, %v1289
  %v1291 = vpop.f32.mrf.mxu0
  %v1292 = vadd.f32 %v217, %v1291
  %1293 = vmatmul.bf16.gmra.mxu0 %v751
  %v1294 = vpop.f32.mrf.mxu0
  %v1295 = vadd.f32 %v217, %v1294
  %v1296 = vpop.f32.mrf.mxu0
  %v1297 = vadd.f32 %v217, %v1296
  %1298 = vmatmul.bf16.gmra.mxu0 %v753
  %v1299 = vpop.f32.mrf.mxu0
  %v1300 = vadd.f32 %v217, %v1299
  %v1301 = vpop.f32.mrf.mxu0
  %v1302 = vadd.f32 %v217, %v1301
  %1303 = vmatmul.bf16.gmra.mxu0 %v755
  %v1304 = vpop.f32.mrf.mxu0
  %v1305 = vadd.f32 %v217, %v1304
  %v1306 = vpop.f32.mrf.mxu0
  %v1307 = vadd.f32 %v217, %v1306
  %1308 = vmatmul.bf16.gmra.mxu0 %v757
  %v1309 = vpop.f32.mrf.mxu0
  %v1310 = vadd.f32 %v217, %v1309
  %v1311 = vpop.f32.mrf.mxu0
  %v1312 = vadd.f32 %v217, %v1311
  %1313 = vmatmul.bf16.gmra.mxu0 %v759
  %v1314 = vpop.f32.mrf.mxu0
  %v1315 = vadd.f32 %v217, %v1314
  %v1316 = vpop.f32.mrf.mxu0
  %v1317 = vadd.f32 %v217, %v1316
  %1318 = vmatmul.bf16.gmra.mxu0 %v761
  %v1319 = vpop.f32.mrf.mxu0
  %v1320 = vadd.f32 %v217, %v1319
  %v1321 = vpop.f32.mrf.mxu0
  %v1322 = vadd.f32 %v217, %v1321
  %1323 = vmatmul.bf16.gmra.mxu0 %v763
  %v1324 = vpop.f32.mrf.mxu0
  %v1325 = vadd.f32 %v217, %v1324
  %v1326 = vpop.f32.mrf.mxu0
  %v1327 = vadd.f32 %v217, %v1326
  %1328 = vmatmul.bf16.gmra.mxu0 %v765
  %v1329 = vpop.f32.mrf.mxu0
  %v1330 = vadd.f32 %v217, %v1329
  %v1331 = vpop.f32.mrf.mxu0
  %v1332 = vadd.f32 %v217, %v1331
  %1333 = vmatmul.bf16.gmra.mxu0 %v767
  %v1334 = vpop.f32.mrf.mxu0
  %v1335 = vadd.f32 %v217, %v1334
  %v1336 = vpop.f32.mrf.mxu0
  %v1337 = vadd.f32 %v217, %v1336
  %1338 = vmatmul.bf16.gmra.mxu0 %v769
  %v1339 = vpop.f32.mrf.mxu0
  %v1340 = vadd.f32 %v217, %v1339
  %v1341 = vpop.f32.mrf.mxu0
  %v1342 = vadd.f32 %v217, %v1341
  %1343 = vmatmul.bf16.gmra.mxu0 %v771
  %v1344 = vpop.f32.mrf.mxu0
  %v1345 = vadd.f32 %v217, %v1344
  %v1346 = vpop.f32.mrf.mxu0
  %v1347 = vadd.f32 %v217, %v1346
  %1348 = vmatmul.bf16.gmra.mxu0 %v773
  %v1349 = vpop.f32.mrf.mxu0
  %v1350 = vadd.f32 %v217, %v1349
  %v1351 = vpop.f32.mrf.mxu0
  %v1352 = vadd.f32 %v217, %v1351
  %1353 = vmatmul.bf16.gmra.mxu0 %v775
  %v1354 = vpop.f32.mrf.mxu0
  %v1355 = vadd.f32 %v217, %v1354
  %v1356 = vpop.f32.mrf.mxu0
  %v1357 = vadd.f32 %v217, %v1356
  %1358 = vmatmul.bf16.gmra.mxu0 %v777
  %v1359 = vpop.f32.mrf.mxu0
  %v1360 = vadd.f32 %v217, %v1359
  %v1361 = vpop.f32.mrf.mxu0
  %v1362 = vadd.f32 %v217, %v1361
  %1363 = vmatmul.bf16.gmra.mxu0 %v779
  %v1364 = vpop.f32.mrf.mxu0
  %v1365 = vadd.f32 %v217, %v1364
  %v1366 = vpop.f32.mrf.mxu0
  %v1367 = vadd.f32 %v217, %v1366
  %1368 = vmatmul.bf16.gmra.mxu0 %v781
  %v1369 = vpop.f32.mrf.mxu0
  %v1370 = vadd.f32 %v217, %v1369
  %v1371 = vpop.f32.mrf.mxu0
  %v1372 = vadd.f32 %v217, %v1371
  %1373 = vmatmul.bf16.gmra.mxu0 %v783
  %v1374 = vpop.f32.mrf.mxu0
  %v1375 = vadd.f32 %v217, %v1374
  %v1376 = vpop.f32.mrf.mxu0
  %v1377 = vadd.f32 %v217, %v1376
  %1378 = vmatmul.bf16.gmra.mxu0 %v785
  %v1379 = vpop.f32.mrf.mxu0
  %v1380 = vadd.f32 %v217, %v1379
  %v1381 = vpop.f32.mrf.mxu0
  %v1382 = vadd.f32 %v217, %v1381
  %1383 = vmatmul.bf16.gmra.mxu0 %v787
  %v1384 = vpop.f32.mrf.mxu0
  %v1385 = vadd.f32 %v217, %v1384
  %v1386 = vpop.f32.mrf.mxu0
  %v1387 = vadd.f32 %v217, %v1386
  %1388 = vmatmul.bf16.gmra.mxu0 %v789
  %v1389 = vpop.f32.mrf.mxu0
  %v1390 = vadd.f32 %v217, %v1389
  %v1391 = vpop.f32.mrf.mxu0
  %v1392 = vadd.f32 %v217, %v1391
  %1393 = vmatmul.bf16.gmra.mxu0 %v791
  %v1394 = vpop.f32.mrf.mxu0
  %v1395 = vadd.f32 %v217, %v1394
  %v1396 = vpop.f32.mrf.mxu0
  %v1397 = vadd.f32 %v217, %v1396
  %1398 = vmatmul.bf16.gmra.mxu0 %v793
  %v1399 = vpop.f32.mrf.mxu0
  %v1400 = vadd.f32 %v217, %v1399
  %v1401 = vpop.f32.mrf.mxu0
  %v1402 = vadd.f32 %v217, %v1401
  %1403 = vdwg.mxu0
  %1404 = vmatpush.bf16.msra.mxu0 %v1018
  %1405 = vmatpush.bf16.msra.mxu0 %v1017
  %1406 = vmatpush.bf16.msra.mxu0 %v1016
  %1407 = vmatpush.bf16.msra.mxu0 %v1015
  %1408 = vmatpush.bf16.msra.mxu0 %v1014
  %1409 = vmatpush.bf16.msra.mxu0 %v1013
  %1410 = vmatpush.bf16.msra.mxu0 %v1012
  %1411 = vmatpush.bf16.msra.mxu0 %v1011
  %1412 = vmatmul.bf16.gmra.mxu0 %v652
  %v1413 = vpop.f32.mrf.mxu0
  %v1414 = vadd.f32 %v1045, %v1413
  %v1415 = vpop.f32.mrf.mxu0
  %v1416 = vadd.f32 %v1047, %v1415
  %1417 = vmatmul.bf16.gmra.mxu0 %v654
  %v1418 = vpop.f32.mrf.mxu0
  %v1419 = vadd.f32 %v1050, %v1418
  %v1420 = vpop.f32.mrf.mxu0
  %v1421 = vadd.f32 %v1052, %v1420
  %1422 = vmatmul.bf16.gmra.mxu0 %v656
  %v1423 = vpop.f32.mrf.mxu0
  %v1424 = vadd.f32 %v1055, %v1423
  %v1425 = vpop.f32.mrf.mxu0
  %v1426 = vadd.f32 %v1057, %v1425
  %1427 = vmatmul.bf16.gmra.mxu0 %v658
  %v1428 = vpop.f32.mrf.mxu0
  %v1429 = vadd.f32 %v1060, %v1428
  %v1430 = vpop.f32.mrf.mxu0
  %v1431 = vadd.f32 %v1062, %v1430
  %1432 = vmatmul.bf16.gmra.mxu0 %v660
  %v1433 = vpop.f32.mrf.mxu0
  %v1434 = vadd.f32 %v1065, %v1433
  %v1435 = vpop.f32.mrf.mxu0
  %v1436 = vadd.f32 %v1067, %v1435
  %1437 = vmatmul.bf16.gmra.mxu0 %v662
  %v1438 = vpop.f32.mrf.mxu0
  %v1439 = vadd.f32 %v1070, %v1438
  %v1440 = vpop.f32.mrf.mxu0
  %v1441 = vadd.f32 %v1072, %v1440
  %1442 = vmatmul.bf16.gmra.mxu0 %v664
  %v1443 = vpop.f32.mrf.mxu0
  %v1444 = vadd.f32 %v1075, %v1443
  %v1445 = vpop.f32.mrf.mxu0
  %v1446 = vadd.f32 %v1077, %v1445
  %1447 = vmatmul.bf16.gmra.mxu0 %v666
  %v1448 = vpop.f32.mrf.mxu0
  %v1449 = vadd.f32 %v1080, %v1448
  %v1450 = vpop.f32.mrf.mxu0
  %v1451 = vadd.f32 %v1082, %v1450
  %1452 = vmatmul.bf16.gmra.mxu0 %v668
  %v1453 = vpop.f32.mrf.mxu0
  %v1454 = vadd.f32 %v1085, %v1453
  %v1455 = vpop.f32.mrf.mxu0
  %v1456 = vadd.f32 %v1087, %v1455
  %1457 = vmatmul.bf16.gmra.mxu0 %v670
  %v1458 = vpop.f32.mrf.mxu0
  %v1459 = vadd.f32 %v1090, %v1458
  %v1460 = vpop.f32.mrf.mxu0
  %v1461 = vadd.f32 %v1092, %v1460
  %1462 = vmatmul.bf16.gmra.mxu0 %v672
  %v1463 = vpop.f32.mrf.mxu0
  %v1464 = vadd.f32 %v1095, %v1463
  %v1465 = vpop.f32.mrf.mxu0
  %v1466 = vadd.f32 %v1097, %v1465
  %1467 = vmatmul.bf16.gmra.mxu0 %v674
  %v1468 = vpop.f32.mrf.mxu0
  %v1469 = vadd.f32 %v1100, %v1468
  %v1470 = vpop.f32.mrf.mxu0
  %v1471 = vadd.f32 %v1102, %v1470
  %1472 = vmatmul.bf16.gmra.mxu0 %v676
  %v1473 = vpop.f32.mrf.mxu0
  %v1474 = vadd.f32 %v1105, %v1473
  %v1475 = vpop.f32.mrf.mxu0
  %v1476 = vadd.f32 %v1107, %v1475
  %1477 = vmatmul.bf16.gmra.mxu0 %v678
  %v1478 = vpop.f32.mrf.mxu0
  %v1479 = vadd.f32 %v1110, %v1478
  %v1480 = vpop.f32.mrf.mxu0
  %v1481 = vadd.f32 %v1112, %v1480
  %1482 = vmatmul.bf16.gmra.mxu0 %v680
  %v1483 = vpop.f32.mrf.mxu0
  %v1484 = vadd.f32 %v1115, %v1483
  %v1485 = vpop.f32.mrf.mxu0
  %v1486 = vadd.f32 %v1117, %v1485
  %1487 = vmatmul.bf16.gmra.mxu0 %v682
  %v1488 = vpop.f32.mrf.mxu0
  %v1489 = vadd.f32 %v1120, %v1488
  %v1490 = vpop.f32.mrf.mxu0
  %v1491 = vadd.f32 %v1122, %v1490
  %1492 = vmatmul.bf16.gmra.mxu0 %v684
  %v1493 = vpop.f32.mrf.mxu0
  %v1494 = vadd.f32 %v1125, %v1493
  %v1495 = vpop.f32.mrf.mxu0
  %v1496 = vadd.f32 %v1127, %v1495
  %1497 = vmatmul.bf16.gmra.mxu0 %v686
  %v1498 = vpop.f32.mrf.mxu0
  %v1499 = vadd.f32 %v1130, %v1498
  %v1500 = vpop.f32.mrf.mxu0
  %v1501 = vadd.f32 %v1132, %v1500
  %1502 = vmatmul.bf16.gmra.mxu0 %v688
  %v1503 = vpop.f32.mrf.mxu0
  %v1504 = vadd.f32 %v1135, %v1503
  %v1505 = vpop.f32.mrf.mxu0
  %v1506 = vadd.f32 %v1137, %v1505
  %1507 = vmatmul.bf16.gmra.mxu0 %v690
  %v1508 = vpop.f32.mrf.mxu0
  %v1509 = vadd.f32 %v1140, %v1508
  %v1510 = vpop.f32.mrf.mxu0
  %v1511 = vadd.f32 %v1142, %v1510
  %1512 = vmatmul.bf16.gmra.mxu0 %v692
  %v1513 = vpop.f32.mrf.mxu0
  %v1514 = vadd.f32 %v1145, %v1513
  %v1515 = vpop.f32.mrf.mxu0
  %v1516 = vadd.f32 %v1147, %v1515
  %1517 = vmatmul.bf16.gmra.mxu0 %v694
  %v1518 = vpop.f32.mrf.mxu0
  %v1519 = vadd.f32 %v1150, %v1518
  %v1520 = vpop.f32.mrf.mxu0
  %v1521 = vadd.f32 %v1152, %v1520
  %1522 = vmatmul.bf16.gmra.mxu0 %v696
  %v1523 = vpop.f32.mrf.mxu0
  %v1524 = vadd.f32 %v1155, %v1523
  %v1525 = vpop.f32.mrf.mxu0
  %v1526 = vadd.f32 %v1157, %v1525
  %1527 = vmatmul.bf16.gmra.mxu0 %v698
  %v1528 = vpop.f32.mrf.mxu0
  %v1529 = vadd.f32 %v1160, %v1528
  %v1530 = vpop.f32.mrf.mxu0
  %v1531 = vadd.f32 %v1162, %v1530
  %1532 = vmatmul.bf16.gmra.mxu0 %v700
  %v1533 = vpop.f32.mrf.mxu0
  %v1534 = vadd.f32 %v1165, %v1533
  %v1535 = vpop.f32.mrf.mxu0
  %v1536 = vadd.f32 %v1167, %v1535
  %1537 = vmatmul.bf16.gmra.mxu0 %v702
  %v1538 = vpop.f32.mrf.mxu0
  %v1539 = vadd.f32 %v1170, %v1538
  %v1540 = vpop.f32.mrf.mxu0
  %v1541 = vadd.f32 %v1172, %v1540
  %1542 = vmatmul.bf16.gmra.mxu0 %v704
  %v1543 = vpop.f32.mrf.mxu0
  %v1544 = vadd.f32 %v1175, %v1543
  %v1545 = vpop.f32.mrf.mxu0
  %v1546 = vadd.f32 %v1177, %v1545
  %1547 = vmatmul.bf16.gmra.mxu0 %v706
  %v1548 = vpop.f32.mrf.mxu0
  %v1549 = vadd.f32 %v1180, %v1548
  %v1550 = vpop.f32.mrf.mxu0
  %v1551 = vadd.f32 %v1182, %v1550
  %1552 = vmatmul.bf16.gmra.mxu0 %v708
  %v1553 = vpop.f32.mrf.mxu0
  %v1554 = vadd.f32 %v1185, %v1553
  %v1555 = vpop.f32.mrf.mxu0
  %v1556 = vadd.f32 %v1187, %v1555
  %1557 = vmatmul.bf16.gmra.mxu0 %v710
  %v1558 = vpop.f32.mrf.mxu0
  %v1559 = vadd.f32 %v1190, %v1558
  %v1560 = vpop.f32.mrf.mxu0
  %v1561 = vadd.f32 %v1192, %v1560
  %1562 = vmatmul.bf16.gmra.mxu0 %v712
  %v1563 = vpop.f32.mrf.mxu0
  %v1564 = vadd.f32 %v1195, %v1563
  %v1565 = vpop.f32.mrf.mxu0
  %v1566 = vadd.f32 %v1197, %v1565
  %1567 = vmatmul.bf16.gmra.mxu0 %v714
  %v1568 = vpop.f32.mrf.mxu0
  %v1569 = vadd.f32 %v1200, %v1568
  %v1570 = vpop.f32.mrf.mxu0
  %v1571 = vadd.f32 %v1202, %v1570
  %1572 = vmatmul.bf16.gmra.mxu0 %v716
  %v1573 = vpop.f32.mrf.mxu0
  %v1574 = vadd.f32 %v1205, %v1573
  %v1575 = vpop.f32.mrf.mxu0
  %v1576 = vadd.f32 %v1207, %v1575
  %1577 = vmatmul.bf16.gmra.mxu0 %v718
  %v1578 = vpop.f32.mrf.mxu0
  %v1579 = vadd.f32 %v1210, %v1578
  %v1580 = vpop.f32.mrf.mxu0
  %v1581 = vadd.f32 %v1212, %v1580
  %1582 = vmatmul.bf16.gmra.mxu0 %v720
  %v1583 = vpop.f32.mrf.mxu0
  %v1584 = vadd.f32 %v1215, %v1583
  %v1585 = vpop.f32.mrf.mxu0
  %v1586 = vadd.f32 %v1217, %v1585
  %1587 = vmatmul.bf16.gmra.mxu0 %v722
  %v1588 = vpop.f32.mrf.mxu0
  %v1589 = vadd.f32 %v1220, %v1588
  %v1590 = vpop.f32.mrf.mxu0
  %v1591 = vadd.f32 %v1222, %v1590
  %1592 = vmatmul.bf16.gmra.mxu0 %v724
  %v1593 = vpop.f32.mrf.mxu0
  %v1594 = vadd.f32 %v1225, %v1593
  %v1595 = vpop.f32.mrf.mxu0
  %v1596 = vadd.f32 %v1227, %v1595
  %1597 = vmatmul.bf16.gmra.mxu0 %v726
  %v1598 = vpop.f32.mrf.mxu0
  %v1599 = vadd.f32 %v1230, %v1598
  %v1600 = vpop.f32.mrf.mxu0
  %v1601 = vadd.f32 %v1232, %v1600
  %1602 = vmatmul.bf16.gmra.mxu0 %v728
  %v1603 = vpop.f32.mrf.mxu0
  %v1604 = vadd.f32 %v1235, %v1603
  %v1605 = vpop.f32.mrf.mxu0
  %v1606 = vadd.f32 %v1237, %v1605
  %1607 = vmatmul.bf16.gmra.mxu0 %v730
  %v1608 = vpop.f32.mrf.mxu0
  %v1609 = vadd.f32 %v1240, %v1608
  %v1610 = vpop.f32.mrf.mxu0
  %v1611 = vadd.f32 %v1242, %v1610
  %1612 = vmatmul.bf16.gmra.mxu0 %v732
  %v1613 = vpop.f32.mrf.mxu0
  %v1614 = vadd.f32 %v1245, %v1613
  %v1615 = vpop.f32.mrf.mxu0
  %v1616 = vadd.f32 %v1247, %v1615
  %1617 = vmatmul.bf16.gmra.mxu0 %v734
  %v1618 = vpop.f32.mrf.mxu0
  %v1619 = vadd.f32 %v1250, %v1618
  %v1620 = vpop.f32.mrf.mxu0
  %v1621 = vadd.f32 %v1252, %v1620
  %1622 = vmatmul.bf16.gmra.mxu0 %v736
  %v1623 = vpop.f32.mrf.mxu0
  %v1624 = vadd.f32 %v1255, %v1623
  %v1625 = vpop.f32.mrf.mxu0
  %v1626 = vadd.f32 %v1257, %v1625
  %1627 = vmatmul.bf16.gmra.mxu0 %v738
  %v1628 = vpop.f32.mrf.mxu0
  %v1629 = vadd.f32 %v1260, %v1628
  %v1630 = vpop.f32.mrf.mxu0
  %v1631 = vadd.f32 %v1262, %v1630
  %1632 = vmatmul.bf16.gmra.mxu0 %v740
  %v1633 = vpop.f32.mrf.mxu0
  %v1634 = vadd.f32 %v1265, %v1633
  %v1635 = vpop.f32.mrf.mxu0
  %v1636 = vadd.f32 %v1267, %v1635
  %1637 = vmatmul.bf16.gmra.mxu0 %v742
  %v1638 = vpop.f32.mrf.mxu0
  %v1639 = vadd.f32 %v1270, %v1638
  %v1640 = vpop.f32.mrf.mxu0
  %v1641 = vadd.f32 %v1272, %v1640
  %1642 = vmatmul.bf16.gmra.mxu0 %v744
  %v1643 = vpop.f32.mrf.mxu0
  %v1644 = vadd.f32 %v1275, %v1643
  %v1645 = vpop.f32.mrf.mxu0
  %v1646 = vadd.f32 %v1277, %v1645
  %1647 = vmatmul.bf16.gmra.mxu0 %v746
  %v1648 = vpop.f32.mrf.mxu0
  %v1649 = vadd.f32 %v1280, %v1648
  %v1650 = vpop.f32.mrf.mxu0
  %v1651 = vadd.f32 %v1282, %v1650
  %1652 = vmatmul.bf16.gmra.mxu0 %v748
  %v1653 = vpop.f32.mrf.mxu0
  %v1654 = vadd.f32 %v1285, %v1653
  %v1655 = vpop.f32.mrf.mxu0
  %v1656 = vadd.f32 %v1287, %v1655
  %1657 = vmatmul.bf16.gmra.mxu0 %v750
  %v1658 = vpop.f32.mrf.mxu0
  %v1659 = vadd.f32 %v1290, %v1658
  %v1660 = vpop.f32.mrf.mxu0
  %v1661 = vadd.f32 %v1292, %v1660
  %1662 = vmatmul.bf16.gmra.mxu0 %v752
  %v1663 = vpop.f32.mrf.mxu0
  %v1664 = vadd.f32 %v1295, %v1663
  %v1665 = vpop.f32.mrf.mxu0
  %v1666 = vadd.f32 %v1297, %v1665
  %1667 = vmatmul.bf16.gmra.mxu0 %v754
  %v1668 = vpop.f32.mrf.mxu0
  %v1669 = vadd.f32 %v1300, %v1668
  %v1670 = vpop.f32.mrf.mxu0
  %v1671 = vadd.f32 %v1302, %v1670
  %1672 = vmatmul.bf16.gmra.mxu0 %v756
  %v1673 = vpop.f32.mrf.mxu0
  %v1674 = vadd.f32 %v1305, %v1673
  %v1675 = vpop.f32.mrf.mxu0
  %v1676 = vadd.f32 %v1307, %v1675
  %1677 = vmatmul.bf16.gmra.mxu0 %v758
  %v1678 = vpop.f32.mrf.mxu0
  %v1679 = vadd.f32 %v1310, %v1678
  %v1680 = vpop.f32.mrf.mxu0
  %v1681 = vadd.f32 %v1312, %v1680
  %1682 = vmatmul.bf16.gmra.mxu0 %v760
  %v1683 = vpop.f32.mrf.mxu0
  %v1684 = vadd.f32 %v1315, %v1683
  %v1685 = vpop.f32.mrf.mxu0
  %v1686 = vadd.f32 %v1317, %v1685
  %1687 = vmatmul.bf16.gmra.mxu0 %v762
  %v1688 = vpop.f32.mrf.mxu0
  %v1689 = vadd.f32 %v1320, %v1688
  %v1690 = vpop.f32.mrf.mxu0
  %v1691 = vadd.f32 %v1322, %v1690
  %1692 = vmatmul.bf16.gmra.mxu0 %v764
  %v1693 = vpop.f32.mrf.mxu0
  %v1694 = vadd.f32 %v1325, %v1693
  %v1695 = vpop.f32.mrf.mxu0
  %v1696 = vadd.f32 %v1327, %v1695
  %1697 = vmatmul.bf16.gmra.mxu0 %v766
  %v1698 = vpop.f32.mrf.mxu0
  %v1699 = vadd.f32 %v1330, %v1698
  %v1700 = vpop.f32.mrf.mxu0
  %v1701 = vadd.f32 %v1332, %v1700
  %1702 = vmatmul.bf16.gmra.mxu0 %v768
  %v1703 = vpop.f32.mrf.mxu0
  %v1704 = vadd.f32 %v1335, %v1703
  %v1705 = vpop.f32.mrf.mxu0
  %v1706 = vadd.f32 %v1337, %v1705
  %1707 = vmatmul.bf16.gmra.mxu0 %v770
  %v1708 = vpop.f32.mrf.mxu0
  %v1709 = vadd.f32 %v1340, %v1708
  %v1710 = vpop.f32.mrf.mxu0
  %v1711 = vadd.f32 %v1342, %v1710
  %1712 = vmatmul.bf16.gmra.mxu0 %v772
  %v1713 = vpop.f32.mrf.mxu0
  %v1714 = vadd.f32 %v1345, %v1713
  %v1715 = vpop.f32.mrf.mxu0
  %v1716 = vadd.f32 %v1347, %v1715
  %1717 = vmatmul.bf16.gmra.mxu0 %v774
  %v1718 = vpop.f32.mrf.mxu0
  %v1719 = vadd.f32 %v1350, %v1718
  %v1720 = vpop.f32.mrf.mxu0
  %v1721 = vadd.f32 %v1352, %v1720
  %1722 = vmatmul.bf16.gmra.mxu0 %v776
  %v1723 = vpop.f32.mrf.mxu0
  %v1724 = vadd.f32 %v1355, %v1723
  %v1725 = vpop.f32.mrf.mxu0
  %v1726 = vadd.f32 %v1357, %v1725
  %1727 = vmatmul.bf16.gmra.mxu0 %v778
  %v1728 = vpop.f32.mrf.mxu0
  %v1729 = vadd.f32 %v1360, %v1728
  %v1730 = vpop.f32.mrf.mxu0
  %v1731 = vadd.f32 %v1362, %v1730
  %1732 = vmatmul.bf16.gmra.mxu0 %v780
  %v1733 = vpop.f32.mrf.mxu0
  %v1734 = vadd.f32 %v1365, %v1733
  %v1735 = vpop.f32.mrf.mxu0
  %v1736 = vadd.f32 %v1367, %v1735
  %1737 = vmatmul.bf16.gmra.mxu0 %v782
  %v1738 = vpop.f32.mrf.mxu0
  %v1739 = vadd.f32 %v1370, %v1738
  %v1740 = vpop.f32.mrf.mxu0
  %v1741 = vadd.f32 %v1372, %v1740
  %1742 = vmatmul.bf16.gmra.mxu0 %v784
  %v1743 = vpop.f32.mrf.mxu0
  %v1744 = vadd.f32 %v1375, %v1743
  %v1745 = vpop.f32.mrf.mxu0
  %v1746 = vadd.f32 %v1377, %v1745
  %1747 = vmatmul.bf16.gmra.mxu0 %v786
  %v1748 = vpop.f32.mrf.mxu0
  %v1749 = vadd.f32 %v1380, %v1748
  %v1750 = vpop.f32.mrf.mxu0
  %v1751 = vadd.f32 %v1382, %v1750
  %1752 = vmatmul.bf16.gmra.mxu0 %v788
  %v1753 = vpop.f32.mrf.mxu0
  %v1754 = vadd.f32 %v1385, %v1753
  %v1755 = vpop.f32.mrf.mxu0
  %v1756 = vadd.f32 %v1387, %v1755
  %1757 = vmatmul.bf16.gmra.mxu0 %v790
  %v1758 = vpop.f32.mrf.mxu0
  %v1759 = vadd.f32 %v1390, %v1758
  %v1760 = vpop.f32.mrf.mxu0
  %v1761 = vadd.f32 %v1392, %v1760
  %1762 = vmatmul.bf16.gmra.mxu0 %v792
  %v1763 = vpop.f32.mrf.mxu0
  %v1764 = vadd.f32 %v1395, %v1763
  %v1765 = vpop.f32.mrf.mxu0
  %v1766 = vadd.f32 %v1397, %v1765
  %1767 = vmatmul.bf16.gmra.mxu0 %v794
  %v1768 = vpop.f32.mrf.mxu0
  %v1769 = vadd.f32 %v1400, %v1768
  %v1770 = vpop.f32.mrf.mxu0
  %v1771 = vadd.f32 %v1402, %v1770
  %1772 = vdwg.mxu0
  %v1773 = vmax.f32 %v1414, 0.0
  %v1774 = vmax.f32 %v1416, 0.0
  %v1775 = vmax.f32 %v1419, 0.0
  %v1776 = vmax.f32 %v1421, 0.0
  %v1777 = vmax.f32 %v1424, 0.0
  %v1778 = vmax.f32 %v1426, 0.0
  %v1779 = vmax.f32 %v1429, 0.0
  %v1780 = vmax.f32 %v1431, 0.0
  %v1781 = vmax.f32 %v1434, 0.0
  %v1782 = vmax.f32 %v1436, 0.0
  %v1783 = vmax.f32 %v1439, 0.0
  %v1784 = vmax.f32 %v1441, 0.0
  %v1785 = vmax.f32 %v1444, 0.0
  %v1786 = vmax.f32 %v1446, 0.0
  %v1787 = vmax.f32 %v1449, 0.0
  %v1788 = vmax.f32 %v1451, 0.0
  %v1789 = vmax.f32 %v1454, 0.0
  %v1790 = vmax.f32 %v1456, 0.0
  %v1791 = vmax.f32 %v1459, 0.0
  %v1792 = vmax.f32 %v1461, 0.0
  %v1793 = vmax.f32 %v1464, 0.0
  %v1794 = vmax.f32 %v1466, 0.0
  %v1795 = vmax.f32 %v1469, 0.0
  %v1796 = vmax.f32 %v1471, 0.0
  %v1797 = vmax.f32 %v1474, 0.0
  %v1798 = vmax.f32 %v1476, 0.0
  %v1799 = vmax.f32 %v1479, 0.0
  %v1800 = vmax.f32 %v1481, 0.0
  %v1801 = vmax.f32 %v1484, 0.0
  %v1802 = vmax.f32 %v1486, 0.0
  %v1803 = vmax.f32 %v1489, 0.0
  %v1804 = vmax.f32 %v1491, 0.0
  %v1805 = vmax.f32 %v1494, 0.0
  %v1806 = vmax.f32 %v1496, 0.0
  %v1807 = vmax.f32 %v1499, 0.0
  %v1808 = vmax.f32 %v1501, 0.0
  %v1809 = vmax.f32 %v1504, 0.0
  %v1810 = vmax.f32 %v1506, 0.0
  %v1811 = vmax.f32 %v1509, 0.0
  %v1812 = vmax.f32 %v1511, 0.0
  %v1813 = vmax.f32 %v1514, 0.0
  %v1814 = vmax.f32 %v1516, 0.0
  %v1815 = vmax.f32 %v1519, 0.0
  %v1816 = vmax.f32 %v1521, 0.0
  %v1817 = vmax.f32 %v1524, 0.0
  %v1818 = vmax.f32 %v1526, 0.0
  %v1819 = vmax.f32 %v1529, 0.0
  %v1820 = vmax.f32 %v1531, 0.0
  %v1821 = vmax.f32 %v1534, 0.0
  %v1822 = vmax.f32 %v1536, 0.0
  %v1823 = vmax.f32 %v1539, 0.0
  %v1824 = vmax.f32 %v1541, 0.0
  %v1825 = vmax.f32 %v1544, 0.0
  %v1826 = vmax.f32 %v1546, 0.0
  %v1827 = vmax.f32 %v1549, 0.0
  %v1828 = vmax.f32 %v1551, 0.0
  %v1829 = vmax.f32 %v1554, 0.0
  %v1830 = vmax.f32 %v1556, 0.0
  %v1831 = vmax.f32 %v1559, 0.0
  %v1832 = vmax.f32 %v1561, 0.0
  %v1833 = vmax.f32 %v1564, 0.0
  %v1834 = vmax.f32 %v1566, 0.0
  %v1835 = vmax.f32 %v1569, 0.0
  %v1836 = vmax.f32 %v1571, 0.0
  %v1837 = vmax.f32 %v1574, 0.0
  %v1838 = vmax.f32 %v1576, 0.0
  %v1839 = vmax.f32 %v1579, 0.0
  %v1840 = vmax.f32 %v1581, 0.0
  %v1841 = vmax.f32 %v1584, 0.0
  %v1842 = vmax.f32 %v1586, 0.0
  %v1843 = vmax.f32 %v1589, 0.0
  %v1844 = vmax.f32 %v1591, 0.0
  %v1845 = vmax.f32 %v1594, 0.0
  %v1846 = vmax.f32 %v1596, 0.0
  %v1847 = vmax.f32 %v1599, 0.0
  %v1848 = vmax.f32 %v1601, 0.0
  %v1849 = vmax.f32 %v1604, 0.0
  %v1850 = vmax.f32 %v1606, 0.0
  %v1851 = vmax.f32 %v1609, 0.0
  %v1852 = vmax.f32 %v1611, 0.0
  %v1853 = vmax.f32 %v1614, 0.0
  %v1854 = vmax.f32 %v1616, 0.0
  %v1855 = vmax.f32 %v1619, 0.0
  %v1856 = vmax.f32 %v1621, 0.0
  %v1857 = vmax.f32 %v1624, 0.0
  %v1858 = vmax.f32 %v1626, 0.0
  %v1859 = vmax.f32 %v1629, 0.0
  %v1860 = vmax.f32 %v1631, 0.0
  %v1861 = vmax.f32 %v1634, 0.0
  %v1862 = vmax.f32 %v1636, 0.0
  %v1863 = vmax.f32 %v1639, 0.0
  %v1864 = vmax.f32 %v1641, 0.0
  %v1865 = vmax.f32 %v1644, 0.0
  %v1866 = vmax.f32 %v1646, 0.0
  %v1867 = vmax.f32 %v1649, 0.0
  %v1868 = vmax.f32 %v1651, 0.0
  %v1869 = vmax.f32 %v1654, 0.0
  %v1870 = vmax.f32 %v1656, 0.0
  %v1871 = vmax.f32 %v1659, 0.0
  %v1872 = vmax.f32 %v1661, 0.0
  %v1873 = vmax.f32 %v1664, 0.0
  %v1874 = vmax.f32 %v1666, 0.0
  %v1875 = vmax.f32 %v1669, 0.0
  %v1876 = vmax.f32 %v1671, 0.0
  %v1877 = vmax.f32 %v1674, 0.0
  %v1878 = vmax.f32 %v1676, 0.0
  %v1879 = vmax.f32 %v1679, 0.0
  %v1880 = vmax.f32 %v1681, 0.0
  %v1881 = vmax.f32 %v1684, 0.0
  %v1882 = vmax.f32 %v1686, 0.0
  %v1883 = vmax.f32 %v1689, 0.0
  %v1884 = vmax.f32 %v1691, 0.0
  %v1885 = vmax.f32 %v1694, 0.0
  %v1886 = vmax.f32 %v1696, 0.0
  %v1887 = vmax.f32 %v1699, 0.0
  %v1888 = vmax.f32 %v1701, 0.0
  %v1889 = vmax.f32 %v1704, 0.0
  %v1890 = vmax.f32 %v1706, 0.0
  %v1891 = vmax.f32 %v1709, 0.0
  %v1892 = vmax.f32 %v1711, 0.0
  %v1893 = vmax.f32 %v1714, 0.0
  %v1894 = vmax.f32 %v1716, 0.0
  %v1895 = vmax.f32 %v1719, 0.0
  %v1896 = vmax.f32 %v1721, 0.0
  %v1897 = vmax.f32 %v1724, 0.0
  %v1898 = vmax.f32 %v1726, 0.0
  %v1899 = vmax.f32 %v1729, 0.0
  %v1900 = vmax.f32 %v1731, 0.0
  %v1901 = vmax.f32 %v1734, 0.0
  %v1902 = vmax.f32 %v1736, 0.0
  %v1903 = vmax.f32 %v1739, 0.0
  %v1904 = vmax.f32 %v1741, 0.0
  %v1905 = vmax.f32 %v1744, 0.0
  %v1906 = vmax.f32 %v1746, 0.0
  %v1907 = vmax.f32 %v1749, 0.0
  %v1908 = vmax.f32 %v1751, 0.0
  %v1909 = vmax.f32 %v1754, 0.0
  %v1910 = vmax.f32 %v1756, 0.0
  %v1911 = vmax.f32 %v1759, 0.0
  %v1912 = vmax.f32 %v1761, 0.0
  %v1913 = vmax.f32 %v1764, 0.0
  %v1914 = vmax.f32 %v1766, 0.0
  %v1915 = vmax.f32 %v1769, 0.0
  %v1916 = vmax.f32 %v1771, 0.0
  %v1917 = vpack.c.bf16 %v1773, %v1773
  %v1918 = vpack.c.bf16 %v1774, %v1774
  %v1919 = vpack.c.bf16 %v1775, %v1775
  %v1920 = vpack.c.bf16 %v1776, %v1776
  %v1921 = vpack.c.bf16 %v1777, %v1777
  %v1922 = vpack.c.bf16 %v1778, %v1778
  %v1923 = vpack.c.bf16 %v1779, %v1779
  %v1924 = vpack.c.bf16 %v1780, %v1780
  %v1925 = vpack.c.bf16 %v1781, %v1781
  %v1926 = vpack.c.bf16 %v1782, %v1782
  %v1927 = vpack.c.bf16 %v1783, %v1783
  %v1928 = vpack.c.bf16 %v1784, %v1784
  %v1929 = vpack.c.bf16 %v1785, %v1785
  %v1930 = vpack.c.bf16 %v1786, %v1786
  %v1931 = vpack.c.bf16 %v1787, %v1787
  %v1932 = vpack.c.bf16 %v1788, %v1788
  %v1933 = vpack.c.bf16 %v1789, %v1789
  %v1934 = vpack.c.bf16 %v1790, %v1790
  %v1935 = vpack.c.bf16 %v1791, %v1791
  %v1936 = vpack.c.bf16 %v1792, %v1792
  %v1937 = vpack.c.bf16 %v1793, %v1793
  %v1938 = vpack.c.bf16 %v1794, %v1794
  %v1939 = vpack.c.bf16 %v1795, %v1795
  %v1940 = vpack.c.bf16 %v1796, %v1796
  %v1941 = vpack.c.bf16 %v1797, %v1797
  %v1942 = vpack.c.bf16 %v1798, %v1798
  %v1943 = vpack.c.bf16 %v1799, %v1799
  %v1944 = vpack.c.bf16 %v1800, %v1800
  %v1945 = vpack.c.bf16 %v1801, %v1801
  %v1946 = vpack.c.bf16 %v1802, %v1802
  %v1947 = vpack.c.bf16 %v1803, %v1803
  %v1948 = vpack.c.bf16 %v1804, %v1804
  %v1949 = vpack.c.bf16 %v1805, %v1805
  %v1950 = vpack.c.bf16 %v1806, %v1806
  %v1951 = vpack.c.bf16 %v1807, %v1807
  %v1952 = vpack.c.bf16 %v1808, %v1808
  %v1953 = vpack.c.bf16 %v1809, %v1809
  %v1954 = vpack.c.bf16 %v1810, %v1810
  %v1955 = vpack.c.bf16 %v1811, %v1811
  %v1956 = vpack.c.bf16 %v1812, %v1812
  %v1957 = vpack.c.bf16 %v1813, %v1813
  %v1958 = vpack.c.bf16 %v1814, %v1814
  %v1959 = vpack.c.bf16 %v1815, %v1815
  %v1960 = vpack.c.bf16 %v1816, %v1816
  %v1961 = vpack.c.bf16 %v1817, %v1817
  %v1962 = vpack.c.bf16 %v1818, %v1818
  %v1963 = vpack.c.bf16 %v1819, %v1819
  %v1964 = vpack.c.bf16 %v1820, %v1820
  %v1965 = vpack.c.bf16 %v1821, %v1821
  %v1966 = vpack.c.bf16 %v1822, %v1822
  %v1967 = vpack.c.bf16 %v1823, %v1823
  %v1968 = vpack.c.bf16 %v1824, %v1824
  %v1969 = vpack.c.bf16 %v1825, %v1825
  %v1970 = vpack.c.bf16 %v1826, %v1826
  %v1971 = vpack.c.bf16 %v1827, %v1827
  %v1972 = vpack.c.bf16 %v1828, %v1828
  %v1973 = vpack.c.bf16 %v1829, %v1829
  %v1974 = vpack.c.bf16 %v1830, %v1830
  %v1975 = vpack.c.bf16 %v1831, %v1831
  %v1976 = vpack.c.bf16 %v1832, %v1832
  %v1977 = vpack.c.bf16 %v1833, %v1833
  %v1978 = vpack.c.bf16 %v1834, %v1834
  %v1979 = vpack.c.bf16 %v1835, %v1835
  %v1980 = vpack.c.bf16 %v1836, %v1836
  %v1981 = vpack.c.bf16 %v1837, %v1837
  %v1982 = vpack.c.bf16 %v1838, %v1838
  %v1983 = vpack.c.bf16 %v1839, %v1839
  %v1984 = vpack.c.bf16 %v1840, %v1840
  %v1985 = vpack.c.bf16 %v1841, %v1841
  %v1986 = vpack.c.bf16 %v1842, %v1842
  %v1987 = vpack.c.bf16 %v1843, %v1843
  %v1988 = vpack.c.bf16 %v1844, %v1844
  %v1989 = vpack.c.bf16 %v1845, %v1845
  %v1990 = vpack.c.bf16 %v1846, %v1846
  %v1991 = vpack.c.bf16 %v1847, %v1847
  %v1992 = vpack.c.bf16 %v1848, %v1848
  %v1993 = vpack.c.bf16 %v1849, %v1849
  %v1994 = vpack.c.bf16 %v1850, %v1850
  %v1995 = vpack.c.bf16 %v1851, %v1851
  %v1996 = vpack.c.bf16 %v1852, %v1852
  %v1997 = vpack.c.bf16 %v1853, %v1853
  %v1998 = vpack.c.bf16 %v1854, %v1854
  %v1999 = vpack.c.bf16 %v1855, %v1855
  %v2000 = vpack.c.bf16 %v1856, %v1856
  %v2001 = vpack.c.bf16 %v1857, %v1857
  %v2002 = vpack.c.bf16 %v1858, %v1858
  %v2003 = vpack.c.bf16 %v1859, %v1859
  %v2004 = vpack.c.bf16 %v1860, %v1860
  %v2005 = vpack.c.bf16 %v1861, %v1861
  %v2006 = vpack.c.bf16 %v1862, %v1862
  %v2007 = vpack.c.bf16 %v1863, %v1863
  %v2008 = vpack.c.bf16 %v1864, %v1864
  %v2009 = vpack.c.bf16 %v1865, %v1865
  %v2010 = vpack.c.bf16 %v1866, %v1866
  %v2011 = vpack.c.bf16 %v1867, %v1867
  %v2012 = vpack.c.bf16 %v1868, %v1868
  %v2013 = vpack.c.bf16 %v1869, %v1869
  %v2014 = vpack.c.bf16 %v1870, %v1870
  %v2015 = vpack.c.bf16 %v1871, %v1871
  %v2016 = vpack.c.bf16 %v1872, %v1872
  %v2017 = vpack.c.bf16 %v1873, %v1873
  %v2018 = vpack.c.bf16 %v1874, %v1874
  %v2019 = vpack.c.bf16 %v1875, %v1875
  %v2020 = vpack.c.bf16 %v1876, %v1876
  %v2021 = vpack.c.bf16 %v1877, %v1877
  %v2022 = vpack.c.bf16 %v1878, %v1878
  %v2023 = vpack.c.bf16 %v1879, %v1879
  %v2024 = vpack.c.bf16 %v1880, %v1880
  %v2025 = vpack.c.bf16 %v1881, %v1881
  %v2026 = vpack.c.bf16 %v1882, %v1882
  %v2027 = vpack.c.bf16 %v1883, %v1883
  %v2028 = vpack.c.bf16 %v1884, %v1884
  %v2029 = vpack.c.bf16 %v1885, %v1885
  %v2030 = vpack.c.bf16 %v1886, %v1886
  %v2031 = vpack.c.bf16 %v1887, %v1887
  %v2032 = vpack.c.bf16 %v1888, %v1888
  %v2033 = vpack.c.bf16 %v1889, %v1889
  %v2034 = vpack.c.bf16 %v1890, %v1890
  %v2035 = vpack.c.bf16 %v1891, %v1891
  %v2036 = vpack.c.bf16 %v1892, %v1892
  %v2037 = vpack.c.bf16 %v1893, %v1893
  %v2038 = vpack.c.bf16 %v1894, %v1894
  %v2039 = vpack.c.bf16 %v1895, %v1895
  %v2040 = vpack.c.bf16 %v1896, %v1896
  %v2041 = vpack.c.bf16 %v1897, %v1897
  %v2042 = vpack.c.bf16 %v1898, %v1898
  %v2043 = vpack.c.bf16 %v1899, %v1899
  %v2044 = vpack.c.bf16 %v1900, %v1900
  %v2045 = vpack.c.bf16 %v1901, %v1901
  %v2046 = vpack.c.bf16 %v1902, %v1902
  %v2047 = vpack.c.bf16 %v1903, %v1903
  %v2048 = vpack.c.bf16 %v1904, %v1904
  %v2049 = vpack.c.bf16 %v1905, %v1905
  %v2050 = vpack.c.bf16 %v1906, %v1906
  %v2051 = vpack.c.bf16 %v1907, %v1907
  %v2052 = vpack.c.bf16 %v1908, %v1908
  %v2053 = vpack.c.bf16 %v1909, %v1909
  %v2054 = vpack.c.bf16 %v1910, %v1910
  %v2055 = vpack.c.bf16 %v1911, %v1911
  %v2056 = vpack.c.bf16 %v1912, %v1912
  %v2057 = vpack.c.bf16 %v1913, %v1913
  %v2058 = vpack.c.bf16 %v1914, %v1914
  %v2059 = vpack.c.bf16 %v1915, %v1915
  %v2060 = vpack.c.bf16 %v1916, %v1916
  %v2086 = vunpack.c.l.b16 %v1918
  %v2087 = vunpack.c.l.b16 %v1920
  %v2088 = vunpack.c.l.b16 %v1922
  %v2089 = vunpack.c.l.b16 %v1924
  %v2090 = vunpack.c.l.b16 %v1926
  %v2091 = vunpack.c.l.b16 %v1942
  %v2092 = vunpack.c.l.b16 %v1944
  %v2093 = vunpack.c.l.b16 %v1946
  %v2094 = vunpack.c.l.b16 %v1948
  %v2095 = vunpack.c.l.b16 %v1950
  %v2096 = vunpack.c.l.b16 %v1966
  %v2097 = vunpack.c.l.b16 %v1968
  %v2098 = vunpack.c.l.b16 %v1970
  %v2099 = vunpack.c.l.b16 %v1972
  %v2100 = vunpack.c.l.b16 %v1974
  %v2101 = vunpack.c.l.b16 %v1990
  %v2102 = vunpack.c.l.b16 %v1992
  %v2103 = vunpack.c.l.b16 %v1994
  %v2104 = vunpack.c.l.b16 %v1996
  %v2105 = vunpack.c.l.b16 %v1998
  %v2106 = vunpack.c.l.b16 %v2014
  %v2107 = vunpack.c.l.b16 %v2016
  %v2108 = vunpack.c.l.b16 %v2018
  %v2109 = vunpack.c.l.b16 %v2020
  %v2110 = vunpack.c.l.b16 %v2022
  %v2111 = vpack.c.b16 %v2086, %v2086
  %v2112 = vpack.c.b16 %v2087, %v2087
  %v2113 = vpack.c.b16 %v2088, %v2088
  %v2114 = vpack.c.b16 %v2089, %v2089
  %v2115 = vpack.c.b16 %v2090, %v2090
  %v2116 = vpack.c.b16 %v2091, %v2091
  %v2117 = vpack.c.b16 %v2092, %v2092
  %v2118 = vpack.c.b16 %v2093, %v2093
  %v2119 = vpack.c.b16 %v2094, %v2094
  %v2120 = vpack.c.b16 %v2095, %v2095
  %v2121 = vpack.c.b16 %v2096, %v2096
  %v2122 = vpack.c.b16 %v2097, %v2097
  %v2123 = vpack.c.b16 %v2098, %v2098
  %v2124 = vpack.c.b16 %v2099, %v2099
  %v2125 = vpack.c.b16 %v2100, %v2100
  %v2126 = vpack.c.b16 %v2101, %v2101
  %v2127 = vpack.c.b16 %v2102, %v2102
  %v2128 = vpack.c.b16 %v2103, %v2103
  %v2129 = vpack.c.b16 %v2104, %v2104
  %v2130 = vpack.c.b16 %v2105, %v2105
  %v2131 = vpack.c.b16 %v2106, %v2106
  %v2132 = vpack.c.b16 %v2107, %v2107
  %v2133 = vpack.c.b16 %v2108, %v2108
  %v2134 = vpack.c.b16 %v2109, %v2109
  %v2135 = vpack.c.b16 %v2110, %v2110
  %2136 = vrot.lane.b32.xlu0 %v2111, 32
  %v2137 = vpop.permute.xlu0 %2136
  %2138 = vrot.lane.b32.xlu0 %v2112, 32
  %v2139 = vpop.permute.xlu0 %2138
  %2140 = vrot.lane.b32.xlu0 %v2113, 32
  %v2141 = vpop.permute.xlu0 %2140
  %2142 = vrot.lane.b32.xlu0 %v2114, 32
  %v2143 = vpop.permute.xlu0 %2142
  %2144 = vrot.lane.b32.xlu0 %v2115, 32
  %v2145 = vpop.permute.xlu0 %2144
  %2146 = vrot.lane.b32.xlu0 %v2116, 32
  %v2147 = vpop.permute.xlu0 %2146
  %2148 = vrot.lane.b32.xlu0 %v2117, 32
  %v2149 = vpop.permute.xlu0 %2148
  %2150 = vrot.lane.b32.xlu0 %v2118, 32
  %v2151 = vpop.permute.xlu0 %2150
  %2152 = vrot.lane.b32.xlu0 %v2119, 32
  %v2153 = vpop.permute.xlu0 %2152
  %2154 = vrot.lane.b32.xlu0 %v2120, 32
  %v2155 = vpop.permute.xlu0 %2154
  %2156 = vrot.lane.b32.xlu0 %v2121, 32
  %v2157 = vpop.permute.xlu0 %2156
  %2158 = vrot.lane.b32.xlu0 %v2122, 32
  %v2159 = vpop.permute.xlu0 %2158
  %2160 = vrot.lane.b32.xlu0 %v2123, 32
  %v2161 = vpop.permute.xlu0 %2160
  %2162 = vrot.lane.b32.xlu0 %v2124, 32
  %v2163 = vpop.permute.xlu0 %2162
  %2164 = vrot.lane.b32.xlu0 %v2125, 32
  %v2165 = vpop.permute.xlu0 %2164
  %2166 = vrot.lane.b32.xlu0 %v2126, 32
  %v2167 = vpop.permute.xlu0 %2166
  %2168 = vrot.lane.b32.xlu0 %v2127, 32
  %v2169 = vpop.permute.xlu0 %2168
  %2170 = vrot.lane.b32.xlu0 %v2128, 32
  %v2171 = vpop.permute.xlu0 %2170
  %2172 = vrot.lane.b32.xlu0 %v2129, 32
  %v2173 = vpop.permute.xlu0 %2172
  %2174 = vrot.lane.b32.xlu0 %v2130, 32
  %v2175 = vpop.permute.xlu0 %2174
  %2176 = vrot.lane.b32.xlu0 %v2131, 32
  %v2177 = vpop.permute.xlu0 %2176
  %2178 = vrot.lane.b32.xlu0 %v2132, 32
  %v2179 = vpop.permute.xlu0 %2178
  %2180 = vrot.lane.b32.xlu0 %v2133, 32
  %v2181 = vpop.permute.xlu0 %2180
  %2182 = vrot.lane.b32.xlu0 %v2134, 32
  %v2183 = vpop.permute.xlu0 %2182
  %2184 = vrot.lane.b32.xlu0 %v2135, 32
  %v2185 = vpop.permute.xlu0 %2184
  %v2211 = vunpack.c.l.b16 %v1919
  %v2212 = vunpack.c.l.b16 %v1921
  %v2213 = vunpack.c.l.b16 %v1923
  %v2214 = vunpack.c.l.b16 %v1925
  %v2215 = vunpack.c.l.b16 %v1927
  %v2216 = vunpack.c.l.b16 %v1943
  %v2217 = vunpack.c.l.b16 %v1945
  %v2218 = vunpack.c.l.b16 %v1947
  %v2219 = vunpack.c.l.b16 %v1949
  %v2220 = vunpack.c.l.b16 %v1951
  %v2221 = vunpack.c.l.b16 %v1967
  %v2222 = vunpack.c.l.b16 %v1969
  %v2223 = vunpack.c.l.b16 %v1971
  %v2224 = vunpack.c.l.b16 %v1973
  %v2225 = vunpack.c.l.b16 %v1975
  %v2226 = vunpack.c.l.b16 %v1991
  %v2227 = vunpack.c.l.b16 %v1993
  %v2228 = vunpack.c.l.b16 %v1995
  %v2229 = vunpack.c.l.b16 %v1997
  %v2230 = vunpack.c.l.b16 %v1999
  %v2231 = vunpack.c.l.b16 %v2015
  %v2232 = vunpack.c.l.b16 %v2017
  %v2233 = vunpack.c.l.b16 %v2019
  %v2234 = vunpack.c.l.b16 %v2021
  %v2235 = vunpack.c.l.b16 %v2023
  %v2236 = vpack.c.b16 %v2211, %v2211
  %v2237 = vpack.c.b16 %v2212, %v2212
  %v2238 = vpack.c.b16 %v2213, %v2213
  %v2239 = vpack.c.b16 %v2214, %v2214
  %v2240 = vpack.c.b16 %v2215, %v2215
  %v2241 = vpack.c.b16 %v2216, %v2216
  %v2242 = vpack.c.b16 %v2217, %v2217
  %v2243 = vpack.c.b16 %v2218, %v2218
  %v2244 = vpack.c.b16 %v2219, %v2219
  %v2245 = vpack.c.b16 %v2220, %v2220
  %v2246 = vpack.c.b16 %v2221, %v2221
  %v2247 = vpack.c.b16 %v2222, %v2222
  %v2248 = vpack.c.b16 %v2223, %v2223
  %v2249 = vpack.c.b16 %v2224, %v2224
  %v2250 = vpack.c.b16 %v2225, %v2225
  %v2251 = vpack.c.b16 %v2226, %v2226
  %v2252 = vpack.c.b16 %v2227, %v2227
  %v2253 = vpack.c.b16 %v2228, %v2228
  %v2254 = vpack.c.b16 %v2229, %v2229
  %v2255 = vpack.c.b16 %v2230, %v2230
  %v2256 = vpack.c.b16 %v2231, %v2231
  %v2257 = vpack.c.b16 %v2232, %v2232
  %v2258 = vpack.c.b16 %v2233, %v2233
  %v2259 = vpack.c.b16 %v2234, %v2234
  %v2260 = vpack.c.b16 %v2235, %v2235
  %2261 = vrot.lane.b32.xlu0 %v2236, 64
  %v2262 = vpop.permute.xlu0 %2261
  %2263 = vrot.lane.b32.xlu0 %v2237, 64
  %v2264 = vpop.permute.xlu0 %2263
  %2265 = vrot.lane.b32.xlu0 %v2238, 64
  %v2266 = vpop.permute.xlu0 %2265
  %2267 = vrot.lane.b32.xlu0 %v2239, 64
  %v2268 = vpop.permute.xlu0 %2267
  %2269 = vrot.lane.b32.xlu0 %v2240, 64
  %v2270 = vpop.permute.xlu0 %2269
  %2271 = vrot.lane.b32.xlu0 %v2241, 64
  %v2272 = vpop.permute.xlu0 %2271
  %2273 = vrot.lane.b32.xlu0 %v2242, 64
  %v2274 = vpop.permute.xlu0 %2273
  %2275 = vrot.lane.b32.xlu0 %v2243, 64
  %v2276 = vpop.permute.xlu0 %2275
  %2277 = vrot.lane.b32.xlu0 %v2244, 64
  %v2278 = vpop.permute.xlu0 %2277
  %2279 = vrot.lane.b32.xlu0 %v2245, 64
  %v2280 = vpop.permute.xlu0 %2279
  %2281 = vrot.lane.b32.xlu0 %v2246, 64
  %v2282 = vpop.permute.xlu0 %2281
  %2283 = vrot.lane.b32.xlu0 %v2247, 64
  %v2284 = vpop.permute.xlu0 %2283
  %2285 = vrot.lane.b32.xlu0 %v2248, 64
  %v2286 = vpop.permute.xlu0 %2285
  %2287 = vrot.lane.b32.xlu0 %v2249, 64
  %v2288 = vpop.permute.xlu0 %2287
  %2289 = vrot.lane.b32.xlu0 %v2250, 64
  %v2290 = vpop.permute.xlu0 %2289
  %2291 = vrot.lane.b32.xlu0 %v2251, 64
  %v2292 = vpop.permute.xlu0 %2291
  %2293 = vrot.lane.b32.xlu0 %v2252, 64
  %v2294 = vpop.permute.xlu0 %2293
  %2295 = vrot.lane.b32.xlu0 %v2253, 64
  %v2296 = vpop.permute.xlu0 %2295
  %2297 = vrot.lane.b32.xlu0 %v2254, 64
  %v2298 = vpop.permute.xlu0 %2297
  %2299 = vrot.lane.b32.xlu0 %v2255, 64
  %v2300 = vpop.permute.xlu0 %2299
  %2301 = vrot.lane.b32.xlu0 %v2256, 64
  %v2302 = vpop.permute.xlu0 %2301
  %2303 = vrot.lane.b32.xlu0 %v2257, 64
  %v2304 = vpop.permute.xlu0 %2303
  %2305 = vrot.lane.b32.xlu0 %v2258, 64
  %v2306 = vpop.permute.xlu0 %2305
  %2307 = vrot.lane.b32.xlu0 %v2259, 64
  %v2308 = vpop.permute.xlu0 %2307
  %2309 = vrot.lane.b32.xlu0 %v2260, 64
  %v2310 = vpop.permute.xlu0 %2309
  %v2316 = vunpack.c.l.b16 %v1928
  %v2317 = vunpack.c.l.b16 %v1952
  %v2318 = vunpack.c.l.b16 %v1976
  %v2319 = vunpack.c.l.b16 %v2000
  %v2320 = vunpack.c.l.b16 %v2024
  %v2321 = vpack.c.b16 %v2316, %v2316
  %v2322 = vpack.c.b16 %v2317, %v2317
  %v2323 = vpack.c.b16 %v2318, %v2318
  %v2324 = vpack.c.b16 %v2319, %v2319
  %v2325 = vpack.c.b16 %v2320, %v2320
  %2326 = vrot.lane.b32.xlu0 %v2112, 96
  %v2327 = vpop.permute.xlu0 %2326
  %2328 = vrot.lane.b32.xlu0 %v2113, 96
  %v2329 = vpop.permute.xlu0 %2328
  %2330 = vrot.lane.b32.xlu0 %v2114, 96
  %v2331 = vpop.permute.xlu0 %2330
  %2332 = vrot.lane.b32.xlu0 %v2115, 96
  %v2333 = vpop.permute.xlu0 %2332
  %2334 = vrot.lane.b32.xlu0 %v2321, 96
  %v2335 = vpop.permute.xlu0 %2334
  %2336 = vrot.lane.b32.xlu0 %v2117, 96
  %v2337 = vpop.permute.xlu0 %2336
  %2338 = vrot.lane.b32.xlu0 %v2118, 96
  %v2339 = vpop.permute.xlu0 %2338
  %2340 = vrot.lane.b32.xlu0 %v2119, 96
  %v2341 = vpop.permute.xlu0 %2340
  %2342 = vrot.lane.b32.xlu0 %v2120, 96
  %v2343 = vpop.permute.xlu0 %2342
  %2344 = vrot.lane.b32.xlu0 %v2322, 96
  %v2345 = vpop.permute.xlu0 %2344
  %2346 = vrot.lane.b32.xlu0 %v2122, 96
  %v2347 = vpop.permute.xlu0 %2346
  %2348 = vrot.lane.b32.xlu0 %v2123, 96
  %v2349 = vpop.permute.xlu0 %2348
  %2350 = vrot.lane.b32.xlu0 %v2124, 96
  %v2351 = vpop.permute.xlu0 %2350
  %2352 = vrot.lane.b32.xlu0 %v2125, 96
  %v2353 = vpop.permute.xlu0 %2352
  %2354 = vrot.lane.b32.xlu0 %v2323, 96
  %v2355 = vpop.permute.xlu0 %2354
  %2356 = vrot.lane.b32.xlu0 %v2127, 96
  %v2357 = vpop.permute.xlu0 %2356
  %2358 = vrot.lane.b32.xlu0 %v2128, 96
  %v2359 = vpop.permute.xlu0 %2358
  %2360 = vrot.lane.b32.xlu0 %v2129, 96
  %v2361 = vpop.permute.xlu0 %2360
  %2362 = vrot.lane.b32.xlu0 %v2130, 96
  %v2363 = vpop.permute.xlu0 %2362
  %2364 = vrot.lane.b32.xlu0 %v2324, 96
  %v2365 = vpop.permute.xlu0 %2364
  %2366 = vrot.lane.b32.xlu0 %v2132, 96
  %v2367 = vpop.permute.xlu0 %2366
  %2368 = vrot.lane.b32.xlu0 %v2133, 96
  %v2369 = vpop.permute.xlu0 %2368
  %2370 = vrot.lane.b32.xlu0 %v2134, 96
  %v2371 = vpop.permute.xlu0 %2370
  %2372 = vrot.lane.b32.xlu0 %v2135, 96
  %v2373 = vpop.permute.xlu0 %2372
  %2374 = vrot.lane.b32.xlu0 %v2325, 96
  %v2375 = vpop.permute.xlu0 %2374
  %v2401 = vunpack.c.l.b16 %v1930
  %v2402 = vunpack.c.l.b16 %v1932
  %v2403 = vunpack.c.l.b16 %v1934
  %v2404 = vunpack.c.l.b16 %v1936
  %v2405 = vunpack.c.l.b16 %v1938
  %v2406 = vunpack.c.l.b16 %v1954
  %v2407 = vunpack.c.l.b16 %v1956
  %v2408 = vunpack.c.l.b16 %v1958
  %v2409 = vunpack.c.l.b16 %v1960
  %v2410 = vunpack.c.l.b16 %v1962
  %v2411 = vunpack.c.l.b16 %v1978
  %v2412 = vunpack.c.l.b16 %v1980
  %v2413 = vunpack.c.l.b16 %v1982
  %v2414 = vunpack.c.l.b16 %v1984
  %v2415 = vunpack.c.l.b16 %v1986
  %v2416 = vunpack.c.l.b16 %v2002
  %v2417 = vunpack.c.l.b16 %v2004
  %v2418 = vunpack.c.l.b16 %v2006
  %v2419 = vunpack.c.l.b16 %v2008
  %v2420 = vunpack.c.l.b16 %v2010
  %v2421 = vunpack.c.l.b16 %v2026
  %v2422 = vunpack.c.l.b16 %v2028
  %v2423 = vunpack.c.l.b16 %v2030
  %v2424 = vunpack.c.l.b16 %v2032
  %v2425 = vunpack.c.l.b16 %v2034
  %v2426 = vpack.c.b16 %v2401, %v2401
  %v2427 = vpack.c.b16 %v2402, %v2402
  %v2428 = vpack.c.b16 %v2403, %v2403
  %v2429 = vpack.c.b16 %v2404, %v2404
  %v2430 = vpack.c.b16 %v2405, %v2405
  %v2431 = vpack.c.b16 %v2406, %v2406
  %v2432 = vpack.c.b16 %v2407, %v2407
  %v2433 = vpack.c.b16 %v2408, %v2408
  %v2434 = vpack.c.b16 %v2409, %v2409
  %v2435 = vpack.c.b16 %v2410, %v2410
  %v2436 = vpack.c.b16 %v2411, %v2411
  %v2437 = vpack.c.b16 %v2412, %v2412
  %v2438 = vpack.c.b16 %v2413, %v2413
  %v2439 = vpack.c.b16 %v2414, %v2414
  %v2440 = vpack.c.b16 %v2415, %v2415
  %v2441 = vpack.c.b16 %v2416, %v2416
  %v2442 = vpack.c.b16 %v2417, %v2417
  %v2443 = vpack.c.b16 %v2418, %v2418
  %v2444 = vpack.c.b16 %v2419, %v2419
  %v2445 = vpack.c.b16 %v2420, %v2420
  %v2446 = vpack.c.b16 %v2421, %v2421
  %v2447 = vpack.c.b16 %v2422, %v2422
  %v2448 = vpack.c.b16 %v2423, %v2423
  %v2449 = vpack.c.b16 %v2424, %v2424
  %v2450 = vpack.c.b16 %v2425, %v2425
  %2451 = vrot.lane.b32.xlu0 %v2426, 32
  %v2452 = vpop.permute.xlu0 %2451
  %2453 = vrot.lane.b32.xlu0 %v2427, 32
  %v2454 = vpop.permute.xlu0 %2453
  %2455 = vrot.lane.b32.xlu0 %v2428, 32
  %v2456 = vpop.permute.xlu0 %2455
  %2457 = vrot.lane.b32.xlu0 %v2429, 32
  %v2458 = vpop.permute.xlu0 %2457
  %2459 = vrot.lane.b32.xlu0 %v2430, 32
  %v2460 = vpop.permute.xlu0 %2459
  %2461 = vrot.lane.b32.xlu0 %v2431, 32
  %v2462 = vpop.permute.xlu0 %2461
  %2463 = vrot.lane.b32.xlu0 %v2432, 32
  %v2464 = vpop.permute.xlu0 %2463
  %2465 = vrot.lane.b32.xlu0 %v2433, 32
  %v2466 = vpop.permute.xlu0 %2465
  %2467 = vrot.lane.b32.xlu0 %v2434, 32
  %v2468 = vpop.permute.xlu0 %2467
  %2469 = vrot.lane.b32.xlu0 %v2435, 32
  %v2470 = vpop.permute.xlu0 %2469
  %2471 = vrot.lane.b32.xlu0 %v2436, 32
  %v2472 = vpop.permute.xlu0 %2471
  %2473 = vrot.lane.b32.xlu0 %v2437, 32
  %v2474 = vpop.permute.xlu0 %2473
  %2475 = vrot.lane.b32.xlu0 %v2438, 32
  %v2476 = vpop.permute.xlu0 %2475
  %2477 = vrot.lane.b32.xlu0 %v2439, 32
  %v2478 = vpop.permute.xlu0 %2477
  %2479 = vrot.lane.b32.xlu0 %v2440, 32
  %v2480 = vpop.permute.xlu0 %2479
  %2481 = vrot.lane.b32.xlu0 %v2441, 32
  %v2482 = vpop.permute.xlu0 %2481
  %2483 = vrot.lane.b32.xlu0 %v2442, 32
  %v2484 = vpop.permute.xlu0 %2483
  %2485 = vrot.lane.b32.xlu0 %v2443, 32
  %v2486 = vpop.permute.xlu0 %2485
  %2487 = vrot.lane.b32.xlu0 %v2444, 32
  %v2488 = vpop.permute.xlu0 %2487
  %2489 = vrot.lane.b32.xlu0 %v2445, 32
  %v2490 = vpop.permute.xlu0 %2489
  %2491 = vrot.lane.b32.xlu0 %v2446, 32
  %v2492 = vpop.permute.xlu0 %2491
  %2493 = vrot.lane.b32.xlu0 %v2447, 32
  %v2494 = vpop.permute.xlu0 %2493
  %2495 = vrot.lane.b32.xlu0 %v2448, 32
  %v2496 = vpop.permute.xlu0 %2495
  %2497 = vrot.lane.b32.xlu0 %v2449, 32
  %v2498 = vpop.permute.xlu0 %2497
  %2499 = vrot.lane.b32.xlu0 %v2450, 32
  %v2500 = vpop.permute.xlu0 %2499
  %v2526 = vunpack.c.l.b16 %v1931
  %v2527 = vunpack.c.l.b16 %v1933
  %v2528 = vunpack.c.l.b16 %v1935
  %v2529 = vunpack.c.l.b16 %v1937
  %v2530 = vunpack.c.l.b16 %v1939
  %v2531 = vunpack.c.l.b16 %v1955
  %v2532 = vunpack.c.l.b16 %v1957
  %v2533 = vunpack.c.l.b16 %v1959
  %v2534 = vunpack.c.l.b16 %v1961
  %v2535 = vunpack.c.l.b16 %v1963
  %v2536 = vunpack.c.l.b16 %v1979
  %v2537 = vunpack.c.l.b16 %v1981
  %v2538 = vunpack.c.l.b16 %v1983
  %v2539 = vunpack.c.l.b16 %v1985
  %v2540 = vunpack.c.l.b16 %v1987
  %v2541 = vunpack.c.l.b16 %v2003
  %v2542 = vunpack.c.l.b16 %v2005
  %v2543 = vunpack.c.l.b16 %v2007
  %v2544 = vunpack.c.l.b16 %v2009
  %v2545 = vunpack.c.l.b16 %v2011
  %v2546 = vunpack.c.l.b16 %v2027
  %v2547 = vunpack.c.l.b16 %v2029
  %v2548 = vunpack.c.l.b16 %v2031
  %v2549 = vunpack.c.l.b16 %v2033
  %v2550 = vunpack.c.l.b16 %v2035
  %v2551 = vpack.c.b16 %v2526, %v2526
  %v2552 = vpack.c.b16 %v2527, %v2527
  %v2553 = vpack.c.b16 %v2528, %v2528
  %v2554 = vpack.c.b16 %v2529, %v2529
  %v2555 = vpack.c.b16 %v2530, %v2530
  %v2556 = vpack.c.b16 %v2531, %v2531
  %v2557 = vpack.c.b16 %v2532, %v2532
  %v2558 = vpack.c.b16 %v2533, %v2533
  %v2559 = vpack.c.b16 %v2534, %v2534
  %v2560 = vpack.c.b16 %v2535, %v2535
  %v2561 = vpack.c.b16 %v2536, %v2536
  %v2562 = vpack.c.b16 %v2537, %v2537
  %v2563 = vpack.c.b16 %v2538, %v2538
  %v2564 = vpack.c.b16 %v2539, %v2539
  %v2565 = vpack.c.b16 %v2540, %v2540
  %v2566 = vpack.c.b16 %v2541, %v2541
  %v2567 = vpack.c.b16 %v2542, %v2542
  %v2568 = vpack.c.b16 %v2543, %v2543
  %v2569 = vpack.c.b16 %v2544, %v2544
  %v2570 = vpack.c.b16 %v2545, %v2545
  %v2571 = vpack.c.b16 %v2546, %v2546
  %v2572 = vpack.c.b16 %v2547, %v2547
  %v2573 = vpack.c.b16 %v2548, %v2548
  %v2574 = vpack.c.b16 %v2549, %v2549
  %v2575 = vpack.c.b16 %v2550, %v2550
  %2576 = vrot.lane.b32.xlu0 %v2551, 64
  %v2577 = vpop.permute.xlu0 %2576
  %2578 = vrot.lane.b32.xlu0 %v2552, 64
  %v2579 = vpop.permute.xlu0 %2578
  %2580 = vrot.lane.b32.xlu0 %v2553, 64
  %v2581 = vpop.permute.xlu0 %2580
  %2582 = vrot.lane.b32.xlu0 %v2554, 64
  %v2583 = vpop.permute.xlu0 %2582
  %2584 = vrot.lane.b32.xlu0 %v2555, 64
  %v2585 = vpop.permute.xlu0 %2584
  %2586 = vrot.lane.b32.xlu0 %v2556, 64
  %v2587 = vpop.permute.xlu0 %2586
  %2588 = vrot.lane.b32.xlu0 %v2557, 64
  %v2589 = vpop.permute.xlu0 %2588
  %2590 = vrot.lane.b32.xlu0 %v2558, 64
  %v2591 = vpop.permute.xlu0 %2590
  %2592 = vrot.lane.b32.xlu0 %v2559, 64
  %v2593 = vpop.permute.xlu0 %2592
  %2594 = vrot.lane.b32.xlu0 %v2560, 64
  %v2595 = vpop.permute.xlu0 %2594
  %2596 = vrot.lane.b32.xlu0 %v2561, 64
  %v2597 = vpop.permute.xlu0 %2596
  %2598 = vrot.lane.b32.xlu0 %v2562, 64
  %v2599 = vpop.permute.xlu0 %2598
  %2600 = vrot.lane.b32.xlu0 %v2563, 64
  %v2601 = vpop.permute.xlu0 %2600
  %2602 = vrot.lane.b32.xlu0 %v2564, 64
  %v2603 = vpop.permute.xlu0 %2602
  %2604 = vrot.lane.b32.xlu0 %v2565, 64
  %v2605 = vpop.permute.xlu0 %2604
  %2606 = vrot.lane.b32.xlu0 %v2566, 64
  %v2607 = vpop.permute.xlu0 %2606
  %2608 = vrot.lane.b32.xlu0 %v2567, 64
  %v2609 = vpop.permute.xlu0 %2608
  %2610 = vrot.lane.b32.xlu0 %v2568, 64
  %v2611 = vpop.permute.xlu0 %2610
  %2612 = vrot.lane.b32.xlu0 %v2569, 64
  %v2613 = vpop.permute.xlu0 %2612
  %2614 = vrot.lane.b32.xlu0 %v2570, 64
  %v2615 = vpop.permute.xlu0 %2614
  %2616 = vrot.lane.b32.xlu0 %v2571, 64
  %v2617 = vpop.permute.xlu0 %2616
  %2618 = vrot.lane.b32.xlu0 %v2572, 64
  %v2619 = vpop.permute.xlu0 %2618
  %2620 = vrot.lane.b32.xlu0 %v2573, 64
  %v2621 = vpop.permute.xlu0 %2620
  %2622 = vrot.lane.b32.xlu0 %v2574, 64
  %v2623 = vpop.permute.xlu0 %2622
  %2624 = vrot.lane.b32.xlu0 %v2575, 64
  %v2625 = vpop.permute.xlu0 %2624
  %v2631 = vunpack.c.l.b16 %v1940
  %v2632 = vunpack.c.l.b16 %v1964
  %v2633 = vunpack.c.l.b16 %v1988
  %v2634 = vunpack.c.l.b16 %v2012
  %v2635 = vunpack.c.l.b16 %v2036
  %v2636 = vpack.c.b16 %v2631, %v2631
  %v2637 = vpack.c.b16 %v2632, %v2632
  %v2638 = vpack.c.b16 %v2633, %v2633
  %v2639 = vpack.c.b16 %v2634, %v2634
  %v2640 = vpack.c.b16 %v2635, %v2635
  %2641 = vrot.lane.b32.xlu0 %v2427, 96
  %v2642 = vpop.permute.xlu0 %2641
  %2643 = vrot.lane.b32.xlu0 %v2428, 96
  %v2644 = vpop.permute.xlu0 %2643
  %2645 = vrot.lane.b32.xlu0 %v2429, 96
  %v2646 = vpop.permute.xlu0 %2645
  %2647 = vrot.lane.b32.xlu0 %v2430, 96
  %v2648 = vpop.permute.xlu0 %2647
  %2649 = vrot.lane.b32.xlu0 %v2636, 96
  %v2650 = vpop.permute.xlu0 %2649
  %2651 = vrot.lane.b32.xlu0 %v2432, 96
  %v2652 = vpop.permute.xlu0 %2651
  %2653 = vrot.lane.b32.xlu0 %v2433, 96
  %v2654 = vpop.permute.xlu0 %2653
  %2655 = vrot.lane.b32.xlu0 %v2434, 96
  %v2656 = vpop.permute.xlu0 %2655
  %2657 = vrot.lane.b32.xlu0 %v2435, 96
  %v2658 = vpop.permute.xlu0 %2657
  %2659 = vrot.lane.b32.xlu0 %v2637, 96
  %v2660 = vpop.permute.xlu0 %2659
  %2661 = vrot.lane.b32.xlu0 %v2437, 96
  %v2662 = vpop.permute.xlu0 %2661
  %2663 = vrot.lane.b32.xlu0 %v2438, 96
  %v2664 = vpop.permute.xlu0 %2663
  %2665 = vrot.lane.b32.xlu0 %v2439, 96
  %v2666 = vpop.permute.xlu0 %2665
  %2667 = vrot.lane.b32.xlu0 %v2440, 96
  %v2668 = vpop.permute.xlu0 %2667
  %2669 = vrot.lane.b32.xlu0 %v2638, 96
  %v2670 = vpop.permute.xlu0 %2669
  %2671 = vrot.lane.b32.xlu0 %v2442, 96
  %v2672 = vpop.permute.xlu0 %2671
  %2673 = vrot.lane.b32.xlu0 %v2443, 96
  %v2674 = vpop.permute.xlu0 %2673
  %2675 = vrot.lane.b32.xlu0 %v2444, 96
  %v2676 = vpop.permute.xlu0 %2675
  %2677 = vrot.lane.b32.xlu0 %v2445, 96
  %v2678 = vpop.permute.xlu0 %2677
  %2679 = vrot.lane.b32.xlu0 %v2639, 96
  %v2680 = vpop.permute.xlu0 %2679
  %2681 = vrot.lane.b32.xlu0 %v2447, 96
  %v2682 = vpop.permute.xlu0 %2681
  %2683 = vrot.lane.b32.xlu0 %v2448, 96
  %v2684 = vpop.permute.xlu0 %2683
  %2685 = vrot.lane.b32.xlu0 %v2449, 96
  %v2686 = vpop.permute.xlu0 %2685
  %2687 = vrot.lane.b32.xlu0 %v2450, 96
  %v2688 = vpop.permute.xlu0 %2687
  %2689 = vrot.lane.b32.xlu0 %v2640, 96
  %v2690 = vpop.permute.xlu0 %2689
  %v2696 = vunpack.c.l.b16 %v2038
  %v2697 = vunpack.c.l.b16 %v2040
  %v2698 = vunpack.c.l.b16 %v2042
  %v2699 = vunpack.c.l.b16 %v2044
  %v2700 = vunpack.c.l.b16 %v2046
  %v2701 = vpack.c.b16 %v2696, %v2696
  %v2702 = vpack.c.b16 %v2697, %v2697
  %v2703 = vpack.c.b16 %v2698, %v2698
  %v2704 = vpack.c.b16 %v2699, %v2699
  %v2705 = vpack.c.b16 %v2700, %v2700
  %2706 = vrot.lane.b32.xlu0 %v2701, 32
  %v2707 = vpop.permute.xlu0 %2706
  %2708 = vrot.lane.b32.xlu0 %v2702, 32
  %v2709 = vpop.permute.xlu0 %2708
  %2710 = vrot.lane.b32.xlu0 %v2703, 32
  %v2711 = vpop.permute.xlu0 %2710
  %2712 = vrot.lane.b32.xlu0 %v2704, 32
  %v2713 = vpop.permute.xlu0 %2712
  %2714 = vrot.lane.b32.xlu0 %v2705, 32
  %v2715 = vpop.permute.xlu0 %2714
  %v2721 = vunpack.c.l.b16 %v2039
  %v2722 = vunpack.c.l.b16 %v2041
  %v2723 = vunpack.c.l.b16 %v2043
  %v2724 = vunpack.c.l.b16 %v2045
  %v2725 = vunpack.c.l.b16 %v2047
  %v2726 = vpack.c.b16 %v2721, %v2721
  %v2727 = vpack.c.b16 %v2722, %v2722
  %v2728 = vpack.c.b16 %v2723, %v2723
  %v2729 = vpack.c.b16 %v2724, %v2724
  %v2730 = vpack.c.b16 %v2725, %v2725
  %2731 = vrot.lane.b32.xlu0 %v2726, 64
  %v2732 = vpop.permute.xlu0 %2731
  %2733 = vrot.lane.b32.xlu0 %v2727, 64
  %v2734 = vpop.permute.xlu0 %2733
  %2735 = vrot.lane.b32.xlu0 %v2728, 64
  %v2736 = vpop.permute.xlu0 %2735
  %2737 = vrot.lane.b32.xlu0 %v2729, 64
  %v2738 = vpop.permute.xlu0 %2737
  %2739 = vrot.lane.b32.xlu0 %v2730, 64
  %v2740 = vpop.permute.xlu0 %2739
  %v2742 = vunpack.c.l.b16 %v2048
  %v2743 = vpack.c.b16 %v2742, %v2742
  %2744 = vrot.lane.b32.xlu0 %v2702, 96
  %v2745 = vpop.permute.xlu0 %2744
  %2746 = vrot.lane.b32.xlu0 %v2703, 96
  %v2747 = vpop.permute.xlu0 %2746
  %2748 = vrot.lane.b32.xlu0 %v2704, 96
  %v2749 = vpop.permute.xlu0 %2748
  %2750 = vrot.lane.b32.xlu0 %v2705, 96
  %v2751 = vpop.permute.xlu0 %2750
  %2752 = vrot.lane.b32.xlu0 %v2743, 96
  %v2753 = vpop.permute.xlu0 %2752
  %v2759 = vunpack.c.l.b16 %v2050
  %v2760 = vunpack.c.l.b16 %v2052
  %v2761 = vunpack.c.l.b16 %v2054
  %v2762 = vunpack.c.l.b16 %v2056
  %v2763 = vunpack.c.l.b16 %v2058
  %v2764 = vpack.c.b16 %v2759, %v2759
  %v2765 = vpack.c.b16 %v2760, %v2760
  %v2766 = vpack.c.b16 %v2761, %v2761
  %v2767 = vpack.c.b16 %v2762, %v2762
  %v2768 = vpack.c.b16 %v2763, %v2763
  %2769 = vrot.lane.b32.xlu0 %v2764, 32
  %v2770 = vpop.permute.xlu0 %2769
  %2771 = vrot.lane.b32.xlu0 %v2765, 32
  %v2772 = vpop.permute.xlu0 %2771
  %2773 = vrot.lane.b32.xlu0 %v2766, 32
  %v2774 = vpop.permute.xlu0 %2773
  %2775 = vrot.lane.b32.xlu0 %v2767, 32
  %v2776 = vpop.permute.xlu0 %2775
  %2777 = vrot.lane.b32.xlu0 %v2768, 32
  %v2778 = vpop.permute.xlu0 %2777
  %v2784 = vunpack.c.l.b16 %v2051
  %v2785 = vunpack.c.l.b16 %v2053
  %v2786 = vunpack.c.l.b16 %v2055
  %v2787 = vunpack.c.l.b16 %v2057
  %v2788 = vunpack.c.l.b16 %v2059
  %v2789 = vpack.c.b16 %v2784, %v2784
  %v2790 = vpack.c.b16 %v2785, %v2785
  %v2791 = vpack.c.b16 %v2786, %v2786
  %v2792 = vpack.c.b16 %v2787, %v2787
  %v2793 = vpack.c.b16 %v2788, %v2788
  %2794 = vrot.lane.b32.xlu0 %v2789, 64
  %v2795 = vpop.permute.xlu0 %2794
  %2796 = vrot.lane.b32.xlu0 %v2790, 64
  %v2797 = vpop.permute.xlu0 %2796
  %2798 = vrot.lane.b32.xlu0 %v2791, 64
  %v2799 = vpop.permute.xlu0 %2798
  %2800 = vrot.lane.b32.xlu0 %v2792, 64
  %v2801 = vpop.permute.xlu0 %2800
  %2802 = vrot.lane.b32.xlu0 %v2793, 64
  %v2803 = vpop.permute.xlu0 %2802
  %v2805 = vunpack.c.l.b16 %v2060
  %v2806 = vpack.c.b16 %v2805, %v2805
  %2807 = vrot.lane.b32.xlu0 %v2765, 96
  %v2808 = vpop.permute.xlu0 %2807
  %2809 = vrot.lane.b32.xlu0 %v2766, 96
  %v2810 = vpop.permute.xlu0 %2809
  %2811 = vrot.lane.b32.xlu0 %v2767, 96
  %v2812 = vpop.permute.xlu0 %2811
  %2813 = vrot.lane.b32.xlu0 %v2768, 96
  %v2814 = vpop.permute.xlu0 %2813
  %2815 = vrot.lane.b32.xlu0 %v2806, 96
  %v2816 = vpop.permute.xlu0 %2815
  %vm2817 = vcmask 261120
  %v2820 = vsel %vm2817, %v1917, %v2137
  %v2823 = vsel %vm2817, %v1919, %v2139
  %v2826 = vsel %vm2817, %v1921, %v2141
  %v2829 = vsel %vm2817, %v1923, %v2143
  %v2832 = vsel %vm2817, %v1925, %v2145
  %v2835 = vsel %vm2817, %v1941, %v2147
  %v2838 = vsel %vm2817, %v1943, %v2149
  %v2841 = vsel %vm2817, %v1945, %v2151
  %v2844 = vsel %vm2817, %v1947, %v2153
  %v2847 = vsel %vm2817, %v1949, %v2155
  %v2850 = vsel %vm2817, %v1965, %v2157
  %v2853 = vsel %vm2817, %v1967, %v2159
  %v2856 = vsel %vm2817, %v1969, %v2161
  %v2859 = vsel %vm2817, %v1971, %v2163
  %v2862 = vsel %vm2817, %v1973, %v2165
  %v2865 = vsel %vm2817, %v1989, %v2167
  %v2868 = vsel %vm2817, %v1991, %v2169
  %v2871 = vsel %vm2817, %v1993, %v2171
  %v2874 = vsel %vm2817, %v1995, %v2173
  %v2877 = vsel %vm2817, %v1997, %v2175
  %v2880 = vsel %vm2817, %v2013, %v2177
  %v2883 = vsel %vm2817, %v2015, %v2179
  %v2886 = vsel %vm2817, %v2017, %v2181
  %v2889 = vsel %vm2817, %v2019, %v2183
  %v2892 = vsel %vm2817, %v2021, %v2185
  %vm2893 = vcmask 523264
  %v2895 = vsel %vm2893, %v2820, %v2262
  %v2897 = vsel %vm2893, %v2823, %v2264
  %v2899 = vsel %vm2893, %v2826, %v2266
  %v2901 = vsel %vm2893, %v2829, %v2268
  %v2903 = vsel %vm2893, %v2832, %v2270
  %v2905 = vsel %vm2893, %v2835, %v2272
  %v2907 = vsel %vm2893, %v2838, %v2274
  %v2909 = vsel %vm2893, %v2841, %v2276
  %v2911 = vsel %vm2893, %v2844, %v2278
  %v2913 = vsel %vm2893, %v2847, %v2280
  %v2915 = vsel %vm2893, %v2850, %v2282
  %v2917 = vsel %vm2893, %v2853, %v2284
  %v2919 = vsel %vm2893, %v2856, %v2286
  %v2921 = vsel %vm2893, %v2859, %v2288
  %v2923 = vsel %vm2893, %v2862, %v2290
  %v2925 = vsel %vm2893, %v2865, %v2292
  %v2927 = vsel %vm2893, %v2868, %v2294
  %v2929 = vsel %vm2893, %v2871, %v2296
  %v2931 = vsel %vm2893, %v2874, %v2298
  %v2933 = vsel %vm2893, %v2877, %v2300
  %v2935 = vsel %vm2893, %v2880, %v2302
  %v2937 = vsel %vm2893, %v2883, %v2304
  %v2939 = vsel %vm2893, %v2886, %v2306
  %v2941 = vsel %vm2893, %v2889, %v2308
  %v2943 = vsel %vm2893, %v2892, %v2310
  %vm2944 = vcmask 785408
  %v2946 = vsel %vm2944, %v2895, %v2327
  %v2948 = vsel %vm2944, %v2897, %v2329
  %v2950 = vsel %vm2944, %v2899, %v2331
  %v2952 = vsel %vm2944, %v2901, %v2333
  %v2954 = vsel %vm2944, %v2903, %v2335
  %v2956 = vsel %vm2944, %v2905, %v2337
  %v2958 = vsel %vm2944, %v2907, %v2339
  %v2960 = vsel %vm2944, %v2909, %v2341
  %v2962 = vsel %vm2944, %v2911, %v2343
  %v2964 = vsel %vm2944, %v2913, %v2345
  %v2966 = vsel %vm2944, %v2915, %v2347
  %v2968 = vsel %vm2944, %v2917, %v2349
  %v2970 = vsel %vm2944, %v2919, %v2351
  %v2972 = vsel %vm2944, %v2921, %v2353
  %v2974 = vsel %vm2944, %v2923, %v2355
  %v2976 = vsel %vm2944, %v2925, %v2357
  %v2978 = vsel %vm2944, %v2927, %v2359
  %v2980 = vsel %vm2944, %v2929, %v2361
  %v2982 = vsel %vm2944, %v2931, %v2363
  %v2984 = vsel %vm2944, %v2933, %v2365
  %v2986 = vsel %vm2944, %v2935, %v2367
  %v2988 = vsel %vm2944, %v2937, %v2369
  %v2990 = vsel %vm2944, %v2939, %v2371
  %v2992 = vsel %vm2944, %v2941, %v2373
  %v2994 = vsel %vm2944, %v2943, %v2375
  %v2997 = vsel %vm2817, %v1929, %v2452
  %v3000 = vsel %vm2817, %v1931, %v2454
  %v3003 = vsel %vm2817, %v1933, %v2456
  %v3006 = vsel %vm2817, %v1935, %v2458
  %v3009 = vsel %vm2817, %v1937, %v2460
  %v3012 = vsel %vm2817, %v1953, %v2462
  %v3015 = vsel %vm2817, %v1955, %v2464
  %v3018 = vsel %vm2817, %v1957, %v2466
  %v3021 = vsel %vm2817, %v1959, %v2468
  %v3024 = vsel %vm2817, %v1961, %v2470
  %v3027 = vsel %vm2817, %v1977, %v2472
  %v3030 = vsel %vm2817, %v1979, %v2474
  %v3033 = vsel %vm2817, %v1981, %v2476
  %v3036 = vsel %vm2817, %v1983, %v2478
  %v3039 = vsel %vm2817, %v1985, %v2480
  %v3042 = vsel %vm2817, %v2001, %v2482
  %v3045 = vsel %vm2817, %v2003, %v2484
  %v3048 = vsel %vm2817, %v2005, %v2486
  %v3051 = vsel %vm2817, %v2007, %v2488
  %v3054 = vsel %vm2817, %v2009, %v2490
  %v3057 = vsel %vm2817, %v2025, %v2492
  %v3060 = vsel %vm2817, %v2027, %v2494
  %v3063 = vsel %vm2817, %v2029, %v2496
  %v3066 = vsel %vm2817, %v2031, %v2498
  %v3069 = vsel %vm2817, %v2033, %v2500
  %v3071 = vsel %vm2893, %v2997, %v2577
  %v3073 = vsel %vm2893, %v3000, %v2579
  %v3075 = vsel %vm2893, %v3003, %v2581
  %v3077 = vsel %vm2893, %v3006, %v2583
  %v3079 = vsel %vm2893, %v3009, %v2585
  %v3081 = vsel %vm2893, %v3012, %v2587
  %v3083 = vsel %vm2893, %v3015, %v2589
  %v3085 = vsel %vm2893, %v3018, %v2591
  %v3087 = vsel %vm2893, %v3021, %v2593
  %v3089 = vsel %vm2893, %v3024, %v2595
  %v3091 = vsel %vm2893, %v3027, %v2597
  %v3093 = vsel %vm2893, %v3030, %v2599
  %v3095 = vsel %vm2893, %v3033, %v2601
  %v3097 = vsel %vm2893, %v3036, %v2603
  %v3099 = vsel %vm2893, %v3039, %v2605
  %v3101 = vsel %vm2893, %v3042, %v2607
  %v3103 = vsel %vm2893, %v3045, %v2609
  %v3105 = vsel %vm2893, %v3048, %v2611
  %v3107 = vsel %vm2893, %v3051, %v2613
  %v3109 = vsel %vm2893, %v3054, %v2615
  %v3111 = vsel %vm2893, %v3057, %v2617
  %v3113 = vsel %vm2893, %v3060, %v2619
  %v3115 = vsel %vm2893, %v3063, %v2621
  %v3117 = vsel %vm2893, %v3066, %v2623
  %v3119 = vsel %vm2893, %v3069, %v2625
  %v3121 = vsel %vm2944, %v3071, %v2642
  %v3123 = vsel %vm2944, %v3073, %v2644
  %v3125 = vsel %vm2944, %v3075, %v2646
  %v3127 = vsel %vm2944, %v3077, %v2648
  %v3129 = vsel %vm2944, %v3079, %v2650
  %v3131 = vsel %vm2944, %v3081, %v2652
  %v3133 = vsel %vm2944, %v3083, %v2654
  %v3135 = vsel %vm2944, %v3085, %v2656
  %v3137 = vsel %vm2944, %v3087, %v2658
  %v3139 = vsel %vm2944, %v3089, %v2660
  %v3141 = vsel %vm2944, %v3091, %v2662
  %v3143 = vsel %vm2944, %v3093, %v2664
  %v3145 = vsel %vm2944, %v3095, %v2666
  %v3147 = vsel %vm2944, %v3097, %v2668
  %v3149 = vsel %vm2944, %v3099, %v2670
  %v3151 = vsel %vm2944, %v3101, %v2672
  %v3153 = vsel %vm2944, %v3103, %v2674
  %v3155 = vsel %vm2944, %v3105, %v2676
  %v3157 = vsel %vm2944, %v3107, %v2678
  %v3159 = vsel %vm2944, %v3109, %v2680
  %v3161 = vsel %vm2944, %v3111, %v2682
  %v3163 = vsel %vm2944, %v3113, %v2684
  %v3165 = vsel %vm2944, %v3115, %v2686
  %v3167 = vsel %vm2944, %v3117, %v2688
  %v3169 = vsel %vm2944, %v3119, %v2690
  %v3172 = vsel %vm2817, %v2037, %v2707
  %v3175 = vsel %vm2817, %v2039, %v2709
  %v3178 = vsel %vm2817, %v2041, %v2711
  %v3181 = vsel %vm2817, %v2043, %v2713
  %v3184 = vsel %vm2817, %v2045, %v2715
  %v3186 = vsel %vm2893, %v3172, %v2732
  %v3188 = vsel %vm2893, %v3175, %v2734
  %v3190 = vsel %vm2893, %v3178, %v2736
  %v3192 = vsel %vm2893, %v3181, %v2738
  %v3194 = vsel %vm2893, %v3184, %v2740
  %v3196 = vsel %vm2944, %v3186, %v2745
  %v3198 = vsel %vm2944, %v3188, %v2747
  %v3200 = vsel %vm2944, %v3190, %v2749
  %v3202 = vsel %vm2944, %v3192, %v2751
  %v3204 = vsel %vm2944, %v3194, %v2753
  %v3207 = vsel %vm2817, %v2049, %v2770
  %v3210 = vsel %vm2817, %v2051, %v2772
  %v3213 = vsel %vm2817, %v2053, %v2774
  %v3216 = vsel %vm2817, %v2055, %v2776
  %v3219 = vsel %vm2817, %v2057, %v2778
  %v3221 = vsel %vm2893, %v3207, %v2795
  %v3223 = vsel %vm2893, %v3210, %v2797
  %v3225 = vsel %vm2893, %v3213, %v2799
  %v3227 = vsel %vm2893, %v3216, %v2801
  %v3229 = vsel %vm2893, %v3219, %v2803
  %v3231 = vsel %vm2944, %v3221, %v2808
  %v3233 = vsel %vm2944, %v3223, %v2810
  %v3235 = vsel %vm2944, %v3225, %v2812
  %v3237 = vsel %vm2944, %v3227, %v2814
  %v3239 = vsel %vm2944, %v3229, %v2816
  %v3300 = vunpack.c.l.b16 %v2946
  %v3301 = vunpack.c.l.b16 %v3121
  %v3302 = vunpack.c.l.b16 %v2956
  %v3303 = vunpack.c.l.b16 %v3131
  %v3304 = vunpack.c.l.b16 %v2948
  %v3305 = vunpack.c.l.b16 %v3123
  %v3306 = vunpack.c.l.b16 %v2958
  %v3307 = vunpack.c.l.b16 %v3133
  %v3308 = vunpack.c.l.b16 %v2950
  %v3309 = vunpack.c.l.b16 %v3125
  %v3310 = vunpack.c.l.b16 %v2960
  %v3311 = vunpack.c.l.b16 %v3135
  %v3312 = vunpack.c.l.b16 %v2952
  %v3313 = vunpack.c.l.b16 %v3127
  %v3314 = vunpack.c.l.b16 %v2962
  %v3315 = vunpack.c.l.b16 %v3137
  %v3316 = vunpack.c.l.b16 %v2954
  %v3317 = vunpack.c.l.b16 %v3129
  %v3318 = vunpack.c.l.b16 %v2964
  %v3319 = vunpack.c.l.b16 %v3139
  %v3320 = vunpack.c.l.b16 %v2966
  %v3321 = vunpack.c.l.b16 %v3141
  %v3322 = vunpack.c.l.b16 %v2968
  %v3323 = vunpack.c.l.b16 %v3143
  %v3324 = vunpack.c.l.b16 %v2970
  %v3325 = vunpack.c.l.b16 %v3145
  %v3326 = vunpack.c.l.b16 %v2972
  %v3327 = vunpack.c.l.b16 %v3147
  %v3328 = vunpack.c.l.b16 %v2974
  %v3329 = vunpack.c.l.b16 %v3149
  %v3330 = vunpack.c.l.b16 %v2976
  %v3331 = vunpack.c.l.b16 %v3151
  %v3332 = vunpack.c.l.b16 %v2978
  %v3333 = vunpack.c.l.b16 %v3153
  %v3334 = vunpack.c.l.b16 %v2980
  %v3335 = vunpack.c.l.b16 %v3155
  %v3336 = vunpack.c.l.b16 %v2982
  %v3337 = vunpack.c.l.b16 %v3157
  %v3338 = vunpack.c.l.b16 %v2984
  %v3339 = vunpack.c.l.b16 %v3159
  %v3340 = vunpack.c.l.b16 %v2986
  %v3341 = vunpack.c.l.b16 %v3161
  %v3342 = vunpack.c.l.b16 %v2988
  %v3343 = vunpack.c.l.b16 %v3163
  %v3344 = vunpack.c.l.b16 %v2990
  %v3345 = vunpack.c.l.b16 %v3165
  %v3346 = vunpack.c.l.b16 %v2992
  %v3347 = vunpack.c.l.b16 %v3167
  %v3348 = vunpack.c.l.b16 %v2994
  %v3349 = vunpack.c.l.b16 %v3169
  %v3350 = vunpack.c.l.b16 %v3196
  %v3351 = vunpack.c.l.b16 %v3231
  %v3352 = vunpack.c.l.b16 %v3198
  %v3353 = vunpack.c.l.b16 %v3233
  %v3354 = vunpack.c.l.b16 %v3200
  %v3355 = vunpack.c.l.b16 %v3235
  %v3356 = vunpack.c.l.b16 %v3202
  %v3357 = vunpack.c.l.b16 %v3237
  %v3358 = vunpack.c.l.b16 %v3204
  %v3359 = vunpack.c.l.b16 %v3239
  %v3360 = vld [vmem:[%s3] sm:$0xf]
  %v3361 = vld [vmem:[%s3 + $0x4] sm:$0xf]
  %v3362 = vld [vmem:[%s3 + $0x8] sm:$0xf]
  %v3363 = vld [vmem:[%s3 + $0xc] sm:$0xf]
  %v3364 = vld [vmem:[%s3 + $0x10] sm:$0xf]
  %v3365 = vld [vmem:[%s3 + $0x14] sm:$0xf]
  %v3366 = vld [vmem:[%s3 + $0x18] sm:$0xf]
  %v3367 = vld [vmem:[%s3 + $0x1c] sm:$0xf]
  %v3368 = vld [vmem:[%s3 + $0x20] sm:$0xf]
  %v3369 = vld [vmem:[%s3 + $0x24] sm:$0xf]
  %v3370 = vld [vmem:[%s3 + $0x28] sm:$0xf]
  %v3371 = vld [vmem:[%s3 + $0x2c] sm:$0xf]
  %v3372 = vld [vmem:[%s3 + $0x30] sm:$0xf]
  %v3373 = vld [vmem:[%s3 + $0x34] sm:$0xf]
  %v3374 = vld [vmem:[%s3 + $0x38] sm:$0xf]
  %v3375 = vld [vmem:[%s3 + $0x3c] sm:$0xf]
  %v3376 = vld [vmem:[%s3 + $0x40] sm:$0xf]
  %v3377 = vld [vmem:[%s3 + $0x44] sm:$0xf]
  %v3378 = vld [vmem:[%s3 + $0x48] sm:$0xf]
  %v3379 = vld [vmem:[%s3 + $0x4c] sm:$0xf]
  %v3380 = vld [vmem:[%s3 + $0x50] sm:$0xf]
  %v3381 = vld [vmem:[%s3 + $0x54] sm:$0xf]
  %v3382 = vld [vmem:[%s3 + $0x58] sm:$0xf]
  %v3383 = vld [vmem:[%s3 + $0x5c] sm:$0xf]
  %v3384 = vld [vmem:[%s3 + $0x60] sm:$0xf]
  %v3385 = vld [vmem:[%s3 + $0x64] sm:$0xf]
  %v3386 = vld [vmem:[%s3 + $0x68] sm:$0xf]
  %v3387 = vld [vmem:[%s3 + $0x6c] sm:$0xf]
  %v3388 = vld [vmem:[%s3 + $0x70] sm:$0xf]
  %v3389 = vld [vmem:[%s3 + $0x74] sm:$0xf]
  %v3390 = vld [vmem:[%s3 + $0x78] sm:$0xf]
  %v3391 = vld [vmem:[%s3 + $0x7c] sm:$0xf]
  %v3392 = vld [vmem:[%s3 + $0x80] sm:$0xf]
  %v3393 = vld [vmem:[%s3 + $0x84] sm:$0xf]
  %v3394 = vld [vmem:[%s3 + $0x88] sm:$0xf]
  %v3395 = vld [vmem:[%s3 + $0x8c] sm:$0xf]
  %v3396 = vld [vmem:[%s3 + $0x90] sm:$0xf]
  %v3397 = vld [vmem:[%s3 + $0x94] sm:$0xf]
  %v3398 = vld [vmem:[%s3 + $0x98] sm:$0xf]
  %v3399 = vld [vmem:[%s3 + $0x9c] sm:$0xf]
  %v3400 = vld [vmem:[%s3 + $0xa0] sm:$0xf]
  %v3401 = vld [vmem:[%s3 + $0xa4] sm:$0xf]
  %v3402 = vld [vmem:[%s3 + $0xa8] sm:$0xf]
  %v3403 = vld [vmem:[%s3 + $0xac] sm:$0xf]
  %v3404 = vld [vmem:[%s3 + $0xb0] sm:$0xf]
  %v3405 = vld [vmem:[%s3 + $0xb4] sm:$0xf]
  %v3406 = vld [vmem:[%s3 + $0xb8] sm:$0xf]
  %v3407 = vld [vmem:[%s3 + $0xbc] sm:$0xf]
  %v3408 = vld [vmem:[%s3 + $0xc0] sm:$0xf]
  %v3409 = vld [vmem:[%s3 + $0xc4] sm:$0xf]
  %v3410 = vld [vmem:[%s3 + $0xc8] sm:$0xf]
  %v3411 = vld [vmem:[%s3 + $0xcc] sm:$0xf]
  %v3412 = vld [vmem:[%s3 + $0xd0] sm:$0xf]
  %v3413 = vld [vmem:[%s3 + $0xd4] sm:$0xf]
  %v3414 = vld [vmem:[%s3 + $0xd8] sm:$0xf]
  %v3415 = vld [vmem:[%s3 + $0xdc] sm:$0xf]
  %v3416 = vld [vmem:[%s3 + $0xe0] sm:$0xf]
  %v3417 = vld [vmem:[%s3 + $0xe4] sm:$0xf]
  %v3418 = vld [vmem:[%s3 + $0xe8] sm:$0xf]
  %v3419 = vld [vmem:[%s3 + $0xec] sm:$0xf]
  %v3420 = vld [vmem:[%s3 + $0xf0] sm:$0xf]
  %v3421 = vld [vmem:[%s3 + $0xf4] sm:$0xf]
  %v3422 = vld [vmem:[%s3 + $0xf8] sm:$0xf]
  %v3423 = vld [vmem:[%s3 + $0xfc] sm:$0xf]
  %v3424 = vld [vmem:[%s4] sm:$0x1]
  %v3426 = vperm.slane %v3424, 0
  %v3428 = vpack.c.b16 %v3304, %v3300
  %v3429 = vpack.c.b16 %v3305, %v3301
  %v3430 = vpack.c.b16 %v3306, %v3302
  %v3431 = vpack.c.b16 %v3307, %v3303
  %v3432 = vpack.c.b16 %v3312, %v3308
  %v3433 = vpack.c.b16 %v3313, %v3309
  %v3434 = vpack.c.b16 %v3314, %v3310
  %v3435 = vpack.c.b16 %v3315, %v3311
  %v3436 = vpack.c.b16 %v3302, %v3316
  %v3437 = vpack.c.b16 %v3303, %v3317
  %v3438 = vpack.c.b16 %v3320, %v3318
  %v3439 = vpack.c.b16 %v3321, %v3319
  %v3440 = vpack.c.b16 %v3310, %v3306
  %v3441 = vpack.c.b16 %v3311, %v3307
  %v3442 = vpack.c.b16 %v3324, %v3322
  %v3443 = vpack.c.b16 %v3325, %v3323
  %v3444 = vpack.c.b16 %v3318, %v3314
  %v3445 = vpack.c.b16 %v3319, %v3315
  %v3446 = vpack.c.b16 %v3328, %v3326
  %v3447 = vpack.c.b16 %v3329, %v3327
  %v3448 = vpack.c.b16 %v3322, %v3320
  %v3449 = vpack.c.b16 %v3323, %v3321
  %v3450 = vpack.c.b16 %v3332, %v3330
  %v3451 = vpack.c.b16 %v3333, %v3331
  %v3452 = vpack.c.b16 %v3326, %v3324
  %v3453 = vpack.c.b16 %v3327, %v3325
  %v3454 = vpack.c.b16 %v3336, %v3334
  %v3455 = vpack.c.b16 %v3337, %v3335
  %v3456 = vpack.c.b16 %v3330, %v3328
  %v3457 = vpack.c.b16 %v3331, %v3329
  %v3458 = vpack.c.b16 %v3340, %v3338
  %v3459 = vpack.c.b16 %v3341, %v3339
  %v3460 = vpack.c.b16 %v3334, %v3332
  %v3461 = vpack.c.b16 %v3335, %v3333
  %v3462 = vpack.c.b16 %v3344, %v3342
  %v3463 = vpack.c.b16 %v3345, %v3343
  %v3464 = vpack.c.b16 %v3338, %v3336
  %v3465 = vpack.c.b16 %v3339, %v3337
  %v3466 = vpack.c.b16 %v3348, %v3346
  %v3467 = vpack.c.b16 %v3349, %v3347
  %v3468 = vpack.c.b16 %v3342, %v3340
  %v3469 = vpack.c.b16 %v3343, %v3341
  %v3470 = vpack.c.b16 %v3352, %v3350
  %v3471 = vpack.c.b16 %v3353, %v3351
  %v3472 = vpack.c.b16 %v3346, %v3344
  %v3473 = vpack.c.b16 %v3347, %v3345
  %v3474 = vpack.c.b16 %v3356, %v3354
  %v3475 = vpack.c.b16 %v3357, %v3355
  %v3476 = vpack.c.b16 %v3348, %v3348
  %v3477 = vpack.c.b16 %v3349, %v3349
  %v3478 = vpack.c.b16 %v3358, %v3358
  %v3479 = vpack.c.b16 %v3359, %v3359
  %v3596 = vunpack.c.l.b16 %v3360
  %v3597 = vunpack.c.l.b16 %v3361
  %v3598 = vunpack.c.l.b16 %v3362
  %v3599 = vunpack.c.l.b16 %v3363
  %v3600 = vunpack.c.l.b16 %v3364
  %v3601 = vunpack.c.l.b16 %v3365
  %v3602 = vunpack.c.l.b16 %v3366
  %v3603 = vunpack.c.l.b16 %v3367
  %v3604 = vunpack.c.l.b16 %v3368
  %v3605 = vunpack.c.l.b16 %v3369
  %v3606 = vunpack.c.l.b16 %v3370
  %v3607 = vunpack.c.l.b16 %v3371
  %v3608 = vunpack.c.l.b16 %v3372
  %v3609 = vunpack.c.l.b16 %v3373
  %v3610 = vunpack.c.l.b16 %v3374
  %v3611 = vunpack.c.l.b16 %v3375
  %v3612 = vunpack.c.l.b16 %v3376
  %v3613 = vunpack.c.l.b16 %v3377
  %v3614 = vunpack.c.l.b16 %v3378
  %v3615 = vunpack.c.l.b16 %v3379
  %v3616 = vunpack.c.l.b16 %v3380
  %v3617 = vunpack.c.l.b16 %v3381
  %v3618 = vunpack.c.l.b16 %v3382
  %v3619 = vunpack.c.l.b16 %v3383
  %v3620 = vunpack.c.l.b16 %v3384
  %v3621 = vunpack.c.l.b16 %v3385
  %v3622 = vunpack.c.l.b16 %v3386
  %v3623 = vunpack.c.l.b16 %v3387
  %v3624 = vunpack.c.l.b16 %v3388
  %v3625 = vunpack.c.l.b16 %v3389
  %v3626 = vunpack.c.l.b16 %v3390
  %v3627 = vunpack.c.l.b16 %v3391
  %v3628 = vunpack.c.l.b16 %v3392
  %v3629 = vunpack.c.l.b16 %v3393
  %v3630 = vunpack.c.l.b16 %v3394
  %v3631 = vunpack.c.l.b16 %v3395
  %v3632 = vunpack.c.l.b16 %v3396
  %v3633 = vunpack.c.l.b16 %v3397
  %v3634 = vunpack.c.l.b16 %v3398
  %v3635 = vunpack.c.l.b16 %v3399
  %v3636 = vunpack.c.l.b16 %v3400
  %v3637 = vunpack.c.l.b16 %v3401
  %v3638 = vunpack.c.l.b16 %v3402
  %v3639 = vunpack.c.l.b16 %v3403
  %v3640 = vunpack.c.l.b16 %v3404
  %v3641 = vunpack.c.l.b16 %v3405
  %v3642 = vunpack.c.l.b16 %v3406
  %v3643 = vunpack.c.l.b16 %v3407
  %v3644 = vunpack.c.l.b16 %v3408
  %v3645 = vunpack.c.l.b16 %v3409
  %v3646 = vunpack.c.l.b16 %v3410
  %v3647 = vunpack.c.l.b16 %v3411
  %v3648 = vunpack.c.l.b16 %v3412
  %v3649 = vunpack.c.l.b16 %v3413
  %v3650 = vunpack.c.l.b16 %v3414
  %v3651 = vunpack.c.l.b16 %v3415
  %v3652 = vunpack.c.l.b16 %v3416
  %v3653 = vunpack.c.l.b16 %v3417
  %v3654 = vunpack.c.l.b16 %v3418
  %v3655 = vunpack.c.l.b16 %v3419
  %v3656 = vunpack.c.l.b16 %v3420
  %v3657 = vunpack.c.l.b16 %v3421
  %v3658 = vunpack.c.l.b16 %v3422
  %v3659 = vunpack.c.l.b16 %v3423
  %v3660 = vpack.c.b16 %v3597, %v3596
  %v3661 = vpack.c.b16 %v3599, %v3598
  %v3662 = vpack.c.b16 %v3601, %v3600
  %v3663 = vpack.c.b16 %v3603, %v3602
  %v3664 = vpack.c.b16 %v3605, %v3604
  %v3665 = vpack.c.b16 %v3607, %v3606
  %v3666 = vpack.c.b16 %v3609, %v3608
  %v3667 = vpack.c.b16 %v3611, %v3610
  %v3668 = vpack.c.b16 %v3613, %v3612
  %v3669 = vpack.c.b16 %v3615, %v3614
  %v3670 = vpack.c.b16 %v3617, %v3616
  %v3671 = vpack.c.b16 %v3619, %v3618
  %v3672 = vpack.c.b16 %v3621, %v3620
  %v3673 = vpack.c.b16 %v3623, %v3622
  %v3674 = vpack.c.b16 %v3625, %v3624
  %v3675 = vpack.c.b16 %v3627, %v3626
  %v3676 = vpack.c.b16 %v3629, %v3628
  %v3677 = vpack.c.b16 %v3631, %v3630
  %v3678 = vpack.c.b16 %v3633, %v3632
  %v3679 = vpack.c.b16 %v3635, %v3634
  %v3680 = vpack.c.b16 %v3637, %v3636
  %v3681 = vpack.c.b16 %v3639, %v3638
  %v3682 = vpack.c.b16 %v3641, %v3640
  %v3683 = vpack.c.b16 %v3643, %v3642
  %v3684 = vpack.c.b16 %v3645, %v3644
  %v3685 = vpack.c.b16 %v3647, %v3646
  %v3686 = vpack.c.b16 %v3649, %v3648
  %v3687 = vpack.c.b16 %v3651, %v3650
  %v3688 = vpack.c.b16 %v3653, %v3652
  %v3689 = vpack.c.b16 %v3655, %v3654
  %v3690 = vpack.c.b16 %v3657, %v3656
  %v3691 = vpack.c.b16 %v3659, %v3658
  %3724 = vmatpush.bf16.msra.mxu0 %v3667
  %3725 = vmatpush.bf16.msra.mxu0 %v3666
  %3726 = vmatpush.bf16.msra.mxu0 %v3665
  %3727 = vmatpush.bf16.msra.mxu0 %v3664
  %3728 = vmatpush.bf16.msra.mxu0 %v3663
  %3729 = vmatpush.bf16.msra.mxu0 %v3662
  %3730 = vmatpush.bf16.msra.mxu0 %v3661
  %3731 = vmatpush.bf16.msra.mxu0 %v3660
  %3732 = vmatmul.bf16.gmra.mxu0 %v3428
  %v3733 = vpop.f32.mrf.mxu0
  %v3734 = vadd.f32 %v3426, %v3733
  %v3735 = vpop.f32.mrf.mxu0
  %v3736 = vadd.f32 %v3426, %v3735
  %3737 = vmatmul.bf16.gmra.mxu0 %v3432
  %v3738 = vpop.f32.mrf.mxu0
  %v3739 = vadd.f32 %v3426, %v3738
  %v3740 = vpop.f32.mrf.mxu0
  %v3741 = vadd.f32 %v3426, %v3740
  %3742 = vmatmul.bf16.gmra.mxu0 %v3436
  %v3743 = vpop.f32.mrf.mxu0
  %v3744 = vadd.f32 %v3426, %v3743
  %v3745 = vpop.f32.mrf.mxu0
  %v3746 = vadd.f32 %v3426, %v3745
  %3747 = vmatmul.bf16.gmra.mxu0 %v3440
  %v3748 = vpop.f32.mrf.mxu0
  %v3749 = vadd.f32 %v3426, %v3748
  %v3750 = vpop.f32.mrf.mxu0
  %v3751 = vadd.f32 %v3426, %v3750
  %3752 = vmatmul.bf16.gmra.mxu0 %v3444
  %v3753 = vpop.f32.mrf.mxu0
  %v3754 = vadd.f32 %v3426, %v3753
  %v3755 = vpop.f32.mrf.mxu0
  %v3756 = vadd.f32 %v3426, %v3755
  %3757 = vmatmul.bf16.gmra.mxu0 %v3448
  %v3758 = vpop.f32.mrf.mxu0
  %v3759 = vadd.f32 %v3426, %v3758
  %v3760 = vpop.f32.mrf.mxu0
  %v3761 = vadd.f32 %v3426, %v3760
  %3762 = vmatmul.bf16.gmra.mxu0 %v3452
  %v3763 = vpop.f32.mrf.mxu0
  %v3764 = vadd.f32 %v3426, %v3763
  %v3765 = vpop.f32.mrf.mxu0
  %v3766 = vadd.f32 %v3426, %v3765
  %3767 = vmatmul.bf16.gmra.mxu0 %v3456
  %v3768 = vpop.f32.mrf.mxu0
  %v3769 = vadd.f32 %v3426, %v3768
  %v3770 = vpop.f32.mrf.mxu0
  %v3771 = vadd.f32 %v3426, %v3770
  %3772 = vmatmul.bf16.gmra.mxu0 %v3460
  %v3773 = vpop.f32.mrf.mxu0
  %v3774 = vadd.f32 %v3426, %v3773
  %v3775 = vpop.f32.mrf.mxu0
  %v3776 = vadd.f32 %v3426, %v3775
  %3777 = vmatmul.bf16.gmra.mxu0 %v3464
  %v3778 = vpop.f32.mrf.mxu0
  %v3779 = vadd.f32 %v3426, %v3778
  %v3780 = vpop.f32.mrf.mxu0
  %v3781 = vadd.f32 %v3426, %v3780
  %3782 = vmatmul.bf16.gmra.mxu0 %v3468
  %v3783 = vpop.f32.mrf.mxu0
  %v3784 = vadd.f32 %v3426, %v3783
  %v3785 = vpop.f32.mrf.mxu0
  %v3786 = vadd.f32 %v3426, %v3785
  %3787 = vmatmul.bf16.gmra.mxu0 %v3472
  %v3788 = vpop.f32.mrf.mxu0
  %v3789 = vadd.f32 %v3426, %v3788
  %v3790 = vpop.f32.mrf.mxu0
  %v3791 = vadd.f32 %v3426, %v3790
  %3792 = vmatmul.bf16.gmra.mxu0 %v3476
  %v3793 = vpop.f32.mrf.mxu0
  %v3794 = vadd.f32 %v3426, %v3793
  %v3795 = vpop.f32.mrf.mxu0
  %3796 = vdwg.mxu0
  %3797 = vmatpush.bf16.msra.mxu0 %v3675
  %3798 = vmatpush.bf16.msra.mxu0 %v3674
  %3799 = vmatpush.bf16.msra.mxu0 %v3673
  %3800 = vmatpush.bf16.msra.mxu0 %v3672
  %3801 = vmatpush.bf16.msra.mxu0 %v3671
  %3802 = vmatpush.bf16.msra.mxu0 %v3670
  %3803 = vmatpush.bf16.msra.mxu0 %v3669
  %3804 = vmatpush.bf16.msra.mxu0 %v3668
  %3805 = vmatmul.bf16.gmra.mxu0 %v3429
  %v3806 = vpop.f32.mrf.mxu0
  %v3807 = vadd.f32 %v3734, %v3806
  %v3808 = vpop.f32.mrf.mxu0
  %v3809 = vadd.f32 %v3736, %v3808
  %3810 = vmatmul.bf16.gmra.mxu0 %v3433
  %v3811 = vpop.f32.mrf.mxu0
  %v3812 = vadd.f32 %v3739, %v3811
  %v3813 = vpop.f32.mrf.mxu0
  %v3814 = vadd.f32 %v3741, %v3813
  %3815 = vmatmul.bf16.gmra.mxu0 %v3437
  %v3816 = vpop.f32.mrf.mxu0
  %v3817 = vadd.f32 %v3744, %v3816
  %v3818 = vpop.f32.mrf.mxu0
  %v3819 = vadd.f32 %v3746, %v3818
  %3820 = vmatmul.bf16.gmra.mxu0 %v3441
  %v3821 = vpop.f32.mrf.mxu0
  %v3822 = vadd.f32 %v3749, %v3821
  %v3823 = vpop.f32.mrf.mxu0
  %v3824 = vadd.f32 %v3751, %v3823
  %3825 = vmatmul.bf16.gmra.mxu0 %v3445
  %v3826 = vpop.f32.mrf.mxu0
  %v3827 = vadd.f32 %v3754, %v3826
  %v3828 = vpop.f32.mrf.mxu0
  %v3829 = vadd.f32 %v3756, %v3828
  %3830 = vmatmul.bf16.gmra.mxu0 %v3449
  %v3831 = vpop.f32.mrf.mxu0
  %v3832 = vadd.f32 %v3759, %v3831
  %v3833 = vpop.f32.mrf.mxu0
  %v3834 = vadd.f32 %v3761, %v3833
  %3835 = vmatmul.bf16.gmra.mxu0 %v3453
  %v3836 = vpop.f32.mrf.mxu0
  %v3837 = vadd.f32 %v3764, %v3836
  %v3838 = vpop.f32.mrf.mxu0
  %v3839 = vadd.f32 %v3766, %v3838
  %3840 = vmatmul.bf16.gmra.mxu0 %v3457
  %v3841 = vpop.f32.mrf.mxu0
  %v3842 = vadd.f32 %v3769, %v3841
  %v3843 = vpop.f32.mrf.mxu0
  %v3844 = vadd.f32 %v3771, %v3843
  %3845 = vmatmul.bf16.gmra.mxu0 %v3461
  %v3846 = vpop.f32.mrf.mxu0
  %v3847 = vadd.f32 %v3774, %v3846
  %v3848 = vpop.f32.mrf.mxu0
  %v3849 = vadd.f32 %v3776, %v3848
  %3850 = vmatmul.bf16.gmra.mxu0 %v3465
  %v3851 = vpop.f32.mrf.mxu0
  %v3852 = vadd.f32 %v3779, %v3851
  %v3853 = vpop.f32.mrf.mxu0
  %v3854 = vadd.f32 %v3781, %v3853
  %3855 = vmatmul.bf16.gmra.mxu0 %v3469
  %v3856 = vpop.f32.mrf.mxu0
  %v3857 = vadd.f32 %v3784, %v3856
  %v3858 = vpop.f32.mrf.mxu0
  %v3859 = vadd.f32 %v3786, %v3858
  %3860 = vmatmul.bf16.gmra.mxu0 %v3473
  %v3861 = vpop.f32.mrf.mxu0
  %v3862 = vadd.f32 %v3789, %v3861
  %v3863 = vpop.f32.mrf.mxu0
  %v3864 = vadd.f32 %v3791, %v3863
  %3865 = vmatmul.bf16.gmra.mxu0 %v3477
  %v3866 = vpop.f32.mrf.mxu0
  %v3867 = vadd.f32 %v3794, %v3866
  %v3868 = vpop.f32.mrf.mxu0
  %3869 = vdwg.mxu0
  %3870 = vmatpush.bf16.msra.mxu0 %v3683
  %3871 = vmatpush.bf16.msra.mxu0 %v3682
  %3872 = vmatpush.bf16.msra.mxu0 %v3681
  %3873 = vmatpush.bf16.msra.mxu0 %v3680
  %3874 = vmatpush.bf16.msra.mxu0 %v3679
  %3875 = vmatpush.bf16.msra.mxu0 %v3678
  %3876 = vmatpush.bf16.msra.mxu0 %v3677
  %3877 = vmatpush.bf16.msra.mxu0 %v3676
  %3878 = vmatmul.bf16.gmra.mxu0 %v3430
  %v3879 = vpop.f32.mrf.mxu0
  %v3880 = vadd.f32 %v3807, %v3879
  %v3881 = vpop.f32.mrf.mxu0
  %v3882 = vadd.f32 %v3809, %v3881
  %3883 = vmatmul.bf16.gmra.mxu0 %v3434
  %v3884 = vpop.f32.mrf.mxu0
  %v3885 = vadd.f32 %v3812, %v3884
  %v3886 = vpop.f32.mrf.mxu0
  %v3887 = vadd.f32 %v3814, %v3886
  %3888 = vmatmul.bf16.gmra.mxu0 %v3438
  %v3889 = vpop.f32.mrf.mxu0
  %v3890 = vadd.f32 %v3817, %v3889
  %v3891 = vpop.f32.mrf.mxu0
  %v3892 = vadd.f32 %v3819, %v3891
  %3893 = vmatmul.bf16.gmra.mxu0 %v3442
  %v3894 = vpop.f32.mrf.mxu0
  %v3895 = vadd.f32 %v3822, %v3894
  %v3896 = vpop.f32.mrf.mxu0
  %v3897 = vadd.f32 %v3824, %v3896
  %3898 = vmatmul.bf16.gmra.mxu0 %v3446
  %v3899 = vpop.f32.mrf.mxu0
  %v3900 = vadd.f32 %v3827, %v3899
  %v3901 = vpop.f32.mrf.mxu0
  %v3902 = vadd.f32 %v3829, %v3901
  %3903 = vmatmul.bf16.gmra.mxu0 %v3450
  %v3904 = vpop.f32.mrf.mxu0
  %v3905 = vadd.f32 %v3832, %v3904
  %v3906 = vpop.f32.mrf.mxu0
  %v3907 = vadd.f32 %v3834, %v3906
  %3908 = vmatmul.bf16.gmra.mxu0 %v3454
  %v3909 = vpop.f32.mrf.mxu0
  %v3910 = vadd.f32 %v3837, %v3909
  %v3911 = vpop.f32.mrf.mxu0
  %v3912 = vadd.f32 %v3839, %v3911
  %3913 = vmatmul.bf16.gmra.mxu0 %v3458
  %v3914 = vpop.f32.mrf.mxu0
  %v3915 = vadd.f32 %v3842, %v3914
  %v3916 = vpop.f32.mrf.mxu0
  %v3917 = vadd.f32 %v3844, %v3916
  %3918 = vmatmul.bf16.gmra.mxu0 %v3462
  %v3919 = vpop.f32.mrf.mxu0
  %v3920 = vadd.f32 %v3847, %v3919
  %v3921 = vpop.f32.mrf.mxu0
  %v3922 = vadd.f32 %v3849, %v3921
  %3923 = vmatmul.bf16.gmra.mxu0 %v3466
  %v3924 = vpop.f32.mrf.mxu0
  %v3925 = vadd.f32 %v3852, %v3924
  %v3926 = vpop.f32.mrf.mxu0
  %v3927 = vadd.f32 %v3854, %v3926
  %3928 = vmatmul.bf16.gmra.mxu0 %v3470
  %v3929 = vpop.f32.mrf.mxu0
  %v3930 = vadd.f32 %v3857, %v3929
  %v3931 = vpop.f32.mrf.mxu0
  %v3932 = vadd.f32 %v3859, %v3931
  %3933 = vmatmul.bf16.gmra.mxu0 %v3474
  %v3934 = vpop.f32.mrf.mxu0
  %v3935 = vadd.f32 %v3862, %v3934
  %v3936 = vpop.f32.mrf.mxu0
  %v3937 = vadd.f32 %v3864, %v3936
  %3938 = vmatmul.bf16.gmra.mxu0 %v3478
  %v3939 = vpop.f32.mrf.mxu0
  %v3940 = vadd.f32 %v3867, %v3939
  %v3941 = vpop.f32.mrf.mxu0
  %3942 = vdwg.mxu0
  %3943 = vmatpush.bf16.msra.mxu0 %v3691
  %3944 = vmatpush.bf16.msra.mxu0 %v3690
  %3945 = vmatpush.bf16.msra.mxu0 %v3689
  %3946 = vmatpush.bf16.msra.mxu0 %v3688
  %3947 = vmatpush.bf16.msra.mxu0 %v3687
  %3948 = vmatpush.bf16.msra.mxu0 %v3686
  %3949 = vmatpush.bf16.msra.mxu0 %v3685
  %3950 = vmatpush.bf16.msra.mxu0 %v3684
  %3951 = vmatmul.bf16.gmra.mxu0 %v3431
  %v3952 = vpop.f32.mrf.mxu0
  %v3953 = vadd.f32 %v3880, %v3952
  %v3954 = vpop.f32.mrf.mxu0
  %v3955 = vadd.f32 %v3882, %v3954
  %3956 = vmatmul.bf16.gmra.mxu0 %v3435
  %v3957 = vpop.f32.mrf.mxu0
  %v3958 = vadd.f32 %v3885, %v3957
  %v3959 = vpop.f32.mrf.mxu0
  %v3960 = vadd.f32 %v3887, %v3959
  %3961 = vmatmul.bf16.gmra.mxu0 %v3439
  %v3962 = vpop.f32.mrf.mxu0
  %v3963 = vadd.f32 %v3890, %v3962
  %v3964 = vpop.f32.mrf.mxu0
  %v3965 = vadd.f32 %v3892, %v3964
  %3966 = vmatmul.bf16.gmra.mxu0 %v3443
  %v3967 = vpop.f32.mrf.mxu0
  %v3968 = vadd.f32 %v3895, %v3967
  %v3969 = vpop.f32.mrf.mxu0
  %v3970 = vadd.f32 %v3897, %v3969
  %3971 = vmatmul.bf16.gmra.mxu0 %v3447
  %v3972 = vpop.f32.mrf.mxu0
  %v3973 = vadd.f32 %v3900, %v3972
  %v3974 = vpop.f32.mrf.mxu0
  %v3975 = vadd.f32 %v3902, %v3974
  %3976 = vmatmul.bf16.gmra.mxu0 %v3451
  %v3977 = vpop.f32.mrf.mxu0
  %v3978 = vadd.f32 %v3905, %v3977
  %v3979 = vpop.f32.mrf.mxu0
  %v3980 = vadd.f32 %v3907, %v3979
  %3981 = vmatmul.bf16.gmra.mxu0 %v3455
  %v3982 = vpop.f32.mrf.mxu0
  %v3983 = vadd.f32 %v3910, %v3982
  %v3984 = vpop.f32.mrf.mxu0
  %v3985 = vadd.f32 %v3912, %v3984
  %3986 = vmatmul.bf16.gmra.mxu0 %v3459
  %v3987 = vpop.f32.mrf.mxu0
  %v3988 = vadd.f32 %v3915, %v3987
  %v3989 = vpop.f32.mrf.mxu0
  %v3990 = vadd.f32 %v3917, %v3989
  %3991 = vmatmul.bf16.gmra.mxu0 %v3463
  %v3992 = vpop.f32.mrf.mxu0
  %v3993 = vadd.f32 %v3920, %v3992
  %v3994 = vpop.f32.mrf.mxu0
  %v3995 = vadd.f32 %v3922, %v3994
  %3996 = vmatmul.bf16.gmra.mxu0 %v3467
  %v3997 = vpop.f32.mrf.mxu0
  %v3998 = vadd.f32 %v3925, %v3997
  %v3999 = vpop.f32.mrf.mxu0
  %v4000 = vadd.f32 %v3927, %v3999
  %4001 = vmatmul.bf16.gmra.mxu0 %v3471
  %v4002 = vpop.f32.mrf.mxu0
  %v4003 = vadd.f32 %v3930, %v4002
  %v4004 = vpop.f32.mrf.mxu0
  %v4005 = vadd.f32 %v3932, %v4004
  %4006 = vmatmul.bf16.gmra.mxu0 %v3475
  %v4007 = vpop.f32.mrf.mxu0
  %v4008 = vadd.f32 %v3935, %v4007
  %v4009 = vpop.f32.mrf.mxu0
  %v4010 = vadd.f32 %v3937, %v4009
  %4011 = vmatmul.bf16.gmra.mxu0 %v3479
  %v4012 = vpop.f32.mrf.mxu0
  %v4013 = vadd.f32 %v3940, %v4012
  %v4014 = vpop.f32.mrf.mxu0
  %4015 = vdwg.mxu0
  %v4016 = vmax.f32 %v3953, 0.0
  %v4017 = vmax.f32 %v3955, 0.0
  %v4018 = vmax.f32 %v3958, 0.0
  %v4019 = vmax.f32 %v3960, 0.0
  %v4020 = vmax.f32 %v3963, 0.0
  %v4021 = vmax.f32 %v3965, 0.0
  %v4022 = vmax.f32 %v3968, 0.0
  %v4023 = vmax.f32 %v3970, 0.0
  %v4024 = vmax.f32 %v3973, 0.0
  %v4025 = vmax.f32 %v3975, 0.0
  %v4026 = vmax.f32 %v3978, 0.0
  %v4027 = vmax.f32 %v3980, 0.0
  %v4028 = vmax.f32 %v3983, 0.0
  %v4029 = vmax.f32 %v3985, 0.0
  %v4030 = vmax.f32 %v3988, 0.0
  %v4031 = vmax.f32 %v3990, 0.0
  %v4032 = vmax.f32 %v3993, 0.0
  %v4033 = vmax.f32 %v3995, 0.0
  %v4034 = vmax.f32 %v3998, 0.0
  %v4035 = vmax.f32 %v4000, 0.0
  %v4036 = vmax.f32 %v4003, 0.0
  %v4037 = vmax.f32 %v4005, 0.0
  %v4038 = vmax.f32 %v4008, 0.0
  %v4039 = vmax.f32 %v4010, 0.0
  %v4040 = vmax.f32 %v4013, 0.0
  %v4041 = vpack.c.bf16 %v4016, %v4016
  %v4042 = vpack.c.bf16 %v4017, %v4017
  %v4043 = vpack.c.bf16 %v4018, %v4018
  %v4044 = vpack.c.bf16 %v4019, %v4019
  %v4045 = vpack.c.bf16 %v4020, %v4020
  %v4046 = vpack.c.bf16 %v4021, %v4021
  %v4047 = vpack.c.bf16 %v4022, %v4022
  %v4048 = vpack.c.bf16 %v4023, %v4023
  %v4049 = vpack.c.bf16 %v4024, %v4024
  %v4050 = vpack.c.bf16 %v4025, %v4025
  %v4051 = vpack.c.bf16 %v4026, %v4026
  %v4052 = vpack.c.bf16 %v4027, %v4027
  %v4053 = vpack.c.bf16 %v4028, %v4028
  %v4054 = vpack.c.bf16 %v4029, %v4029
  %v4055 = vpack.c.bf16 %v4030, %v4030
  %v4056 = vpack.c.bf16 %v4031, %v4031
  %v4057 = vpack.c.bf16 %v4032, %v4032
  %v4058 = vpack.c.bf16 %v4033, %v4033
  %v4059 = vpack.c.bf16 %v4034, %v4034
  %v4060 = vpack.c.bf16 %v4035, %v4035
  %v4061 = vpack.c.bf16 %v4036, %v4036
  %v4062 = vpack.c.bf16 %v4037, %v4037
  %v4063 = vpack.c.bf16 %v4038, %v4038
  %v4064 = vpack.c.bf16 %v4039, %v4039
  %v4065 = vpack.c.bf16 %v4040, %v4040
  %v4075 = vunpack.c.l.b16 %v4042
  %v4076 = vunpack.c.l.b16 %v4043
  %v4077 = vunpack.c.l.b16 %v4044
  %v4078 = vunpack.c.l.b16 %v4047
  %v4079 = vunpack.c.l.b16 %v4048
  %v4080 = vunpack.c.l.b16 %v4049
  %v4081 = vunpack.c.l.b16 %v4052
  %v4082 = vunpack.c.l.b16 %v4053
  %v4083 = vunpack.c.l.b16 %v4054
  %v4084 = vpack.c.b16 %v4075, %v4075
  %v4085 = vpack.c.b16 %v4076, %v4076
  %v4086 = vpack.c.b16 %v4077, %v4077
  %v4087 = vpack.c.b16 %v4078, %v4078
  %v4088 = vpack.c.b16 %v4079, %v4079
  %v4089 = vpack.c.b16 %v4080, %v4080
  %v4090 = vpack.c.b16 %v4081, %v4081
  %v4091 = vpack.c.b16 %v4082, %v4082
  %v4092 = vpack.c.b16 %v4083, %v4083
  %4093 = vrot.lane.b32.xlu0 %v4084, 64
  %v4094 = vpop.permute.xlu0 %4093
  %4095 = vrot.lane.b32.xlu0 %v4085, 64
  %v4096 = vpop.permute.xlu0 %4095
  %4097 = vrot.lane.b32.xlu0 %v4086, 64
  %v4098 = vpop.permute.xlu0 %4097
  %4099 = vrot.lane.b32.xlu0 %v4087, 64
  %v4100 = vpop.permute.xlu0 %4099
  %4101 = vrot.lane.b32.xlu0 %v4088, 64
  %v4102 = vpop.permute.xlu0 %4101
  %4103 = vrot.lane.b32.xlu0 %v4089, 64
  %v4104 = vpop.permute.xlu0 %4103
  %4105 = vrot.lane.b32.xlu0 %v4090, 64
  %v4106 = vpop.permute.xlu0 %4105
  %4107 = vrot.lane.b32.xlu0 %v4091, 64
  %v4108 = vpop.permute.xlu0 %4107
  %4109 = vrot.lane.b32.xlu0 %v4092, 64
  %v4110 = vpop.permute.xlu0 %4109
  %v4116 = vunpack.c.l.b16 %v4046
  %v4117 = vunpack.c.l.b16 %v4051
  %v4118 = vunpack.c.l.b16 %v4056
  %v4119 = vunpack.c.l.b16 %v4057
  %v4120 = vunpack.c.l.b16 %v4058
  %v4121 = vpack.c.b16 %v4116, %v4116
  %v4122 = vpack.c.b16 %v4117, %v4117
  %v4123 = vpack.c.b16 %v4118, %v4118
  %v4124 = vpack.c.b16 %v4119, %v4119
  %v4125 = vpack.c.b16 %v4120, %v4120
  %4126 = vrot.lane.b32.xlu0 %v4121, 64
  %v4127 = vpop.permute.xlu0 %4126
  %4128 = vrot.lane.b32.xlu0 %v4122, 64
  %v4129 = vpop.permute.xlu0 %4128
  %4130 = vrot.lane.b32.xlu0 %v4123, 64
  %v4131 = vpop.permute.xlu0 %4130
  %4132 = vrot.lane.b32.xlu0 %v4124, 64
  %v4133 = vpop.permute.xlu0 %4132
  %4134 = vrot.lane.b32.xlu0 %v4125, 64
  %v4135 = vpop.permute.xlu0 %4134
  %v4140 = vunpack.c.l.b16 %v4050
  %v4141 = vunpack.c.l.b16 %v4055
  %v4142 = vunpack.c.l.b16 %v4059
  %v4143 = vunpack.c.l.b16 %v4060
  %v4144 = vpack.c.b16 %v4140, %v4140
  %v4145 = vpack.c.b16 %v4141, %v4141
  %v4146 = vpack.c.b16 %v4142, %v4142
  %v4147 = vpack.c.b16 %v4143, %v4143
  %4148 = vrot.lane.b32.xlu0 %v4144, 64
  %v4149 = vpop.permute.xlu0 %4148
  %4150 = vrot.lane.b32.xlu0 %v4145, 64
  %v4151 = vpop.permute.xlu0 %4150
  %4152 = vrot.lane.b32.xlu0 %v4146, 64
  %v4153 = vpop.permute.xlu0 %4152
  %4154 = vrot.lane.b32.xlu0 %v4147, 64
  %v4155 = vpop.permute.xlu0 %4154
  %v4159 = vunpack.c.l.b16 %v4062
  %v4160 = vunpack.c.l.b16 %v4063
  %v4161 = vunpack.c.l.b16 %v4064
  %v4162 = vpack.c.b16 %v4159, %v4159
  %v4163 = vpack.c.b16 %v4160, %v4160
  %v4164 = vpack.c.b16 %v4161, %v4161
  %4165 = vrot.lane.b32.xlu0 %v4162, 64
  %v4166 = vpop.permute.xlu0 %4165
  %4167 = vrot.lane.b32.xlu0 %v4163, 64
  %v4168 = vpop.permute.xlu0 %4167
  %4169 = vrot.lane.b32.xlu0 %v4164, 64
  %v4170 = vpop.permute.xlu0 %4169
  %v4173 = vsel %vm2893, %v4041, %v4094
  %v4176 = vsel %vm2893, %v4042, %v4096
  %v4179 = vsel %vm2893, %v4043, %v4098
  %v4182 = vsel %vm2893, %v4046, %v4100
  %v4185 = vsel %vm2893, %v4047, %v4102
  %v4188 = vsel %vm2893, %v4048, %v4104
  %v4191 = vsel %vm2893, %v4051, %v4106
  %v4194 = vsel %vm2893, %v4052, %v4108
  %v4197 = vsel %vm2893, %v4053, %v4110
  %v4199 = vsel %vm2893, %v4043, %v4127
  %v4201 = vsel %vm2893, %v4044, %v4100
  %v4203 = vsel %vm2893, %v4045, %v4102
  %v4205 = vsel %vm2893, %v4048, %v4129
  %v4207 = vsel %vm2893, %v4049, %v4106
  %v4209 = vsel %vm2893, %v4050, %v4108
  %v4211 = vsel %vm2893, %v4053, %v4131
  %v4214 = vsel %vm2893, %v4054, %v4133
  %v4217 = vsel %vm2893, %v4055, %v4135
  %v4219 = vsel %vm2893, %v4049, %v4149
  %v4221 = vsel %vm2893, %v4054, %v4151
  %v4223 = vsel %vm2893, %v4057, %v4135
  %v4226 = vsel %vm2893, %v4058, %v4153
  %v4229 = vsel %vm2893, %v4059, %v4155
  %v4231 = vsel %vm2893, %v4056, %v4133
  %v4234 = vsel %vm2893, %v4061, %v4166
  %v4237 = vsel %vm2893, %v4062, %v4168
  %v4240 = vsel %vm2893, %v4063, %v4170
  %v4269 = vunpack.c.l.b16 %v4173
  %v4270 = vunpack.c.l.b16 %v4199
  %v4271 = vunpack.c.l.b16 %v4185
  %v4272 = vunpack.c.l.b16 %v4191
  %v4273 = vunpack.c.l.b16 %v4176
  %v4274 = vunpack.c.l.b16 %v4201
  %v4275 = vunpack.c.l.b16 %v4188
  %v4276 = vunpack.c.l.b16 %v4194
  %v4277 = vunpack.c.l.b16 %v4179
  %v4278 = vunpack.c.l.b16 %v4203
  %v4279 = vunpack.c.l.b16 %v4219
  %v4280 = vunpack.c.l.b16 %v4197
  %v4281 = vunpack.c.l.b16 %v4182
  %v4282 = vunpack.c.l.b16 %v4205
  %v4283 = vunpack.c.l.b16 %v4231
  %v4284 = vunpack.c.l.b16 %v4207
  %v4285 = vunpack.c.l.b16 %v4223
  %v4286 = vunpack.c.l.b16 %v4209
  %v4287 = vunpack.c.l.b16 %v4221
  %v4288 = vunpack.c.l.b16 %v4226
  %v4289 = vunpack.c.l.b16 %v4211
  %v4290 = vunpack.c.l.b16 %v4234
  %v4291 = vunpack.c.l.b16 %v4214
  %v4292 = vunpack.c.l.b16 %v4237
  %v4293 = vunpack.c.l.b16 %v4217
  %v4294 = vunpack.c.l.b16 %v4229
  %v4295 = vunpack.c.l.b16 %v4240
  %v4296 = vunpack.c.l.b16 %v4065
  %v4297 = vld [vmem:[%s5] sm:$0xf]
  %v4298 = vld [vmem:[%s5 + $0x4] sm:$0xf]
  %v4299 = vld [vmem:[%s5 + $0x8] sm:$0xf]
  %v4300 = vld [vmem:[%s5 + $0xc] sm:$0xf]
  %v4301 = vld [vmem:[%s5 + $0x10] sm:$0xf]
  %v4302 = vld [vmem:[%s5 + $0x14] sm:$0xf]
  %v4303 = vld [vmem:[%s5 + $0x18] sm:$0xf]
  %v4304 = vld [vmem:[%s5 + $0x1c] sm:$0xf]
  %v4305 = vld [vmem:[%s5 + $0x20] sm:$0xf]
  %v4306 = vld [vmem:[%s5 + $0x24] sm:$0xf]
  %v4307 = vld [vmem:[%s5 + $0x28] sm:$0xf]
  %v4308 = vld [vmem:[%s5 + $0x2c] sm:$0xf]
  %v4309 = vld [vmem:[%s5 + $0x30] sm:$0xf]
  %v4310 = vld [vmem:[%s5 + $0x34] sm:$0xf]
  %v4311 = vld [vmem:[%s5 + $0x38] sm:$0xf]
  %v4312 = vld [vmem:[%s5 + $0x3c] sm:$0xf]
  %v4313 = vld [vmem:[%s5 + $0x40] sm:$0xf]
  %v4314 = vld [vmem:[%s5 + $0x44] sm:$0xf]
  %v4315 = vld [vmem:[%s5 + $0x48] sm:$0xf]
  %v4316 = vld [vmem:[%s5 + $0x4c] sm:$0xf]
  %v4317 = vld [vmem:[%s5 + $0x50] sm:$0xf]
  %v4318 = vld [vmem:[%s5 + $0x54] sm:$0xf]
  %v4319 = vld [vmem:[%s5 + $0x58] sm:$0xf]
  %v4320 = vld [vmem:[%s5 + $0x5c] sm:$0xf]
  %v4321 = vld [vmem:[%s5 + $0x60] sm:$0xf]
  %v4322 = vld [vmem:[%s5 + $0x64] sm:$0xf]
  %v4323 = vld [vmem:[%s5 + $0x68] sm:$0xf]
  %v4324 = vld [vmem:[%s5 + $0x6c] sm:$0xf]
  %v4325 = vld [vmem:[%s5 + $0x70] sm:$0xf]
  %v4326 = vld [vmem:[%s5 + $0x74] sm:$0xf]
  %v4327 = vld [vmem:[%s5 + $0x78] sm:$0xf]
  %v4328 = vld [vmem:[%s5 + $0x7c] sm:$0xf]
  %v4329 = vld [vmem:[%s5 + $0x80] sm:$0xf]
  %v4330 = vld [vmem:[%s5 + $0x84] sm:$0xf]
  %v4331 = vld [vmem:[%s5 + $0x88] sm:$0xf]
  %v4332 = vld [vmem:[%s5 + $0x8c] sm:$0xf]
  %v4333 = vld [vmem:[%s5 + $0x90] sm:$0xf]
  %v4334 = vld [vmem:[%s5 + $0x94] sm:$0xf]
  %v4335 = vld [vmem:[%s5 + $0x98] sm:$0xf]
  %v4336 = vld [vmem:[%s5 + $0x9c] sm:$0xf]
  %v4337 = vld [vmem:[%s5 + $0xa0] sm:$0xf]
  %v4338 = vld [vmem:[%s5 + $0xa4] sm:$0xf]
  %v4339 = vld [vmem:[%s5 + $0xa8] sm:$0xf]
  %v4340 = vld [vmem:[%s5 + $0xac] sm:$0xf]
  %v4341 = vld [vmem:[%s5 + $0xb0] sm:$0xf]
  %v4342 = vld [vmem:[%s5 + $0xb4] sm:$0xf]
  %v4343 = vld [vmem:[%s5 + $0xb8] sm:$0xf]
  %v4344 = vld [vmem:[%s5 + $0xbc] sm:$0xf]
  %v4345 = vld [vmem:[%s5 + $0xc0] sm:$0xf]
  %v4346 = vld [vmem:[%s5 + $0xc4] sm:$0xf]
  %v4347 = vld [vmem:[%s5 + $0xc8] sm:$0xf]
  %v4348 = vld [vmem:[%s5 + $0xcc] sm:$0xf]
  %v4349 = vld [vmem:[%s5 + $0xd0] sm:$0xf]
  %v4350 = vld [vmem:[%s5 + $0xd4] sm:$0xf]
  %v4351 = vld [vmem:[%s5 + $0xd8] sm:$0xf]
  %v4352 = vld [vmem:[%s5 + $0xdc] sm:$0xf]
  %v4353 = vld [vmem:[%s5 + $0xe0] sm:$0xf]
  %v4354 = vld [vmem:[%s5 + $0xe4] sm:$0xf]
  %v4355 = vld [vmem:[%s5 + $0xe8] sm:$0xf]
  %v4356 = vld [vmem:[%s5 + $0xec] sm:$0xf]
  %v4357 = vld [vmem:[%s5 + $0xf0] sm:$0xf]
  %v4358 = vld [vmem:[%s5 + $0xf4] sm:$0xf]
  %v4359 = vld [vmem:[%s5 + $0xf8] sm:$0xf]
  %v4360 = vld [vmem:[%s5 + $0xfc] sm:$0xf]
  %v4361 = vld [vmem:[%s5 + $0x100] sm:$0xf]
  %v4362 = vld [vmem:[%s5 + $0x104] sm:$0xf]
  %v4363 = vld [vmem:[%s5 + $0x108] sm:$0xf]
  %v4364 = vld [vmem:[%s5 + $0x10c] sm:$0xf]
  %v4365 = vld [vmem:[%s5 + $0x110] sm:$0xf]
  %v4366 = vld [vmem:[%s5 + $0x114] sm:$0xf]
  %v4367 = vld [vmem:[%s5 + $0x118] sm:$0xf]
  %v4368 = vld [vmem:[%s5 + $0x11c] sm:$0xf]
  %v4369 = vld [vmem:[%s6] sm:$0x1]
  %v4371 = vperm.slane %v4369, 0
  %v4373 = vpack.c.b16 %v4273, %v4269
  %v4374 = vpack.c.b16 %v4274, %v4270
  %v4375 = vpack.c.b16 %v4275, %v4271
  %v4376 = vpack.c.b16 %v4276, %v4272
  %v4377 = vpack.c.b16 %v4083, %v4082
  %v4378 = vpack.c.b16 %v4281, %v4277
  %v4379 = vpack.c.b16 %v4282, %v4278
  %v4380 = vpack.c.b16 %v4276, %v4279
  %v4381 = vpack.c.b16 %v4283, %v4280
  %v4382 = vpack.c.b16 %v4120, %v4141
  %v4383 = vpack.c.b16 %v4286, %v4284
  %v4384 = vpack.c.b16 %v4287, %v4280
  %v4385 = vpack.c.b16 %v4288, %v4285
  %v4386 = vpack.c.b16 %v4143, %v4142
  %v4387 = vpack.c.b16 %v4291, %v4289
  %v4388 = vpack.c.b16 %v4292, %v4290
  %v4389 = vpack.c.b16 %v4161, %v4160
  %v4390 = vpack.c.b16 %v4280, %v4280
  %v4391 = vpack.c.b16 %v4293, %v4293
  %v4392 = vpack.c.b16 %v4294, %v4294
  %v4393 = vpack.c.b16 %v4295, %v4295
  %v4394 = vpack.c.b16 %v4296, %v4296
  %v4484 = vunpack.c.l.b16 %v4297
  %v4485 = vunpack.c.l.b16 %v4298
  %v4486 = vunpack.c.l.b16 %v4299
  %v4487 = vunpack.c.l.b16 %v4300
  %v4488 = vunpack.c.l.b16 %v4301
  %v4489 = vunpack.c.l.b16 %v4302
  %v4490 = vunpack.c.l.b16 %v4303
  %v4491 = vunpack.c.l.b16 %v4304
  %v4492 = vunpack.c.l.b16 %v4305
  %v4493 = vunpack.c.l.b16 %v4306
  %v4494 = vunpack.c.l.b16 %v4307
  %v4495 = vunpack.c.l.b16 %v4308
  %v4496 = vunpack.c.l.b16 %v4309
  %v4497 = vunpack.c.l.b16 %v4310
  %v4498 = vunpack.c.l.b16 %v4311
  %v4499 = vunpack.c.l.b16 %v4312
  %v4500 = vunpack.c.l.b16 %v4313
  %v4501 = vunpack.c.l.b16 %v4314
  %v4502 = vunpack.c.l.b16 %v4315
  %v4503 = vunpack.c.l.b16 %v4316
  %v4504 = vunpack.c.l.b16 %v4317
  %v4505 = vunpack.c.l.b16 %v4318
  %v4506 = vunpack.c.l.b16 %v4319
  %v4507 = vunpack.c.l.b16 %v4320
  %v4508 = vunpack.c.l.b16 %v4321
  %v4509 = vunpack.c.l.b16 %v4322
  %v4510 = vunpack.c.l.b16 %v4323
  %v4511 = vunpack.c.l.b16 %v4324
  %v4512 = vunpack.c.l.b16 %v4325
  %v4513 = vunpack.c.l.b16 %v4326
  %v4514 = vunpack.c.l.b16 %v4327
  %v4515 = vunpack.c.l.b16 %v4328
  %v4516 = vunpack.c.l.b16 %v4329
  %v4517 = vunpack.c.l.b16 %v4330
  %v4518 = vunpack.c.l.b16 %v4331
  %v4519 = vunpack.c.l.b16 %v4332
  %v4520 = vunpack.c.l.b16 %v4333
  %v4521 = vunpack.c.l.b16 %v4334
  %v4522 = vunpack.c.l.b16 %v4335
  %v4523 = vunpack.c.l.b16 %v4336
  %v4524 = vunpack.c.l.b16 %v4337
  %v4525 = vunpack.c.l.b16 %v4338
  %v4526 = vunpack.c.l.b16 %v4339
  %v4527 = vunpack.c.l.b16 %v4340
  %v4528 = vunpack.c.l.b16 %v4341
  %v4529 = vunpack.c.l.b16 %v4342
  %v4530 = vunpack.c.l.b16 %v4343
  %v4531 = vunpack.c.l.b16 %v4344
  %v4532 = vunpack.c.l.b16 %v4345
  %v4533 = vunpack.c.l.b16 %v4346
  %v4534 = vunpack.c.l.b16 %v4347
  %v4535 = vunpack.c.l.b16 %v4348
  %v4536 = vunpack.c.l.b16 %v4349
  %v4537 = vunpack.c.l.b16 %v4350
  %v4538 = vunpack.c.l.b16 %v4351
  %v4539 = vunpack.c.l.b16 %v4352
  %v4540 = vunpack.c.l.b16 %v4353
  %v4541 = vunpack.c.l.b16 %v4354
  %v4542 = vunpack.c.l.b16 %v4355
  %v4543 = vunpack.c.l.b16 %v4356
  %v4544 = vunpack.c.l.b16 %v4357
  %v4545 = vunpack.c.l.b16 %v4358
  %v4546 = vunpack.c.l.b16 %v4359
  %v4547 = vunpack.c.l.b16 %v4360
  %v4548 = vunpack.c.l.b16 %v4361
  %v4549 = vunpack.c.l.b16 %v4362
  %v4550 = vunpack.c.l.b16 %v4363
  %v4551 = vunpack.c.l.b16 %v4364
  %v4552 = vunpack.c.l.b16 %v4365
  %v4553 = vunpack.c.l.b16 %v4366
  %v4554 = vunpack.c.l.b16 %v4367
  %v4555 = vunpack.c.l.b16 %v4368
  %v4556 = vpack.c.b16 %v4485, %v4484
  %v4557 = vpack.c.b16 %v4487, %v4486
  %v4558 = vpack.c.b16 %v4489, %v4488
  %v4559 = vpack.c.b16 %v4491, %v4490
  %v4560 = vpack.c.b16 %v4493, %v4492
  %v4561 = vpack.c.b16 %v4495, %v4494
  %v4562 = vpack.c.b16 %v4497, %v4496
  %v4563 = vpack.c.b16 %v4499, %v4498
  %v4564 = vpack.c.b16 %v4501, %v4500
  %v4565 = vpack.c.b16 %v4503, %v4502
  %v4566 = vpack.c.b16 %v4505, %v4504
  %v4567 = vpack.c.b16 %v4507, %v4506
  %v4568 = vpack.c.b16 %v4509, %v4508
  %v4569 = vpack.c.b16 %v4511, %v4510
  %v4570 = vpack.c.b16 %v4513, %v4512
  %v4571 = vpack.c.b16 %v4515, %v4514
  %v4572 = vpack.c.b16 %v4517, %v4516
  %v4573 = vpack.c.b16 %v4519, %v4518
  %v4574 = vpack.c.b16 %v4521, %v4520
  %v4575 = vpack.c.b16 %v4523, %v4522
  %v4576 = vpack.c.b16 %v4525, %v4524
  %v4577 = vpack.c.b16 %v4527, %v4526
  %v4578 = vpack.c.b16 %v4529, %v4528
  %v4579 = vpack.c.b16 %v4531, %v4530
  %v4580 = vpack.c.b16 %v4533, %v4532
  %v4581 = vpack.c.b16 %v4535, %v4534
  %v4582 = vpack.c.b16 %v4537, %v4536
  %v4583 = vpack.c.b16 %v4539, %v4538
  %v4584 = vpack.c.b16 %v4541, %v4540
  %v4585 = vpack.c.b16 %v4543, %v4542
  %v4586 = vpack.c.b16 %v4545, %v4544
  %v4587 = vpack.c.b16 %v4547, %v4546
  %v4588 = vpack.c.b16 %v4549, %v4548
  %v4589 = vpack.c.b16 %v4551, %v4550
  %v4590 = vpack.c.b16 %v4553, %v4552
  %v4591 = vpack.c.b16 %v4555, %v4554
  %v4629 = vsel %vm2893, %v4377, 0
  %v4632 = vsel %vm2893, %v4382, 0
  %v4635 = vsel %vm2893, %v4386, 0
  %v4638 = vsel %vm2893, %v4389, 0
  %v4641 = vsel %vm2893, %v4394, 0
  %4643 = vmatpush.bf16.msra.mxu0 %v4563
  %4644 = vmatpush.bf16.msra.mxu0 %v4562
  %4645 = vmatpush.bf16.msra.mxu0 %v4561
  %4646 = vmatpush.bf16.msra.mxu0 %v4560
  %4647 = vmatpush.bf16.msra.mxu0 %v4559
  %4648 = vmatpush.bf16.msra.mxu0 %v4558
  %4649 = vmatpush.bf16.msra.mxu0 %v4557
  %4650 = vmatpush.bf16.msra.mxu0 %v4556
  %4651 = vmatmul.bf16.gmra.mxu0 %v4373
  %v4652 = vpop.f32.mrf.mxu0
  %v4653 = vadd.f32 %v4371, %v4652
  %v4654 = vpop.f32.mrf.mxu0
  %v4655 = vadd.f32 %v4371, %v4654
  %4656 = vmatmul.bf16.gmra.mxu0 %v4378
  %v4657 = vpop.f32.mrf.mxu0
  %v4658 = vadd.f32 %v4371, %v4657
  %v4659 = vpop.f32.mrf.mxu0
  %v4660 = vadd.f32 %v4371, %v4659
  %4661 = vmatmul.bf16.gmra.mxu0 %v4375
  %v4662 = vpop.f32.mrf.mxu0
  %v4663 = vadd.f32 %v4371, %v4662
  %v4664 = vpop.f32.mrf.mxu0
  %v4665 = vadd.f32 %v4371, %v4664
  %4666 = vmatmul.bf16.gmra.mxu0 %v4376
  %v4667 = vpop.f32.mrf.mxu0
  %v4668 = vadd.f32 %v4371, %v4667
  %v4669 = vpop.f32.mrf.mxu0
  %v4670 = vadd.f32 %v4371, %v4669
  %4671 = vmatmul.bf16.gmra.mxu0 %v4390
  %v4672 = vpop.f32.mrf.mxu0
  %v4673 = vadd.f32 %v4371, %v4672
  %v4674 = vpop.f32.mrf.mxu0
  %4675 = vdwg.mxu0
  %4676 = vmatpush.bf16.msra.mxu0 %v4571
  %4677 = vmatpush.bf16.msra.mxu0 %v4570
  %4678 = vmatpush.bf16.msra.mxu0 %v4569
  %4679 = vmatpush.bf16.msra.mxu0 %v4568
  %4680 = vmatpush.bf16.msra.mxu0 %v4567
  %4681 = vmatpush.bf16.msra.mxu0 %v4566
  %4682 = vmatpush.bf16.msra.mxu0 %v4565
  %4683 = vmatpush.bf16.msra.mxu0 %v4564
  %4684 = vmatmul.bf16.gmra.mxu0 %v4374
  %v4685 = vpop.f32.mrf.mxu0
  %v4686 = vadd.f32 %v4653, %v4685
  %v4687 = vpop.f32.mrf.mxu0
  %v4688 = vadd.f32 %v4655, %v4687
  %4689 = vmatmul.bf16.gmra.mxu0 %v4379
  %v4690 = vpop.f32.mrf.mxu0
  %v4691 = vadd.f32 %v4658, %v4690
  %v4692 = vpop.f32.mrf.mxu0
  %v4693 = vadd.f32 %v4660, %v4692
  %4694 = vmatmul.bf16.gmra.mxu0 %v4383
  %v4695 = vpop.f32.mrf.mxu0
  %v4696 = vadd.f32 %v4663, %v4695
  %v4697 = vpop.f32.mrf.mxu0
  %v4698 = vadd.f32 %v4665, %v4697
  %4699 = vmatmul.bf16.gmra.mxu0 %v4387
  %v4700 = vpop.f32.mrf.mxu0
  %v4701 = vadd.f32 %v4668, %v4700
  %v4702 = vpop.f32.mrf.mxu0
  %v4703 = vadd.f32 %v4670, %v4702
  %4704 = vmatmul.bf16.gmra.mxu0 %v4391
  %v4705 = vpop.f32.mrf.mxu0
  %v4706 = vadd.f32 %v4673, %v4705
  %v4707 = vpop.f32.mrf.mxu0
  %4708 = vdwg.mxu0
  %4709 = vmatpush.bf16.msra.mxu0 %v4579
  %4710 = vmatpush.bf16.msra.mxu0 %v4578
  %4711 = vmatpush.bf16.msra.mxu0 %v4577
  %4712 = vmatpush.bf16.msra.mxu0 %v4576
  %4713 = vmatpush.bf16.msra.mxu0 %v4575
  %4714 = vmatpush.bf16.msra.mxu0 %v4574
  %4715 = vmatpush.bf16.msra.mxu0 %v4573
  %4716 = vmatpush.bf16.msra.mxu0 %v4572
  %4717 = vmatmul.bf16.gmra.mxu0 %v4375
  %v4718 = vpop.f32.mrf.mxu0
  %v4719 = vadd.f32 %v4686, %v4718
  %v4720 = vpop.f32.mrf.mxu0
  %v4721 = vadd.f32 %v4688, %v4720
  %4722 = vmatmul.bf16.gmra.mxu0 %v4380
  %v4723 = vpop.f32.mrf.mxu0
  %v4724 = vadd.f32 %v4691, %v4723
  %v4725 = vpop.f32.mrf.mxu0
  %v4726 = vadd.f32 %v4693, %v4725
  %4727 = vmatmul.bf16.gmra.mxu0 %v4384
  %v4728 = vpop.f32.mrf.mxu0
  %v4729 = vadd.f32 %v4696, %v4728
  %v4730 = vpop.f32.mrf.mxu0
  %v4731 = vadd.f32 %v4698, %v4730
  %4732 = vmatmul.bf16.gmra.mxu0 %v4385
  %v4733 = vpop.f32.mrf.mxu0
  %v4734 = vadd.f32 %v4701, %v4733
  %v4735 = vpop.f32.mrf.mxu0
  %v4736 = vadd.f32 %v4703, %v4735
  %4737 = vmatmul.bf16.gmra.mxu0 %v4392
  %v4738 = vpop.f32.mrf.mxu0
  %v4739 = vadd.f32 %v4706, %v4738
  %v4740 = vpop.f32.mrf.mxu0
  %4741 = vdwg.mxu0
  %4742 = vmatpush.bf16.msra.mxu0 %v4587
  %4743 = vmatpush.bf16.msra.mxu0 %v4586
  %4744 = vmatpush.bf16.msra.mxu0 %v4585
  %4745 = vmatpush.bf16.msra.mxu0 %v4584
  %4746 = vmatpush.bf16.msra.mxu0 %v4583
  %4747 = vmatpush.bf16.msra.mxu0 %v4582
  %4748 = vmatpush.bf16.msra.mxu0 %v4581
  %4749 = vmatpush.bf16.msra.mxu0 %v4580
  %4750 = vmatmul.bf16.gmra.mxu0 %v4376
  %v4751 = vpop.f32.mrf.mxu0
  %v4752 = vadd.f32 %v4719, %v4751
  %v4753 = vpop.f32.mrf.mxu0
  %v4754 = vadd.f32 %v4721, %v4753
  %4755 = vmatmul.bf16.gmra.mxu0 %v4381
  %v4756 = vpop.f32.mrf.mxu0
  %v4757 = vadd.f32 %v4724, %v4756
  %v4758 = vpop.f32.mrf.mxu0
  %v4759 = vadd.f32 %v4726, %v4758
  %4760 = vmatmul.bf16.gmra.mxu0 %v4385
  %v4761 = vpop.f32.mrf.mxu0
  %v4762 = vadd.f32 %v4729, %v4761
  %v4763 = vpop.f32.mrf.mxu0
  %v4764 = vadd.f32 %v4731, %v4763
  %4765 = vmatmul.bf16.gmra.mxu0 %v4388
  %v4766 = vpop.f32.mrf.mxu0
  %v4767 = vadd.f32 %v4734, %v4766
  %v4768 = vpop.f32.mrf.mxu0
  %v4769 = vadd.f32 %v4736, %v4768
  %4770 = vmatmul.bf16.gmra.mxu0 %v4393
  %v4771 = vpop.f32.mrf.mxu0
  %v4772 = vadd.f32 %v4739, %v4771
  %v4773 = vpop.f32.mrf.mxu0
  %4774 = vdwg.mxu0
  %4775 = vmatpush.bf16.msra.mxu0 0
  %4776 = vmatpush.bf16.msra.mxu0 0
  %4777 = vmatpush.bf16.msra.mxu0 0
  %4778 = vmatpush.bf16.msra.mxu0 0
  %4779 = vmatpush.bf16.msra.mxu0 %v4591
  %4780 = vmatpush.bf16.msra.mxu0 %v4590
  %4781 = vmatpush.bf16.msra.mxu0 %v4589
  %4782 = vmatpush.bf16.msra.mxu0 %v4588
  %4783 = vmatmul.bf16.gmra.mxu0 %v4629
  %v4784 = vpop.f32.mrf.mxu0
  %v4785 = vadd.f32 %v4752, %v4784
  %v4786 = vpop.f32.mrf.mxu0
  %v4787 = vadd.f32 %v4754, %v4786
  %4788 = vmatmul.bf16.gmra.mxu0 %v4632
  %v4789 = vpop.f32.mrf.mxu0
  %v4790 = vadd.f32 %v4757, %v4789
  %v4791 = vpop.f32.mrf.mxu0
  %v4792 = vadd.f32 %v4759, %v4791
  %4793 = vmatmul.bf16.gmra.mxu0 %v4635
  %v4794 = vpop.f32.mrf.mxu0
  %v4795 = vadd.f32 %v4762, %v4794
  %v4796 = vpop.f32.mrf.mxu0
  %v4797 = vadd.f32 %v4764, %v4796
  %4798 = vmatmul.bf16.gmra.mxu0 %v4638
  %v4799 = vpop.f32.mrf.mxu0
  %v4800 = vadd.f32 %v4767, %v4799
  %v4801 = vpop.f32.mrf.mxu0
  %v4802 = vadd.f32 %v4769, %v4801
  %4803 = vmatmul.bf16.gmra.mxu0 %v4641
  %v4804 = vpop.f32.mrf.mxu0
  %v4805 = vadd.f32 %v4772, %v4804
  %v4806 = vpop.f32.mrf.mxu0
  %4807 = vdwg.mxu0
  %v4808 = vmax.f32 %v4785, 0.0
  %v4809 = vmax.f32 %v4787, 0.0
  %v4810 = vmax.f32 %v4790, 0.0
  %v4811 = vmax.f32 %v4792, 0.0
  %v4812 = vmax.f32 %v4795, 0.0
  %v4813 = vmax.f32 %v4797, 0.0
  %v4814 = vmax.f32 %v4800, 0.0
  %v4815 = vmax.f32 %v4802, 0.0
  %v4816 = vmax.f32 %v4805, 0.0
  %v4817 = vpack.c.bf16 %v4808, %v4808
  %v4818 = vpack.c.bf16 %v4809, %v4809
  %v4819 = vpack.c.bf16 %v4810, %v4810
  %v4820 = vpack.c.bf16 %v4811, %v4811
  %v4821 = vpack.c.bf16 %v4812, %v4812
  %v4822 = vpack.c.bf16 %v4813, %v4813
  %v4823 = vpack.c.bf16 %v4814, %v4814
  %v4824 = vpack.c.bf16 %v4815, %v4815
  %v4825 = vpack.c.bf16 %v4816, %v4816
  %v4827 = vunpack.c.l.b16 %v4818
  %v4828 = vpack.c.b16 %v4827, %v4827
  %4829 = vrot.lane.b32.xlu0 %v4828, 64
  %v4830 = vpop.permute.xlu0 %4829
  %v4832 = vunpack.c.l.b16 %v4820
  %v4833 = vpack.c.b16 %v4832, %v4832
  %4834 = vrot.lane.b32.xlu0 %v4833, 64
  %v4835 = vpop.permute.xlu0 %4834
  %v4837 = vunpack.c.l.b16 %v4822
  %v4838 = vpack.c.b16 %v4837, %v4837
  %4839 = vrot.lane.b32.xlu0 %v4838, 64
  %v4840 = vpop.permute.xlu0 %4839
  %v4842 = vunpack.c.l.b16 %v4824
  %v4843 = vpack.c.b16 %v4842, %v4842
  %4844 = vrot.lane.b32.xlu0 %v4843, 64
  %v4845 = vpop.permute.xlu0 %4844
  %v4848 = vsel %vm2893, %v4817, %v4830
  %v4852 = vsel %vm2893, %v4819, %v4835
  %v4856 = vsel %vm2893, %v4821, %v4840
  %v4860 = vsel %vm2893, %v4823, %v4845
  %v4862 = vld [vmem:[%s7] sm:$0xff]
  %v4863 = vld [vmem:[%s7 + $0x8] sm:$0xff]
  %v4864 = vld [vmem:[%s7 + $0x10] sm:$0xff]
  %v4865 = vld [vmem:[%s7 + $0x18] sm:$0xff]
  %v4866 = vld [vmem:[%s7 + $0x20] sm:$0xff]
  %v4867 = vld [vmem:[%s7 + $0x28] sm:$0xff]
  %v4868 = vld [vmem:[%s7 + $0x30] sm:$0xff]
  %v4869 = vld [vmem:[%s7 + $0x38] sm:$0xff]
  %v4870 = vld [vmem:[%s7 + $0x40] sm:$0xff]
  %v4871 = vld [vmem:[%s7 + $0x48] sm:$0xff]
  %v4872 = vld [vmem:[%s7 + $0x50] sm:$0xff]
  %v4873 = vld [vmem:[%s7 + $0x58] sm:$0xff]
  %v4874 = vld [vmem:[%s7 + $0x60] sm:$0xff]
  %v4875 = vld [vmem:[%s7 + $0x68] sm:$0xff]
  %v4876 = vld [vmem:[%s7 + $0x70] sm:$0xff]
  %v4877 = vld [vmem:[%s7 + $0x78] sm:$0xff]
  %v4878 = vld [vmem:[%s7 + $0x80] sm:$0xff]
  %v4879 = vld [vmem:[%s7 + $0x88] sm:$0xff]
  %v4880 = vld [vmem:[%s7 + $0x90] sm:$0xff]
  %v4881 = vld [vmem:[%s7 + $0x98] sm:$0xff]
  %v4882 = vld [vmem:[%s7 + $0xa0] sm:$0xff]
  %v4883 = vld [vmem:[%s7 + $0xa8] sm:$0xff]
  %v4884 = vld [vmem:[%s7 + $0xb0] sm:$0xff]
  %v4885 = vld [vmem:[%s7 + $0xb8] sm:$0xff]
  %v4886 = vld [vmem:[%s7 + $0xc0] sm:$0xff]
  %v4887 = vld [vmem:[%s7 + $0xc8] sm:$0xff]
  %v4888 = vld [vmem:[%s7 + $0xd0] sm:$0xff]
  %v4889 = vld [vmem:[%s7 + $0xd8] sm:$0xff]
  %v4890 = vld [vmem:[%s7 + $0xe0] sm:$0xff]
  %v4891 = vld [vmem:[%s7 + $0xe8] sm:$0xff]
  %v4892 = vld [vmem:[%s7 + $0xf0] sm:$0xff]
  %v4893 = vld [vmem:[%s7 + $0xf8] sm:$0xff]
  %v4894 = vld [vmem:[%s7 + $0x100] sm:$0xff]
  %v4895 = vld [vmem:[%s7 + $0x108] sm:$0xff]
  %v4896 = vld [vmem:[%s7 + $0x110] sm:$0xff]
  %v4897 = vld [vmem:[%s7 + $0x118] sm:$0xff]
  %v4898 = vld [vmem:[%s7 + $0x120] sm:$0xff]
  %v4899 = vld [vmem:[%s7 + $0x128] sm:$0xff]
  %v4900 = vld [vmem:[%s7 + $0x130] sm:$0xff]
  %v4901 = vld [vmem:[%s7 + $0x138] sm:$0xff]
  %v4902 = vld [vmem:[%s7 + $0x140] sm:$0xff]
  %v4903 = vld [vmem:[%s7 + $0x148] sm:$0xff]
  %v4904 = vld [vmem:[%s7 + $0x150] sm:$0xff]
  %v4905 = vld [vmem:[%s7 + $0x158] sm:$0xff]
  %v4906 = vld [vmem:[%s7 + $0x160] sm:$0xff]
  %v4907 = vld [vmem:[%s7 + $0x168] sm:$0xff]
  %v4908 = vld [vmem:[%s7 + $0x170] sm:$0xff]
  %v4909 = vld [vmem:[%s7 + $0x178] sm:$0xff]
  %v4910 = vld [vmem:[%s7 + $0x180] sm:$0xff]
  %v4911 = vld [vmem:[%s7 + $0x188] sm:$0xff]
  %v4912 = vld [vmem:[%s7 + $0x190] sm:$0xff]
  %v4913 = vld [vmem:[%s7 + $0x198] sm:$0xff]
  %v4914 = vld [vmem:[%s7 + $0x1a0] sm:$0xff]
  %v4915 = vld [vmem:[%s7 + $0x1a8] sm:$0xff]
  %v4916 = vld [vmem:[%s7 + $0x1b0] sm:$0xff]
  %v4917 = vld [vmem:[%s7 + $0x1b8] sm:$0xff]
  %v4918 = vld [vmem:[%s7 + $0x1c0] sm:$0xff]
  %v4919 = vld [vmem:[%s7 + $0x1c8] sm:$0xff]
  %v4920 = vld [vmem:[%s7 + $0x1d0] sm:$0xff]
  %v4921 = vld [vmem:[%s7 + $0x1d8] sm:$0xff]
  %v4922 = vld [vmem:[%s7 + $0x1e0] sm:$0xff]
  %v4923 = vld [vmem:[%s7 + $0x1e8] sm:$0xff]
  %v4924 = vld [vmem:[%s7 + $0x1f0] sm:$0xff]
  %v4925 = vld [vmem:[%s7 + $0x1f8] sm:$0xff]
  %v4926 = vld [vmem:[%s7 + $0x200] sm:$0xff]
  %v4927 = vld [vmem:[%s7 + $0x208] sm:$0xff]
  %v4928 = vld [vmem:[%s7 + $0x210] sm:$0xff]
  %v4929 = vld [vmem:[%s7 + $0x218] sm:$0xff]
  %v4930 = vld [vmem:[%s7 + $0x220] sm:$0xff]
  %v4931 = vld [vmem:[%s7 + $0x228] sm:$0xff]
  %v4932 = vld [vmem:[%s7 + $0x230] sm:$0xff]
  %v4933 = vld [vmem:[%s7 + $0x238] sm:$0xff]
  %v4934 = vld [vmem:[%s7 + $0x240] sm:$0xff]
  %v4935 = vld [vmem:[%s7 + $0x248] sm:$0xff]
  %v4936 = vld [vmem:[%s7 + $0x250] sm:$0xff]
  %v4937 = vld [vmem:[%s7 + $0x258] sm:$0xff]
  %v4938 = vld [vmem:[%s7 + $0x260] sm:$0xff]
  %v4939 = vld [vmem:[%s7 + $0x268] sm:$0xff]
  %v4940 = vld [vmem:[%s7 + $0x270] sm:$0xff]
  %v4941 = vld [vmem:[%s7 + $0x278] sm:$0xff]
  %v4942 = vld [vmem:[%s7 + $0x280] sm:$0xff]
  %v4943 = vld [vmem:[%s7 + $0x288] sm:$0xff]
  %v4944 = vld [vmem:[%s7 + $0x290] sm:$0xff]
  %v4945 = vld [vmem:[%s7 + $0x298] sm:$0xff]
  %v4946 = vld [vmem:[%s7 + $0x2a0] sm:$0xff]
  %v4947 = vld [vmem:[%s7 + $0x2a8] sm:$0xff]
  %v4948 = vld [vmem:[%s7 + $0x2b0] sm:$0xff]
  %v4949 = vld [vmem:[%s7 + $0x2b8] sm:$0xff]
  %v4950 = vld [vmem:[%s7 + $0x2c0] sm:$0xff]
  %v4951 = vld [vmem:[%s7 + $0x2c8] sm:$0xff]
  %v4952 = vld [vmem:[%s7 + $0x2d0] sm:$0xff]
  %v4953 = vld [vmem:[%s7 + $0x2d8] sm:$0xff]
  %v4954 = vld [vmem:[%s7 + $0x2e0] sm:$0xff]
  %v4955 = vld [vmem:[%s7 + $0x2e8] sm:$0xff]
  %v4956 = vld [vmem:[%s7 + $0x2f0] sm:$0xff]
  %v4957 = vld [vmem:[%s7 + $0x2f8] sm:$0xff]
  %v4958 = vld [vmem:[%s7 + $0x300] sm:$0xff]
  %v4959 = vld [vmem:[%s7 + $0x308] sm:$0xff]
  %v4960 = vld [vmem:[%s7 + $0x310] sm:$0xff]
  %v4961 = vld [vmem:[%s7 + $0x318] sm:$0xff]
  %v4962 = vld [vmem:[%s7 + $0x320] sm:$0xff]
  %v4963 = vld [vmem:[%s7 + $0x328] sm:$0xff]
  %v4964 = vld [vmem:[%s7 + $0x330] sm:$0xff]
  %v4965 = vld [vmem:[%s7 + $0x338] sm:$0xff]
  %v4966 = vld [vmem:[%s7 + $0x340] sm:$0xff]
  %v4967 = vld [vmem:[%s7 + $0x348] sm:$0xff]
  %v4968 = vld [vmem:[%s7 + $0x350] sm:$0xff]
  %v4969 = vld [vmem:[%s7 + $0x358] sm:$0xff]
  %v4970 = vld [vmem:[%s7 + $0x360] sm:$0xff]
  %v4971 = vld [vmem:[%s7 + $0x368] sm:$0xff]
  %v4972 = vld [vmem:[%s7 + $0x370] sm:$0xff]
  %v4973 = vld [vmem:[%s7 + $0x378] sm:$0xff]
  %v4974 = vld [vmem:[%s7 + $0x380] sm:$0xff]
  %v4975 = vld [vmem:[%s7 + $0x388] sm:$0xff]
  %v4976 = vld [vmem:[%s7 + $0x390] sm:$0xff]
  %v4977 = vld [vmem:[%s7 + $0x398] sm:$0xff]
  %v4978 = vld [vmem:[%s7 + $0x3a0] sm:$0xff]
  %v4979 = vld [vmem:[%s7 + $0x3a8] sm:$0xff]
  %v4980 = vld [vmem:[%s7 + $0x3b0] sm:$0xff]
  %v4981 = vld [vmem:[%s7 + $0x3b8] sm:$0xff]
  %v4982 = vld [vmem:[%s7 + $0x3c0] sm:$0xff]
  %v4983 = vld [vmem:[%s7 + $0x3c8] sm:$0xff]
  %v4984 = vld [vmem:[%s7 + $0x3d0] sm:$0xff]
  %v4985 = vld [vmem:[%s7 + $0x3d8] sm:$0xff]
  %v4986 = vld [vmem:[%s7 + $0x3e0] sm:$0xff]
  %v4987 = vld [vmem:[%s7 + $0x3e8] sm:$0xff]
  %v4988 = vld [vmem:[%s7 + $0x3f0] sm:$0xff]
  %v4989 = vld [vmem:[%s7 + $0x3f8] sm:$0xff]
  %v4990 = vld [vmem:[%s7 + $0x400] sm:$0xff]
  %v4991 = vld [vmem:[%s7 + $0x408] sm:$0xff]
  %v4992 = vld [vmem:[%s7 + $0x410] sm:$0xff]
  %v4993 = vld [vmem:[%s7 + $0x418] sm:$0xff]
  %v4994 = vld [vmem:[%s7 + $0x420] sm:$0xff]
  %v4995 = vld [vmem:[%s7 + $0x428] sm:$0xff]
  %v4996 = vld [vmem:[%s7 + $0x430] sm:$0xff]
  %v4997 = vld [vmem:[%s7 + $0x438] sm:$0xff]
  %v4998 = vld [vmem:[%s7 + $0x440] sm:$0xff]
  %v4999 = vld [vmem:[%s7 + $0x448] sm:$0xff]
  %v5000 = vld [vmem:[%s7 + $0x450] sm:$0xff]
  %v5001 = vld [vmem:[%s7 + $0x458] sm:$0xff]
  %v5002 = vld [vmem:[%s7 + $0x460] sm:$0xff]
  %v5003 = vld [vmem:[%s7 + $0x468] sm:$0xff]
  %v5004 = vld [vmem:[%s7 + $0x470] sm:$0xff]
  %v5005 = vld [vmem:[%s7 + $0x478] sm:$0xff]
  %v5006 = vld [vmem:[%s8] sm:$0xf]
  %v5008 = vperm.slane %v5006, 0
  %v5009 = vperm.slane %v5006, 1
  %v5010 = vperm.slane %v5006, 2
  %v5011 = vperm.slane %v5006, 3
  %v5160 = vunpack.c.l.b16 %v4862
  %v5161 = vunpack.c.h.b16 %v4862
  %v5162 = vunpack.c.l.b16 %v4863
  %v5163 = vunpack.c.h.b16 %v4863
  %v5164 = vunpack.c.l.b16 %v4864
  %v5165 = vunpack.c.h.b16 %v4864
  %v5166 = vunpack.c.l.b16 %v4865
  %v5167 = vunpack.c.h.b16 %v4865
  %v5168 = vunpack.c.l.b16 %v4866
  %v5169 = vunpack.c.h.b16 %v4866
  %v5170 = vunpack.c.l.b16 %v4867
  %v5171 = vunpack.c.h.b16 %v4867
  %v5172 = vunpack.c.l.b16 %v4868
  %v5173 = vunpack.c.h.b16 %v4868
  %v5174 = vunpack.c.l.b16 %v4869
  %v5175 = vunpack.c.h.b16 %v4869
  %v5176 = vunpack.c.l.b16 %v4870
  %v5177 = vunpack.c.h.b16 %v4870
  %v5178 = vunpack.c.l.b16 %v4871
  %v5179 = vunpack.c.h.b16 %v4871
  %v5180 = vunpack.c.l.b16 %v4872
  %v5181 = vunpack.c.h.b16 %v4872
  %v5182 = vunpack.c.l.b16 %v4873
  %v5183 = vunpack.c.h.b16 %v4873
  %v5184 = vunpack.c.l.b16 %v4874
  %v5185 = vunpack.c.h.b16 %v4874
  %v5186 = vunpack.c.l.b16 %v4875
  %v5187 = vunpack.c.h.b16 %v4875
  %v5188 = vunpack.c.l.b16 %v4876
  %v5189 = vunpack.c.h.b16 %v4876
  %v5190 = vunpack.c.l.b16 %v4877
  %v5191 = vunpack.c.h.b16 %v4877
  %v5192 = vunpack.c.l.b16 %v4878
  %v5193 = vunpack.c.h.b16 %v4878
  %v5194 = vunpack.c.l.b16 %v4879
  %v5195 = vunpack.c.h.b16 %v4879
  %v5196 = vunpack.c.l.b16 %v4880
  %v5197 = vunpack.c.h.b16 %v4880
  %v5198 = vunpack.c.l.b16 %v4881
  %v5199 = vunpack.c.h.b16 %v4881
  %v5200 = vunpack.c.l.b16 %v4882
  %v5201 = vunpack.c.h.b16 %v4882
  %v5202 = vunpack.c.l.b16 %v4883
  %v5203 = vunpack.c.h.b16 %v4883
  %v5204 = vunpack.c.l.b16 %v4884
  %v5205 = vunpack.c.h.b16 %v4884
  %v5206 = vunpack.c.l.b16 %v4885
  %v5207 = vunpack.c.h.b16 %v4885
  %v5208 = vunpack.c.l.b16 %v4886
  %v5209 = vunpack.c.h.b16 %v4886
  %v5210 = vunpack.c.l.b16 %v4887
  %v5211 = vunpack.c.h.b16 %v4887
  %v5212 = vunpack.c.l.b16 %v4888
  %v5213 = vunpack.c.h.b16 %v4888
  %v5214 = vunpack.c.l.b16 %v4889
  %v5215 = vunpack.c.h.b16 %v4889
  %v5216 = vunpack.c.l.b16 %v4890
  %v5217 = vunpack.c.h.b16 %v4890
  %v5218 = vunpack.c.l.b16 %v4891
  %v5219 = vunpack.c.h.b16 %v4891
  %v5220 = vunpack.c.l.b16 %v4892
  %v5221 = vunpack.c.h.b16 %v4892
  %v5222 = vunpack.c.l.b16 %v4893
  %v5223 = vunpack.c.h.b16 %v4893
  %v5224 = vunpack.c.l.b16 %v4894
  %v5225 = vunpack.c.h.b16 %v4894
  %v5226 = vunpack.c.l.b16 %v4895
  %v5227 = vunpack.c.h.b16 %v4895
  %v5228 = vunpack.c.l.b16 %v4896
  %v5229 = vunpack.c.h.b16 %v4896
  %v5230 = vunpack.c.l.b16 %v4897
  %v5231 = vunpack.c.h.b16 %v4897
  %v5232 = vunpack.c.l.b16 %v4898
  %v5233 = vunpack.c.h.b16 %v4898
  %v5234 = vunpack.c.l.b16 %v4899
  %v5235 = vunpack.c.h.b16 %v4899
  %v5236 = vunpack.c.l.b16 %v4900
  %v5237 = vunpack.c.h.b16 %v4900
  %v5238 = vunpack.c.l.b16 %v4901
  %v5239 = vunpack.c.h.b16 %v4901
  %v5240 = vunpack.c.l.b16 %v4902
  %v5241 = vunpack.c.h.b16 %v4902
  %v5242 = vunpack.c.l.b16 %v4903
  %v5243 = vunpack.c.h.b16 %v4903
  %v5244 = vunpack.c.l.b16 %v4904
  %v5245 = vunpack.c.h.b16 %v4904
  %v5246 = vunpack.c.l.b16 %v4905
  %v5247 = vunpack.c.h.b16 %v4905
  %v5248 = vunpack.c.l.b16 %v4906
  %v5249 = vunpack.c.h.b16 %v4906
  %v5250 = vunpack.c.l.b16 %v4907
  %v5251 = vunpack.c.h.b16 %v4907
  %v5252 = vunpack.c.l.b16 %v4908
  %v5253 = vunpack.c.h.b16 %v4908
  %v5254 = vunpack.c.l.b16 %v4909
  %v5255 = vunpack.c.h.b16 %v4909
  %v5256 = vunpack.c.l.b16 %v4910
  %v5257 = vunpack.c.h.b16 %v4910
  %v5258 = vunpack.c.l.b16 %v4911
  %v5259 = vunpack.c.h.b16 %v4911
  %v5260 = vunpack.c.l.b16 %v4912
  %v5261 = vunpack.c.h.b16 %v4912
  %v5262 = vunpack.c.l.b16 %v4913
  %v5263 = vunpack.c.h.b16 %v4913
  %v5264 = vunpack.c.l.b16 %v4914
  %v5265 = vunpack.c.h.b16 %v4914
  %v5266 = vunpack.c.l.b16 %v4915
  %v5267 = vunpack.c.h.b16 %v4915
  %v5268 = vunpack.c.l.b16 %v4916
  %v5269 = vunpack.c.h.b16 %v4916
  %v5270 = vunpack.c.l.b16 %v4917
  %v5271 = vunpack.c.h.b16 %v4917
  %v5272 = vunpack.c.l.b16 %v4918
  %v5273 = vunpack.c.h.b16 %v4918
  %v5274 = vunpack.c.l.b16 %v4919
  %v5275 = vunpack.c.h.b16 %v4919
  %v5276 = vunpack.c.l.b16 %v4920
  %v5277 = vunpack.c.h.b16 %v4920
  %v5278 = vunpack.c.l.b16 %v4921
  %v5279 = vunpack.c.h.b16 %v4921
  %v5280 = vunpack.c.l.b16 %v4922
  %v5281 = vunpack.c.h.b16 %v4922
  %v5282 = vunpack.c.l.b16 %v4923
  %v5283 = vunpack.c.h.b16 %v4923
  %v5284 = vunpack.c.l.b16 %v4924
  %v5285 = vunpack.c.h.b16 %v4924
  %v5286 = vunpack.c.l.b16 %v4925
  %v5287 = vunpack.c.h.b16 %v4925
  %v5288 = vunpack.c.l.b16 %v4926
  %v5289 = vunpack.c.h.b16 %v4926
  %v5290 = vunpack.c.l.b16 %v4927
  %v5291 = vunpack.c.h.b16 %v4927
  %v5292 = vunpack.c.l.b16 %v4928
  %v5293 = vunpack.c.h.b16 %v4928
  %v5294 = vunpack.c.l.b16 %v4929
  %v5295 = vunpack.c.h.b16 %v4929
  %v5296 = vunpack.c.l.b16 %v4930
  %v5297 = vunpack.c.h.b16 %v4930
  %v5298 = vunpack.c.l.b16 %v4931
  %v5299 = vunpack.c.h.b16 %v4931
  %v5300 = vunpack.c.l.b16 %v4932
  %v5301 = vunpack.c.h.b16 %v4932
  %v5302 = vunpack.c.l.b16 %v4933
  %v5303 = vunpack.c.h.b16 %v4933
  %v5304 = vunpack.c.l.b16 %v4934
  %v5305 = vunpack.c.h.b16 %v4934
  %v5306 = vunpack.c.l.b16 %v4935
  %v5307 = vunpack.c.h.b16 %v4935
  %v5308 = vunpack.c.l.b16 %v4936
  %v5309 = vunpack.c.h.b16 %v4936
  %v5310 = vunpack.c.l.b16 %v4937
  %v5311 = vunpack.c.h.b16 %v4937
  %v5312 = vunpack.c.l.b16 %v4938
  %v5313 = vunpack.c.h.b16 %v4938
  %v5314 = vunpack.c.l.b16 %v4939
  %v5315 = vunpack.c.h.b16 %v4939
  %v5316 = vunpack.c.l.b16 %v4940
  %v5317 = vunpack.c.h.b16 %v4940
  %v5318 = vunpack.c.l.b16 %v4941
  %v5319 = vunpack.c.h.b16 %v4941
  %v5320 = vunpack.c.l.b16 %v4942
  %v5321 = vunpack.c.h.b16 %v4942
  %v5322 = vunpack.c.l.b16 %v4943
  %v5323 = vunpack.c.h.b16 %v4943
  %v5324 = vunpack.c.l.b16 %v4944
  %v5325 = vunpack.c.h.b16 %v4944
  %v5326 = vunpack.c.l.b16 %v4945
  %v5327 = vunpack.c.h.b16 %v4945
  %v5328 = vunpack.c.l.b16 %v4946
  %v5329 = vunpack.c.h.b16 %v4946
  %v5330 = vunpack.c.l.b16 %v4947
  %v5331 = vunpack.c.h.b16 %v4947
  %v5332 = vunpack.c.l.b16 %v4948
  %v5333 = vunpack.c.h.b16 %v4948
  %v5334 = vunpack.c.l.b16 %v4949
  %v5335 = vunpack.c.h.b16 %v4949
  %v5336 = vunpack.c.l.b16 %v4950
  %v5337 = vunpack.c.h.b16 %v4950
  %v5338 = vunpack.c.l.b16 %v4951
  %v5339 = vunpack.c.h.b16 %v4951
  %v5340 = vunpack.c.l.b16 %v4952
  %v5341 = vunpack.c.h.b16 %v4952
  %v5342 = vunpack.c.l.b16 %v4953
  %v5343 = vunpack.c.h.b16 %v4953
  %v5344 = vunpack.c.l.b16 %v4954
  %v5345 = vunpack.c.h.b16 %v4954
  %v5346 = vunpack.c.l.b16 %v4955
  %v5347 = vunpack.c.h.b16 %v4955
  %v5348 = vunpack.c.l.b16 %v4956
  %v5349 = vunpack.c.h.b16 %v4956
  %v5350 = vunpack.c.l.b16 %v4957
  %v5351 = vunpack.c.h.b16 %v4957
  %v5352 = vunpack.c.l.b16 %v4958
  %v5353 = vunpack.c.h.b16 %v4958
  %v5354 = vunpack.c.l.b16 %v4959
  %v5355 = vunpack.c.h.b16 %v4959
  %v5356 = vunpack.c.l.b16 %v4960
  %v5357 = vunpack.c.h.b16 %v4960
  %v5358 = vunpack.c.l.b16 %v4961
  %v5359 = vunpack.c.h.b16 %v4961
  %v5360 = vunpack.c.l.b16 %v4962
  %v5361 = vunpack.c.h.b16 %v4962
  %v5362 = vunpack.c.l.b16 %v4963
  %v5363 = vunpack.c.h.b16 %v4963
  %v5364 = vunpack.c.l.b16 %v4964
  %v5365 = vunpack.c.h.b16 %v4964
  %v5366 = vunpack.c.l.b16 %v4965
  %v5367 = vunpack.c.h.b16 %v4965
  %v5368 = vunpack.c.l.b16 %v4966
  %v5369 = vunpack.c.h.b16 %v4966
  %v5370 = vunpack.c.l.b16 %v4967
  %v5371 = vunpack.c.h.b16 %v4967
  %v5372 = vunpack.c.l.b16 %v4968
  %v5373 = vunpack.c.h.b16 %v4968
  %v5374 = vunpack.c.l.b16 %v4969
  %v5375 = vunpack.c.h.b16 %v4969
  %v5376 = vunpack.c.l.b16 %v4970
  %v5377 = vunpack.c.h.b16 %v4970
  %v5378 = vunpack.c.l.b16 %v4971
  %v5379 = vunpack.c.h.b16 %v4971
  %v5380 = vunpack.c.l.b16 %v4972
  %v5381 = vunpack.c.h.b16 %v4972
  %v5382 = vunpack.c.l.b16 %v4973
  %v5383 = vunpack.c.h.b16 %v4973
  %v5384 = vunpack.c.l.b16 %v4974
  %v5385 = vunpack.c.h.b16 %v4974
  %v5386 = vunpack.c.l.b16 %v4975
  %v5387 = vunpack.c.h.b16 %v4975
  %v5388 = vunpack.c.l.b16 %v4976
  %v5389 = vunpack.c.h.b16 %v4976
  %v5390 = vunpack.c.l.b16 %v4977
  %v5391 = vunpack.c.h.b16 %v4977
  %v5392 = vunpack.c.l.b16 %v4978
  %v5393 = vunpack.c.h.b16 %v4978
  %v5394 = vunpack.c.l.b16 %v4979
  %v5395 = vunpack.c.h.b16 %v4979
  %v5396 = vunpack.c.l.b16 %v4980
  %v5397 = vunpack.c.h.b16 %v4980
  %v5398 = vunpack.c.l.b16 %v4981
  %v5399 = vunpack.c.h.b16 %v4981
  %v5400 = vunpack.c.l.b16 %v4982
  %v5401 = vunpack.c.h.b16 %v4982
  %v5402 = vunpack.c.l.b16 %v4983
  %v5403 = vunpack.c.h.b16 %v4983
  %v5404 = vunpack.c.l.b16 %v4984
  %v5405 = vunpack.c.h.b16 %v4984
  %v5406 = vunpack.c.l.b16 %v4985
  %v5407 = vunpack.c.h.b16 %v4985
  %v5408 = vunpack.c.l.b16 %v4986
  %v5409 = vunpack.c.h.b16 %v4986
  %v5410 = vunpack.c.l.b16 %v4987
  %v5411 = vunpack.c.h.b16 %v4987
  %v5412 = vunpack.c.l.b16 %v4988
  %v5413 = vunpack.c.h.b16 %v4988
  %v5414 = vunpack.c.l.b16 %v4989
  %v5415 = vunpack.c.h.b16 %v4989
  %v5416 = vunpack.c.l.b16 %v4990
  %v5417 = vunpack.c.h.b16 %v4990
  %v5418 = vunpack.c.l.b16 %v4991
  %v5419 = vunpack.c.h.b16 %v4991
  %v5420 = vunpack.c.l.b16 %v4992
  %v5421 = vunpack.c.h.b16 %v4992
  %v5422 = vunpack.c.l.b16 %v4993
  %v5423 = vunpack.c.h.b16 %v4993
  %v5424 = vunpack.c.l.b16 %v4994
  %v5425 = vunpack.c.h.b16 %v4994
  %v5426 = vunpack.c.l.b16 %v4995
  %v5427 = vunpack.c.h.b16 %v4995
  %v5428 = vunpack.c.l.b16 %v4996
  %v5429 = vunpack.c.h.b16 %v4996
  %v5430 = vunpack.c.l.b16 %v4997
  %v5431 = vunpack.c.h.b16 %v4997
  %v5432 = vunpack.c.l.b16 %v4998
  %v5433 = vunpack.c.h.b16 %v4998
  %v5434 = vunpack.c.l.b16 %v4999
  %v5435 = vunpack.c.h.b16 %v4999
  %v5436 = vunpack.c.l.b16 %v5000
  %v5437 = vunpack.c.h.b16 %v5000
  %v5438 = vunpack.c.l.b16 %v5001
  %v5439 = vunpack.c.h.b16 %v5001
  %v5440 = vunpack.c.l.b16 %v5002
  %v5441 = vunpack.c.h.b16 %v5002
  %v5442 = vunpack.c.l.b16 %v5003
  %v5443 = vunpack.c.h.b16 %v5003
  %v5444 = vunpack.c.l.b16 %v5004
  %v5445 = vunpack.c.h.b16 %v5004
  %v5446 = vunpack.c.l.b16 %v5005
  %v5447 = vunpack.c.h.b16 %v5005
  %v5448 = vpack.c.b16 %v5164, %v5160
  %v5449 = vpack.c.b16 %v5165, %v5161
  %v5450 = vpack.c.b16 %v5166, %v5162
  %v5451 = vpack.c.b16 %v5167, %v5163
  %v5452 = vpack.c.b16 %v5172, %v5168
  %v5453 = vpack.c.b16 %v5173, %v5169
  %v5454 = vpack.c.b16 %v5174, %v5170
  %v5455 = vpack.c.b16 %v5175, %v5171
  %v5456 = vpack.c.b16 %v5180, %v5176
  %v5457 = vpack.c.b16 %v5181, %v5177
  %v5458 = vpack.c.b16 %v5182, %v5178
  %v5459 = vpack.c.b16 %v5183, %v5179
  %v5460 = vpack.c.b16 %v5188, %v5184
  %v5461 = vpack.c.b16 %v5189, %v5185
  %v5462 = vpack.c.b16 %v5190, %v5186
  %v5463 = vpack.c.b16 %v5191, %v5187
  %v5464 = vpack.c.b16 %v5196, %v5192
  %v5465 = vpack.c.b16 %v5197, %v5193
  %v5466 = vpack.c.b16 %v5198, %v5194
  %v5467 = vpack.c.b16 %v5199, %v5195
  %v5468 = vpack.c.b16 %v5204, %v5200
  %v5469 = vpack.c.b16 %v5205, %v5201
  %v5470 = vpack.c.b16 %v5206, %v5202
  %v5471 = vpack.c.b16 %v5207, %v5203
  %v5472 = vpack.c.b16 %v5212, %v5208
  %v5473 = vpack.c.b16 %v5213, %v5209
  %v5474 = vpack.c.b16 %v5214, %v5210
  %v5475 = vpack.c.b16 %v5215, %v5211
  %v5476 = vpack.c.b16 %v5220, %v5216
  %v5477 = vpack.c.b16 %v5221, %v5217
  %v5478 = vpack.c.b16 %v5222, %v5218
  %v5479 = vpack.c.b16 %v5223, %v5219
  %v5480 = vpack.c.b16 %v5228, %v5224
  %v5481 = vpack.c.b16 %v5229, %v5225
  %v5482 = vpack.c.b16 %v5230, %v5226
  %v5483 = vpack.c.b16 %v5231, %v5227
  %v5484 = vpack.c.b16 %v5236, %v5232
  %v5485 = vpack.c.b16 %v5237, %v5233
  %v5486 = vpack.c.b16 %v5238, %v5234
  %v5487 = vpack.c.b16 %v5239, %v5235
  %v5488 = vpack.c.b16 %v5244, %v5240
  %v5489 = vpack.c.b16 %v5245, %v5241
  %v5490 = vpack.c.b16 %v5246, %v5242
  %v5491 = vpack.c.b16 %v5247, %v5243
  %v5492 = vpack.c.b16 %v5252, %v5248
  %v5493 = vpack.c.b16 %v5253, %v5249
  %v5494 = vpack.c.b16 %v5254, %v5250
  %v5495 = vpack.c.b16 %v5255, %v5251
  %v5496 = vpack.c.b16 %v5260, %v5256
  %v5497 = vpack.c.b16 %v5261, %v5257
  %v5498 = vpack.c.b16 %v5262, %v5258
  %v5499 = vpack.c.b16 %v5263, %v5259
  %v5500 = vpack.c.b16 %v5268, %v5264
  %v5501 = vpack.c.b16 %v5269, %v5265
  %v5502 = vpack.c.b16 %v5270, %v5266
  %v5503 = vpack.c.b16 %v5271, %v5267
  %v5504 = vpack.c.b16 %v5276, %v5272
  %v5505 = vpack.c.b16 %v5277, %v5273
  %v5506 = vpack.c.b16 %v5278, %v5274
  %v5507 = vpack.c.b16 %v5279, %v5275
  %v5508 = vpack.c.b16 %v5284, %v5280
  %v5509 = vpack.c.b16 %v5285, %v5281
  %v5510 = vpack.c.b16 %v5286, %v5282
  %v5511 = vpack.c.b16 %v5287, %v5283
  %v5512 = vpack.c.b16 %v5292, %v5288
  %v5513 = vpack.c.b16 %v5293, %v5289
  %v5514 = vpack.c.b16 %v5294, %v5290
  %v5515 = vpack.c.b16 %v5295, %v5291
  %v5516 = vpack.c.b16 %v5300, %v5296
  %v5517 = vpack.c.b16 %v5301, %v5297
  %v5518 = vpack.c.b16 %v5302, %v5298
  %v5519 = vpack.c.b16 %v5303, %v5299
  %v5520 = vpack.c.b16 %v5308, %v5304
  %v5521 = vpack.c.b16 %v5309, %v5305
  %v5522 = vpack.c.b16 %v5310, %v5306
  %v5523 = vpack.c.b16 %v5311, %v5307
  %v5524 = vpack.c.b16 %v5316, %v5312
  %v5525 = vpack.c.b16 %v5317, %v5313
  %v5526 = vpack.c.b16 %v5318, %v5314
  %v5527 = vpack.c.b16 %v5319, %v5315
  %v5528 = vpack.c.b16 %v5324, %v5320
  %v5529 = vpack.c.b16 %v5325, %v5321
  %v5530 = vpack.c.b16 %v5326, %v5322
  %v5531 = vpack.c.b16 %v5327, %v5323
  %v5532 = vpack.c.b16 %v5332, %v5328
  %v5533 = vpack.c.b16 %v5333, %v5329
  %v5534 = vpack.c.b16 %v5334, %v5330
  %v5535 = vpack.c.b16 %v5335, %v5331
  %v5536 = vpack.c.b16 %v5340, %v5336
  %v5537 = vpack.c.b16 %v5341, %v5337
  %v5538 = vpack.c.b16 %v5342, %v5338
  %v5539 = vpack.c.b16 %v5343, %v5339
  %v5540 = vpack.c.b16 %v5348, %v5344
  %v5541 = vpack.c.b16 %v5349, %v5345
  %v5542 = vpack.c.b16 %v5350, %v5346
  %v5543 = vpack.c.b16 %v5351, %v5347
  %v5544 = vpack.c.b16 %v5356, %v5352
  %v5545 = vpack.c.b16 %v5357, %v5353
  %v5546 = vpack.c.b16 %v5358, %v5354
  %v5547 = vpack.c.b16 %v5359, %v5355
  %v5548 = vpack.c.b16 %v5364, %v5360
  %v5549 = vpack.c.b16 %v5365, %v5361
  %v5550 = vpack.c.b16 %v5366, %v5362
  %v5551 = vpack.c.b16 %v5367, %v5363
  %v5552 = vpack.c.b16 %v5372, %v5368
  %v5553 = vpack.c.b16 %v5373, %v5369
  %v5554 = vpack.c.b16 %v5374, %v5370
  %v5555 = vpack.c.b16 %v5375, %v5371
  %v5556 = vpack.c.b16 %v5380, %v5376
  %v5557 = vpack.c.b16 %v5381, %v5377
  %v5558 = vpack.c.b16 %v5382, %v5378
  %v5559 = vpack.c.b16 %v5383, %v5379
  %v5560 = vpack.c.b16 %v5388, %v5384
  %v5561 = vpack.c.b16 %v5389, %v5385
  %v5562 = vpack.c.b16 %v5390, %v5386
  %v5563 = vpack.c.b16 %v5391, %v5387
  %v5564 = vpack.c.b16 %v5396, %v5392
  %v5565 = vpack.c.b16 %v5397, %v5393
  %v5566 = vpack.c.b16 %v5398, %v5394
  %v5567 = vpack.c.b16 %v5399, %v5395
  %v5568 = vpack.c.b16 %v5404, %v5400
  %v5569 = vpack.c.b16 %v5405, %v5401
  %v5570 = vpack.c.b16 %v5406, %v5402
  %v5571 = vpack.c.b16 %v5407, %v5403
  %v5572 = vpack.c.b16 %v5412, %v5408
  %v5573 = vpack.c.b16 %v5413, %v5409
  %v5574 = vpack.c.b16 %v5414, %v5410
  %v5575 = vpack.c.b16 %v5415, %v5411
  %v5576 = vpack.c.b16 %v5420, %v5416
  %v5577 = vpack.c.b16 %v5421, %v5417
  %v5578 = vpack.c.b16 %v5422, %v5418
  %v5579 = vpack.c.b16 %v5423, %v5419
  %v5580 = vpack.c.b16 %v5428, %v5424
  %v5581 = vpack.c.b16 %v5429, %v5425
  %v5582 = vpack.c.b16 %v5430, %v5426
  %v5583 = vpack.c.b16 %v5431, %v5427
  %v5584 = vpack.c.b16 %v5436, %v5432
  %v5585 = vpack.c.b16 %v5437, %v5433
  %v5586 = vpack.c.b16 %v5438, %v5434
  %v5587 = vpack.c.b16 %v5439, %v5435
  %v5588 = vpack.c.b16 %v5444, %v5440
  %v5589 = vpack.c.b16 %v5445, %v5441
  %v5590 = vpack.c.b16 %v5446, %v5442
  %v5591 = vpack.c.b16 %v5447, %v5443
  %v5737 = vsel %vm2893, %v4825, 0
  %5739 = vmatpush.bf16.msra.mxu0 %v5476
  %5740 = vmatpush.bf16.msra.mxu0 %v5472
  %5741 = vmatpush.bf16.msra.mxu0 %v5468
  %5742 = vmatpush.bf16.msra.mxu0 %v5464
  %5743 = vmatpush.bf16.msra.mxu0 %v5460
  %5744 = vmatpush.bf16.msra.mxu0 %v5456
  %5745 = vmatpush.bf16.msra.mxu0 %v5452
  %5746 = vmatpush.bf16.msra.mxu0 %v5448
  %5747 = vmatmul.bf16.gmra.mxu0 %v4848
  %v5748 = vpop.f32.mrf.mxu0
  %v5749 = vadd.f32 %v5008, %v5748
  %v5750 = vpop.f32.mrf.mxu0
  %5751 = vdwg.mxu0
  %5752 = vmatpush.bf16.msra.mxu0 %v5508
  %5753 = vmatpush.bf16.msra.mxu0 %v5504
  %5754 = vmatpush.bf16.msra.mxu0 %v5500
  %5755 = vmatpush.bf16.msra.mxu0 %v5496
  %5756 = vmatpush.bf16.msra.mxu0 %v5492
  %5757 = vmatpush.bf16.msra.mxu0 %v5488
  %5758 = vmatpush.bf16.msra.mxu0 %v5484
  %5759 = vmatpush.bf16.msra.mxu0 %v5480
  %5760 = vmatmul.bf16.gmra.mxu0 %v4852
  %v5761 = vpop.f32.mrf.mxu0
  %v5762 = vadd.f32 %v5749, %v5761
  %v5763 = vpop.f32.mrf.mxu0
  %5764 = vdwg.mxu0
  %5765 = vmatpush.bf16.msra.mxu0 %v5540
  %5766 = vmatpush.bf16.msra.mxu0 %v5536
  %5767 = vmatpush.bf16.msra.mxu0 %v5532
  %5768 = vmatpush.bf16.msra.mxu0 %v5528
  %5769 = vmatpush.bf16.msra.mxu0 %v5524
  %5770 = vmatpush.bf16.msra.mxu0 %v5520
  %5771 = vmatpush.bf16.msra.mxu0 %v5516
  %5772 = vmatpush.bf16.msra.mxu0 %v5512
  %5773 = vmatmul.bf16.gmra.mxu0 %v4856
  %v5774 = vpop.f32.mrf.mxu0
  %v5775 = vadd.f32 %v5762, %v5774
  %v5776 = vpop.f32.mrf.mxu0
  %5777 = vdwg.mxu0
  %5778 = vmatpush.bf16.msra.mxu0 %v5572
  %5779 = vmatpush.bf16.msra.mxu0 %v5568
  %5780 = vmatpush.bf16.msra.mxu0 %v5564
  %5781 = vmatpush.bf16.msra.mxu0 %v5560
  %5782 = vmatpush.bf16.msra.mxu0 %v5556
  %5783 = vmatpush.bf16.msra.mxu0 %v5552
  %5784 = vmatpush.bf16.msra.mxu0 %v5548
  %5785 = vmatpush.bf16.msra.mxu0 %v5544
  %5786 = vmatmul.bf16.gmra.mxu0 %v4860
  %v5787 = vpop.f32.mrf.mxu0
  %v5788 = vadd.f32 %v5775, %v5787
  %v5789 = vpop.f32.mrf.mxu0
  %5790 = vdwg.mxu0
  %5791 = vmatpush.bf16.msra.mxu0 0
  %5792 = vmatpush.bf16.msra.mxu0 0
  %5793 = vmatpush.bf16.msra.mxu0 0
  %5794 = vmatpush.bf16.msra.mxu0 0
  %5795 = vmatpush.bf16.msra.mxu0 %v5588
  %5796 = vmatpush.bf16.msra.mxu0 %v5584
  %5797 = vmatpush.bf16.msra.mxu0 %v5580
  %5798 = vmatpush.bf16.msra.mxu0 %v5576
  %5799 = vmatmul.bf16.gmra.mxu0 %v5737
  %v5800 = vpop.f32.mrf.mxu0
  %v5801 = vadd.f32 %v5788, %v5800
  %v5802 = vpop.f32.mrf.mxu0
  %5803 = vdwg.mxu0
  %5804 = vmatpush.bf16.msra.mxu0 %v5477
  %5805 = vmatpush.bf16.msra.mxu0 %v5473
  %5806 = vmatpush.bf16.msra.mxu0 %v5469
  %5807 = vmatpush.bf16.msra.mxu0 %v5465
  %5808 = vmatpush.bf16.msra.mxu0 %v5461
  %5809 = vmatpush.bf16.msra.mxu0 %v5457
  %5810 = vmatpush.bf16.msra.mxu0 %v5453
  %5811 = vmatpush.bf16.msra.mxu0 %v5449
  %5812 = vmatmul.bf16.gmra.mxu0 %v4848
  %v5813 = vpop.f32.mrf.mxu0
  %v5814 = vadd.f32 %v5009, %v5813
  %v5815 = vpop.f32.mrf.mxu0
  %5816 = vdwg.mxu0
  %5817 = vmatpush.bf16.msra.mxu0 %v5509
  %5818 = vmatpush.bf16.msra.mxu0 %v5505
  %5819 = vmatpush.bf16.msra.mxu0 %v5501
  %5820 = vmatpush.bf16.msra.mxu0 %v5497
  %5821 = vmatpush.bf16.msra.mxu0 %v5493
  %5822 = vmatpush.bf16.msra.mxu0 %v5489
  %5823 = vmatpush.bf16.msra.mxu0 %v5485
  %5824 = vmatpush.bf16.msra.mxu0 %v5481
  %5825 = vmatmul.bf16.gmra.mxu0 %v4852
  %v5826 = vpop.f32.mrf.mxu0
  %v5827 = vadd.f32 %v5814, %v5826
  %v5828 = vpop.f32.mrf.mxu0
  %5829 = vdwg.mxu0
  %5830 = vmatpush.bf16.msra.mxu0 %v5541
  %5831 = vmatpush.bf16.msra.mxu0 %v5537
  %5832 = vmatpush.bf16.msra.mxu0 %v5533
  %5833 = vmatpush.bf16.msra.mxu0 %v5529
  %5834 = vmatpush.bf16.msra.mxu0 %v5525
  %5835 = vmatpush.bf16.msra.mxu0 %v5521
  %5836 = vmatpush.bf16.msra.mxu0 %v5517
  %5837 = vmatpush.bf16.msra.mxu0 %v5513
  %5838 = vmatmul.bf16.gmra.mxu0 %v4856
  %v5839 = vpop.f32.mrf.mxu0
  %v5840 = vadd.f32 %v5827, %v5839
  %v5841 = vpop.f32.mrf.mxu0
  %5842 = vdwg.mxu0
  %5843 = vmatpush.bf16.msra.mxu0 %v5573
  %5844 = vmatpush.bf16.msra.mxu0 %v5569
  %5845 = vmatpush.bf16.msra.mxu0 %v5565
  %5846 = vmatpush.bf16.msra.mxu0 %v5561
  %5847 = vmatpush.bf16.msra.mxu0 %v5557
  %5848 = vmatpush.bf16.msra.mxu0 %v5553
  %5849 = vmatpush.bf16.msra.mxu0 %v5549
  %5850 = vmatpush.bf16.msra.mxu0 %v5545
  %5851 = vmatmul.bf16.gmra.mxu0 %v4860
  %v5852 = vpop.f32.mrf.mxu0
  %v5853 = vadd.f32 %v5840, %v5852
  %v5854 = vpop.f32.mrf.mxu0
  %5855 = vdwg.mxu0
  %5856 = vmatpush.bf16.msra.mxu0 0
  %5857 = vmatpush.bf16.msra.mxu0 0
  %5858 = vmatpush.bf16.msra.mxu0 0
  %5859 = vmatpush.bf16.msra.mxu0 0
  %5860 = vmatpush.bf16.msra.mxu0 %v5589
  %5861 = vmatpush.bf16.msra.mxu0 %v5585
  %5862 = vmatpush.bf16.msra.mxu0 %v5581
  %5863 = vmatpush.bf16.msra.mxu0 %v5577
  %5864 = vmatmul.bf16.gmra.mxu0 %v5737
  %v5865 = vpop.f32.mrf.mxu0
  %v5866 = vadd.f32 %v5853, %v5865
  %v5867 = vpop.f32.mrf.mxu0
  %5868 = vdwg.mxu0
  %5869 = vmatpush.bf16.msra.mxu0 %v5478
  %5870 = vmatpush.bf16.msra.mxu0 %v5474
  %5871 = vmatpush.bf16.msra.mxu0 %v5470
  %5872 = vmatpush.bf16.msra.mxu0 %v5466
  %5873 = vmatpush.bf16.msra.mxu0 %v5462
  %5874 = vmatpush.bf16.msra.mxu0 %v5458
  %5875 = vmatpush.bf16.msra.mxu0 %v5454
  %5876 = vmatpush.bf16.msra.mxu0 %v5450
  %5877 = vmatmul.bf16.gmra.mxu0 %v4848
  %v5878 = vpop.f32.mrf.mxu0
  %v5879 = vadd.f32 %v5010, %v5878
  %v5880 = vpop.f32.mrf.mxu0
  %5881 = vdwg.mxu0
  %5882 = vmatpush.bf16.msra.mxu0 %v5510
  %5883 = vmatpush.bf16.msra.mxu0 %v5506
  %5884 = vmatpush.bf16.msra.mxu0 %v5502
  %5885 = vmatpush.bf16.msra.mxu0 %v5498
  %5886 = vmatpush.bf16.msra.mxu0 %v5494
  %5887 = vmatpush.bf16.msra.mxu0 %v5490
  %5888 = vmatpush.bf16.msra.mxu0 %v5486
  %5889 = vmatpush.bf16.msra.mxu0 %v5482
  %5890 = vmatmul.bf16.gmra.mxu0 %v4852
  %v5891 = vpop.f32.mrf.mxu0
  %v5892 = vadd.f32 %v5879, %v5891
  %v5893 = vpop.f32.mrf.mxu0
  %5894 = vdwg.mxu0
  %5895 = vmatpush.bf16.msra.mxu0 %v5542
  %5896 = vmatpush.bf16.msra.mxu0 %v5538
  %5897 = vmatpush.bf16.msra.mxu0 %v5534
  %5898 = vmatpush.bf16.msra.mxu0 %v5530
  %5899 = vmatpush.bf16.msra.mxu0 %v5526
  %5900 = vmatpush.bf16.msra.mxu0 %v5522
  %5901 = vmatpush.bf16.msra.mxu0 %v5518
  %5902 = vmatpush.bf16.msra.mxu0 %v5514
  %5903 = vmatmul.bf16.gmra.mxu0 %v4856
  %v5904 = vpop.f32.mrf.mxu0
  %v5905 = vadd.f32 %v5892, %v5904
  %v5906 = vpop.f32.mrf.mxu0
  %5907 = vdwg.mxu0
  %5908 = vmatpush.bf16.msra.mxu0 %v5574
  %5909 = vmatpush.bf16.msra.mxu0 %v5570
  %5910 = vmatpush.bf16.msra.mxu0 %v5566
  %5911 = vmatpush.bf16.msra.mxu0 %v5562
  %5912 = vmatpush.bf16.msra.mxu0 %v5558
  %5913 = vmatpush.bf16.msra.mxu0 %v5554
  %5914 = vmatpush.bf16.msra.mxu0 %v5550
  %5915 = vmatpush.bf16.msra.mxu0 %v5546
  %5916 = vmatmul.bf16.gmra.mxu0 %v4860
  %v5917 = vpop.f32.mrf.mxu0
  %v5918 = vadd.f32 %v5905, %v5917
  %v5919 = vpop.f32.mrf.mxu0
  %5920 = vdwg.mxu0
  %5921 = vmatpush.bf16.msra.mxu0 0
  %5922 = vmatpush.bf16.msra.mxu0 0
  %5923 = vmatpush.bf16.msra.mxu0 0
  %5924 = vmatpush.bf16.msra.mxu0 0
  %5925 = vmatpush.bf16.msra.mxu0 %v5590
  %5926 = vmatpush.bf16.msra.mxu0 %v5586
  %5927 = vmatpush.bf16.msra.mxu0 %v5582
  %5928 = vmatpush.bf16.msra.mxu0 %v5578
  %5929 = vmatmul.bf16.gmra.mxu0 %v5737
  %v5930 = vpop.f32.mrf.mxu0
  %v5931 = vadd.f32 %v5918, %v5930
  %v5932 = vpop.f32.mrf.mxu0
  %5933 = vdwg.mxu0
  %5934 = vmatpush.bf16.msra.mxu0 %v5479
  %5935 = vmatpush.bf16.msra.mxu0 %v5475
  %5936 = vmatpush.bf16.msra.mxu0 %v5471
  %5937 = vmatpush.bf16.msra.mxu0 %v5467
  %5938 = vmatpush.bf16.msra.mxu0 %v5463
  %5939 = vmatpush.bf16.msra.mxu0 %v5459
  %5940 = vmatpush.bf16.msra.mxu0 %v5455
  %5941 = vmatpush.bf16.msra.mxu0 %v5451
  %5942 = vmatmul.bf16.gmra.mxu0 %v4848
  %v5943 = vpop.f32.mrf.mxu0
  %v5944 = vadd.f32 %v5011, %v5943
  %v5945 = vpop.f32.mrf.mxu0
  %5946 = vdwg.mxu0
  %5947 = vmatpush.bf16.msra.mxu0 %v5511
  %5948 = vmatpush.bf16.msra.mxu0 %v5507
  %5949 = vmatpush.bf16.msra.mxu0 %v5503
  %5950 = vmatpush.bf16.msra.mxu0 %v5499
  %5951 = vmatpush.bf16.msra.mxu0 %v5495
  %5952 = vmatpush.bf16.msra.mxu0 %v5491
  %5953 = vmatpush.bf16.msra.mxu0 %v5487
  %5954 = vmatpush.bf16.msra.mxu0 %v5483
  %5955 = vmatmul.bf16.gmra.mxu0 %v4852
  %v5956 = vpop.f32.mrf.mxu0
  %v5957 = vadd.f32 %v5944, %v5956
  %v5958 = vpop.f32.mrf.mxu0
  %5959 = vdwg.mxu0
  %5960 = vmatpush.bf16.msra.mxu0 %v5543
  %5961 = vmatpush.bf16.msra.mxu0 %v5539
  %5962 = vmatpush.bf16.msra.mxu0 %v5535
  %5963 = vmatpush.bf16.msra.mxu0 %v5531
  %5964 = vmatpush.bf16.msra.mxu0 %v5527
  %5965 = vmatpush.bf16.msra.mxu0 %v5523
  %5966 = vmatpush.bf16.msra.mxu0 %v5519
  %5967 = vmatpush.bf16.msra.mxu0 %v5515
  %5968 = vmatmul.bf16.gmra.mxu0 %v4856
  %v5969 = vpop.f32.mrf.mxu0
  %v5970 = vadd.f32 %v5957, %v5969
  %v5971 = vpop.f32.mrf.mxu0
  %5972 = vdwg.mxu0
  %5973 = vmatpush.bf16.msra.mxu0 %v5575
  %5974 = vmatpush.bf16.msra.mxu0 %v5571
  %5975 = vmatpush.bf16.msra.mxu0 %v5567
  %5976 = vmatpush.bf16.msra.mxu0 %v5563
  %5977 = vmatpush.bf16.msra.mxu0 %v5559
  %5978 = vmatpush.bf16.msra.mxu0 %v5555
  %5979 = vmatpush.bf16.msra.mxu0 %v5551
  %5980 = vmatpush.bf16.msra.mxu0 %v5547
  %5981 = vmatmul.bf16.gmra.mxu0 %v4860
  %v5982 = vpop.f32.mrf.mxu0
  %v5983 = vadd.f32 %v5970, %v5982
  %v5984 = vpop.f32.mrf.mxu0
  %5985 = vdwg.mxu0
  %5986 = vmatpush.bf16.msra.mxu0 0
  %5987 = vmatpush.bf16.msra.mxu0 0
  %5988 = vmatpush.bf16.msra.mxu0 0
  %5989 = vmatpush.bf16.msra.mxu0 0
  %5990 = vmatpush.bf16.msra.mxu0 %v5591
  %5991 = vmatpush.bf16.msra.mxu0 %v5587
  %5992 = vmatpush.bf16.msra.mxu0 %v5583
  %5993 = vmatpush.bf16.msra.mxu0 %v5579
  %5994 = vmatmul.bf16.gmra.mxu0 %v5737
  %v5995 = vpop.f32.mrf.mxu0
  %v5996 = vadd.f32 %v5983, %v5995
  %v5997 = vpop.f32.mrf.mxu0
  %5998 = vdwg.mxu0
  %v5999 = vmax.f32 %v5801, 0.0
  %v6000 = vmax.f32 %v5866, 0.0
  %v6001 = vmax.f32 %v5931, 0.0
  %v6002 = vmax.f32 %v5996, 0.0
  %v6003 = vpack.c.bf16 %v5999, %v5999
  %v6004 = vpack.c.bf16 %v6000, %v6000
  %v6005 = vpack.c.bf16 %v6001, %v6001
  %v6006 = vpack.c.bf16 %v6002, %v6002
  %v6007 = vld [vmem:[%s9] sm:$0xf]
  %v6008 = vld [vmem:[%s9 + $0x4] sm:$0xf]
  %v6009 = vld [vmem:[%s9 + $0x8] sm:$0xf]
  %v6010 = vld [vmem:[%s9 + $0xc] sm:$0xf]
  %v6011 = vld [vmem:[%s9 + $0x10] sm:$0xf]
  %v6012 = vld [vmem:[%s9 + $0x14] sm:$0xf]
  %v6013 = vld [vmem:[%s9 + $0x18] sm:$0xf]
  %v6014 = vld [vmem:[%s9 + $0x1c] sm:$0xf]
  %v6015 = vld [vmem:[%s9 + $0x20] sm:$0xf]
  %v6016 = vld [vmem:[%s9 + $0x24] sm:$0xf]
  %v6017 = vld [vmem:[%s9 + $0x28] sm:$0xf]
  %v6018 = vld [vmem:[%s9 + $0x2c] sm:$0xf]
  %v6019 = vld [vmem:[%s9 + $0x30] sm:$0xf]
  %v6020 = vld [vmem:[%s9 + $0x34] sm:$0xf]
  %v6021 = vld [vmem:[%s9 + $0x38] sm:$0xf]
  %v6022 = vld [vmem:[%s9 + $0x3c] sm:$0xf]
  %v6023 = vld [vmem:[%s9 + $0x40] sm:$0xf]
  %v6024 = vld [vmem:[%s9 + $0x44] sm:$0xf]
  %v6025 = vld [vmem:[%s9 + $0x48] sm:$0xf]
  %v6026 = vld [vmem:[%s9 + $0x4c] sm:$0xf]
  %v6027 = vld [vmem:[%s9 + $0x50] sm:$0xf]
  %v6028 = vld [vmem:[%s9 + $0x54] sm:$0xf]
  %v6029 = vld [vmem:[%s9 + $0x58] sm:$0xf]
  %v6030 = vld [vmem:[%s9 + $0x5c] sm:$0xf]
  %v6031 = vld [vmem:[%s9 + $0x60] sm:$0xf]
  %v6032 = vld [vmem:[%s9 + $0x64] sm:$0xf]
  %v6033 = vld [vmem:[%s9 + $0x68] sm:$0xf]
  %v6034 = vld [vmem:[%s9 + $0x6c] sm:$0xf]
  %v6035 = vld [vmem:[%s9 + $0x70] sm:$0xf]
  %v6036 = vld [vmem:[%s9 + $0x74] sm:$0xf]
  %v6037 = vld [vmem:[%s9 + $0x78] sm:$0xf]
  %v6038 = vld [vmem:[%s9 + $0x7c] sm:$0xf]
  %v6039 = vld [vmem:[%s9 + $0x80] sm:$0xf]
  %v6040 = vld [vmem:[%s9 + $0x84] sm:$0xf]
  %v6041 = vld [vmem:[%s9 + $0x88] sm:$0xf]
  %v6042 = vld [vmem:[%s9 + $0x8c] sm:$0xf]
  %v6043 = vld [vmem:[%s9 + $0x90] sm:$0xf]
  %v6044 = vld [vmem:[%s9 + $0x94] sm:$0xf]
  %v6045 = vld [vmem:[%s9 + $0x98] sm:$0xf]
  %v6046 = vld [vmem:[%s9 + $0x9c] sm:$0xf]
  %v6047 = vld [vmem:[%s9 + $0xa0] sm:$0xf]
  %v6048 = vld [vmem:[%s9 + $0xa4] sm:$0xf]
  %v6049 = vld [vmem:[%s9 + $0xa8] sm:$0xf]
  %v6050 = vld [vmem:[%s9 + $0xac] sm:$0xf]
  %v6051 = vld [vmem:[%s9 + $0xb0] sm:$0xf]
  %v6052 = vld [vmem:[%s9 + $0xb4] sm:$0xf]
  %v6053 = vld [vmem:[%s9 + $0xb8] sm:$0xf]
  %v6054 = vld [vmem:[%s9 + $0xbc] sm:$0xf]
  %v6055 = vld [vmem:[%s9 + $0xc0] sm:$0xf]
  %v6056 = vld [vmem:[%s9 + $0xc4] sm:$0xf]
  %v6057 = vld [vmem:[%s9 + $0xc8] sm:$0xf]
  %v6058 = vld [vmem:[%s9 + $0xcc] sm:$0xf]
  %v6059 = vld [vmem:[%s9 + $0xd0] sm:$0xf]
  %v6060 = vld [vmem:[%s9 + $0xd4] sm:$0xf]
  %v6061 = vld [vmem:[%s9 + $0xd8] sm:$0xf]
  %v6062 = vld [vmem:[%s9 + $0xdc] sm:$0xf]
  %v6063 = vld [vmem:[%s9 + $0xe0] sm:$0xf]
  %v6064 = vld [vmem:[%s9 + $0xe4] sm:$0xf]
  %v6065 = vld [vmem:[%s9 + $0xe8] sm:$0xf]
  %v6066 = vld [vmem:[%s9 + $0xec] sm:$0xf]
  %v6067 = vld [vmem:[%s9 + $0xf0] sm:$0xf]
  %v6068 = vld [vmem:[%s9 + $0xf4] sm:$0xf]
  %v6069 = vld [vmem:[%s9 + $0xf8] sm:$0xf]
  %v6070 = vld [vmem:[%s9 + $0xfc] sm:$0xf]
  %v6071 = vld [vmem:[%s10] sm:$0x1]
  %v6073 = vperm.slane %v6071, 0
  %v6139 = vunpack.c.l.b16 %v6007
  %v6140 = vunpack.c.l.b16 %v6008
  %v6141 = vunpack.c.l.b16 %v6009
  %v6142 = vunpack.c.l.b16 %v6010
  %v6143 = vunpack.c.l.b16 %v6011
  %v6144 = vunpack.c.l.b16 %v6012
  %v6145 = vunpack.c.l.b16 %v6013
  %v6146 = vunpack.c.l.b16 %v6014
  %v6147 = vunpack.c.l.b16 %v6015
  %v6148 = vunpack.c.l.b16 %v6016
  %v6149 = vunpack.c.l.b16 %v6017
  %v6150 = vunpack.c.l.b16 %v6018
  %v6151 = vunpack.c.l.b16 %v6019
  %v6152 = vunpack.c.l.b16 %v6020
  %v6153 = vunpack.c.l.b16 %v6021
  %v6154 = vunpack.c.l.b16 %v6022
  %v6155 = vunpack.c.l.b16 %v6023
  %v6156 = vunpack.c.l.b16 %v6024
  %v6157 = vunpack.c.l.b16 %v6025
  %v6158 = vunpack.c.l.b16 %v6026
  %v6159 = vunpack.c.l.b16 %v6027
  %v6160 = vunpack.c.l.b16 %v6028
  %v6161 = vunpack.c.l.b16 %v6029
  %v6162 = vunpack.c.l.b16 %v6030
  %v6163 = vunpack.c.l.b16 %v6031
  %v6164 = vunpack.c.l.b16 %v6032
  %v6165 = vunpack.c.l.b16 %v6033
  %v6166 = vunpack.c.l.b16 %v6034
  %v6167 = vunpack.c.l.b16 %v6035
  %v6168 = vunpack.c.l.b16 %v6036
  %v6169 = vunpack.c.l.b16 %v6037
  %v6170 = vunpack.c.l.b16 %v6038
  %v6171 = vunpack.c.l.b16 %v6039
  %v6172 = vunpack.c.l.b16 %v6040
  %v6173 = vunpack.c.l.b16 %v6041
  %v6174 = vunpack.c.l.b16 %v6042
  %v6175 = vunpack.c.l.b16 %v6043
  %v6176 = vunpack.c.l.b16 %v6044
  %v6177 = vunpack.c.l.b16 %v6045
  %v6178 = vunpack.c.l.b16 %v6046
  %v6179 = vunpack.c.l.b16 %v6047
  %v6180 = vunpack.c.l.b16 %v6048
  %v6181 = vunpack.c.l.b16 %v6049
  %v6182 = vunpack.c.l.b16 %v6050
  %v6183 = vunpack.c.l.b16 %v6051
  %v6184 = vunpack.c.l.b16 %v6052
  %v6185 = vunpack.c.l.b16 %v6053
  %v6186 = vunpack.c.l.b16 %v6054
  %v6187 = vunpack.c.l.b16 %v6055
  %v6188 = vunpack.c.l.b16 %v6056
  %v6189 = vunpack.c.l.b16 %v6057
  %v6190 = vunpack.c.l.b16 %v6058
  %v6191 = vunpack.c.l.b16 %v6059
  %v6192 = vunpack.c.l.b16 %v6060
  %v6193 = vunpack.c.l.b16 %v6061
  %v6194 = vunpack.c.l.b16 %v6062
  %v6195 = vunpack.c.l.b16 %v6063
  %v6196 = vunpack.c.l.b16 %v6064
  %v6197 = vunpack.c.l.b16 %v6065
  %v6198 = vunpack.c.l.b16 %v6066
  %v6199 = vunpack.c.l.b16 %v6067
  %v6200 = vunpack.c.l.b16 %v6068
  %v6201 = vunpack.c.l.b16 %v6069
  %v6202 = vunpack.c.l.b16 %v6070
  %v6203 = vpack.c.b16 %v6140, %v6139
  %v6204 = vpack.c.b16 %v6142, %v6141
  %v6205 = vpack.c.b16 %v6144, %v6143
  %v6206 = vpack.c.b16 %v6146, %v6145
  %v6207 = vpack.c.b16 %v6148, %v6147
  %v6208 = vpack.c.b16 %v6150, %v6149
  %v6209 = vpack.c.b16 %v6152, %v6151
  %v6210 = vpack.c.b16 %v6154, %v6153
  %v6211 = vpack.c.b16 %v6156, %v6155
  %v6212 = vpack.c.b16 %v6158, %v6157
  %v6213 = vpack.c.b16 %v6160, %v6159
  %v6214 = vpack.c.b16 %v6162, %v6161
  %v6215 = vpack.c.b16 %v6164, %v6163
  %v6216 = vpack.c.b16 %v6166, %v6165
  %v6217 = vpack.c.b16 %v6168, %v6167
  %v6218 = vpack.c.b16 %v6170, %v6169
  %v6219 = vpack.c.b16 %v6172, %v6171
  %v6220 = vpack.c.b16 %v6174, %v6173
  %v6221 = vpack.c.b16 %v6176, %v6175
  %v6222 = vpack.c.b16 %v6178, %v6177
  %v6223 = vpack.c.b16 %v6180, %v6179
  %v6224 = vpack.c.b16 %v6182, %v6181
  %v6225 = vpack.c.b16 %v6184, %v6183
  %v6226 = vpack.c.b16 %v6186, %v6185
  %v6227 = vpack.c.b16 %v6188, %v6187
  %v6228 = vpack.c.b16 %v6190, %v6189
  %v6229 = vpack.c.b16 %v6192, %v6191
  %v6230 = vpack.c.b16 %v6194, %v6193
  %v6231 = vpack.c.b16 %v6196, %v6195
  %v6232 = vpack.c.b16 %v6198, %v6197
  %v6233 = vpack.c.b16 %v6200, %v6199
  %v6234 = vpack.c.b16 %v6202, %v6201
  %6267 = vmatpush.bf16.msra.mxu0 %v6210
  %6268 = vmatpush.bf16.msra.mxu0 %v6209
  %6269 = vmatpush.bf16.msra.mxu0 %v6208
  %6270 = vmatpush.bf16.msra.mxu0 %v6207
  %6271 = vmatpush.bf16.msra.mxu0 %v6206
  %6272 = vmatpush.bf16.msra.mxu0 %v6205
  %6273 = vmatpush.bf16.msra.mxu0 %v6204
  %6274 = vmatpush.bf16.msra.mxu0 %v6203
  %6275 = vmatmul.bf16.gmra.mxu0 %v6003
  %v6276 = vpop.f32.mrf.mxu0
  %v6277 = vadd.f32 %v6073, %v6276
  %v6278 = vpop.f32.mrf.mxu0
  %6279 = vdwg.mxu0
  %6280 = vmatpush.bf16.msra.mxu0 %v6218
  %6281 = vmatpush.bf16.msra.mxu0 %v6217
  %6282 = vmatpush.bf16.msra.mxu0 %v6216
  %6283 = vmatpush.bf16.msra.mxu0 %v6215
  %6284 = vmatpush.bf16.msra.mxu0 %v6214
  %6285 = vmatpush.bf16.msra.mxu0 %v6213
  %6286 = vmatpush.bf16.msra.mxu0 %v6212
  %6287 = vmatpush.bf16.msra.mxu0 %v6211
  %6288 = vmatmul.bf16.gmra.mxu0 %v6004
  %v6289 = vpop.f32.mrf.mxu0
  %v6290 = vadd.f32 %v6277, %v6289
  %v6291 = vpop.f32.mrf.mxu0
  %6292 = vdwg.mxu0
  %6293 = vmatpush.bf16.msra.mxu0 %v6226
  %6294 = vmatpush.bf16.msra.mxu0 %v6225
  %6295 = vmatpush.bf16.msra.mxu0 %v6224
  %6296 = vmatpush.bf16.msra.mxu0 %v6223
  %6297 = vmatpush.bf16.msra.mxu0 %v6222
  %6298 = vmatpush.bf16.msra.mxu0 %v6221
  %6299 = vmatpush.bf16.msra.mxu0 %v6220
  %6300 = vmatpush.bf16.msra.mxu0 %v6219
  %6301 = vmatmul.bf16.gmra.mxu0 %v6005
  %v6302 = vpop.f32.mrf.mxu0
  %v6303 = vadd.f32 %v6290, %v6302
  %v6304 = vpop.f32.mrf.mxu0
  %6305 = vdwg.mxu0
  %6306 = vmatpush.bf16.msra.mxu0 %v6234
  %6307 = vmatpush.bf16.msra.mxu0 %v6233
  %6308 = vmatpush.bf16.msra.mxu0 %v6232
  %6309 = vmatpush.bf16.msra.mxu0 %v6231
  %6310 = vmatpush.bf16.msra.mxu0 %v6230
  %6311 = vmatpush.bf16.msra.mxu0 %v6229
  %6312 = vmatpush.bf16.msra.mxu0 %v6228
  %6313 = vmatpush.bf16.msra.mxu0 %v6227
  %6314 = vmatmul.bf16.gmra.mxu0 %v6006
  %v6315 = vpop.f32.mrf.mxu0
  %v6316 = vadd.f32 %v6303, %v6315
  %v6317 = vpop.f32.mrf.mxu0
  %6318 = vdwg.mxu0
  %6319 = vst [vmem:[%s11] sm:$0xff] %v6316
  // Predicated region
  $region46: #{_lambda_.1} parent=0 // pred_check
    _
  $region47: #{_lambda_.1} parent=0 // pred_check_branch
    %6321 = sbr.rel (0) target = $region49
  $region48: #{_lambda_.1} parent=0 // pred_region
    _
  $region49: #{_lambda_.1} parent=0 // pred_fallthru
    _
  // Predicated region
  $region50: #{_lambda_.1} parent=0 // pred_check
    _
  $region51: #{_lambda_.1} parent=0 // pred_check_branch
    %6323 = sbr.rel (0) target = $region53
  $region52: #{_lambda_.1} parent=0 // pred_region
    _
  $region53: #{_lambda_.1} parent=0 // pred_fallthru
    _

</llo_original>
